<compile_context>
chip_gen: v5e
topology: v5e:2x2
jax: 0.10.0
libtpu: 0.0.40
codegen_flags: <defaults>
</compile_context>

<pallas_src>
import jax
import jax.numpy as jnp
from jax.experimental import pallas as pl
from jax.experimental.pallas import tpu as pltpu


CPAD = 128                      # lane-dense padded channel width
TCN_CHANNELS = (128, 128, 96, 96, 64)
KSIZE = 3
LOGVAR_LANE_OFFSET = 64         # logvar lanes start here in the fused head output


def _block_config(audio_size):
    """Static per-block (dilation, has_downsample) derived from channel widths."""
    cfg = []
    c_in = audio_size
    for lvl, c_out in enumerate(TCN_CHANNELS):
        cfg.append((2 ** lvl, c_in != c_out))
        c_in = c_out
    return tuple(cfg)


# ---------------------------------------------------------------------------
# Fused whole-network kernel
# ---------------------------------------------------------------------------
def _make_fused_kernel(B, T, H, cfg):
    BT = B * T
    shifts = sorted({(KSIZE - 1 - k) * d for d, _ in cfg for k in range(KSIZE)} - {0})

    def kernel(*refs):
        x_ref, eps_ref = refs[0], refs[1]
        w = refs[2:-1]
        o_ref = refs[-1]

        # Row position within each batch segment (batch is folded into M).
        seg = jax.lax.broadcasted_iota(jnp.int32, (T, 1), 0)       # (T, 1): 0..T-1
        row_in_b = jnp.concatenate([seg] * B, axis=0)              # (BT, 1)
        masks = {s: row_in_b >= s for s in shifts}                 # hoisted once

        def causal_cat(a, dil):
            # a: (BT, 128) f32 -> (BT, 3*128) bf16.  Column block k is `a`
            # shifted DOWN by (K-1-k)*dil rows with zeros in the causal pad
            # (and at batch-segment boundaries).  Matches conv1d + Chomp1d.
            taps = []
            for k in range(KSIZE):
                s = (KSIZE - 1 - k) * dil
                if s == 0:
                    taps.append(a)
                else:
                    r = pltpu.roll(a, shift=s, axis=0)             # XLU sublane rotate
                    taps.append(jnp.where(masks[s], r, 0.0))       # zero wrapped rows
            return jnp.concatenate(taps, axis=1).astype(jnp.bfloat16)

        # ------------------ TCN trunk: 5 fused TemporalBlocks ----------------
        a = x_ref[...]                                             # (BT, 128) f32
        wi = 0
        for dil, has_ds in cfg:
            w1, b1, w2, b2 = w[wi], w[wi + 1], w[wi + 2], w[wi + 3]
            wi += 4
            # conv1 (+ folded 1x1 residual when channels change) -> one matmul
            wide = jnp.dot(causal_cat(a, dil), w1[...],
                           preferred_element_type=jnp.float32) + b1[...]
            if has_ds:
                h1 = jnp.maximum(wide[:, :CPAD], 0.0)              # conv1 + ReLU
                res = wide[:, CPAD:]                               # residual branch
            else:
                h1 = jnp.maximum(wide, 0.0)
                res = a
            # conv2 + ReLU  (dropout = eval-mode identity)
            h2 = jnp.maximum(
                jnp.dot(causal_cat(h1, dil), w2[...],
                        preferred_element_type=jnp.float32) + b2[...], 0.0)
            a = jnp.maximum(h2 + res, 0.0)                         # residual + ReLU

        # -------- fused share_mean / share_var heads + reparameterize --------
        w1h, b1h, w2h, b2h = w[wi], w[wi + 1], w[wi + 2], w[wi + 3]
        h = jnp.maximum(
            jnp.dot(a.astype(jnp.bfloat16), w1h[...],
                    preferred_element_type=jnp.float32) + b1h[...], 0.0)
        ml = jnp.dot(h.astype(jnp.bfloat16), w2h[...],
                     preferred_element_type=jnp.float32) + b2h[...]
        # lanes [0, H) of ml hold mu, lanes [64, 64+H) hold logvar.
        logvar = pltpu.roll(ml, shift=LOGVAR_LANE_OFFSET, axis=1)  # align logvar to lane 0
        std = jnp.exp(0.5 * logvar)
        z = ml + eps_ref[...] * std                                # mu + eps * std
        lane = jax.lax.broadcasted_iota(jnp.int32, (BT, CPAD), 1)
        o_ref[...] = jnp.where(lane < H, z, 0.0)                   # padded-lane hygiene

    return kernel


# ---------------------------------------------------------------------------
# Parameters (pre-packed into the fused, lane-dense layouts)
# ---------------------------------------------------------------------------
def init_params(key, audio_size, audio_hidden_size):
    H = audio_hidden_size
    assert H <= LOGVAR_LANE_OFFSET, "fused head layout requires audio_hidden_size <= 64"

    def nrm(k, shape, scale=0.1):
        return scale * jax.random.normal(k, shape, jnp.float32)

    def folded_conv(k, cin, cout):
        # (K, Cin, Cout), zero-padded to (K, 128, 128), folded to (K*128, 128)
        # for the single (T, K*128) @ (K*128, 128) causal-conv matmul.
        wgt = nrm(k, (KSIZE, cin, cout))
        return (jnp.zeros((KSIZE, CPAD, CPAD), jnp.float32)
                .at[:, :cin, :cout].set(wgt)).reshape(KSIZE * CPAD, CPAD)

    params = {"blocks": []}
    c_in = audio_size
    for c_out in TCN_CHANNELS:
        key, k1, kb1, k2, kb2, kd, kbd = jax.random.split(key, 7)
        w1 = folded_conv(k1, c_in, c_out)
        b1 = jnp.zeros((1, CPAD), jnp.float32).at[0, :c_out].set(nrm(kb1, (c_out,), 0.02))
        if c_in != c_out:
            # Fold the 1x1 residual conv into conv1: the last causal tap
            # (rows [2*128, 3*128)) is the unshifted input, so the downsample
            # weight goes in columns [128, 256) of those rows -> one N=256
            # matmul produces [conv1 | residual] (fills the 256-wide MXU).
            wd = nrm(kd, (c_in, c_out))
            w1 = (jnp.zeros((KSIZE * CPAD, 2 * CPAD), jnp.float32)
                  .at[:, :CPAD].set(w1)
                  .at[(KSIZE - 1) * CPAD:(KSIZE - 1) * CPAD + c_in,
                      CPAD:CPAD + c_out].set(wd))
            b1 = (jnp.zeros((1, 2 * CPAD), jnp.float32)
                  .at[0, :CPAD].set(b1[0])
                  .at[0, CPAD:CPAD + c_out].set(nrm(kbd, (c_out,), 0.02)))
        blk = {
            "w1": w1.astype(jnp.bfloat16), "b1": b1,
            "w2": folded_conv(k2, c_out, c_out).astype(jnp.bfloat16),
            "b2": jnp.zeros((1, CPAD), jnp.float32).at[0, :c_out].set(
                nrm(kb2, (c_out,), 0.02)),
        }
        params["blocks"].append(blk)
        c_in = c_out

    # Heads: share_mean = Linear(64,32)+ReLU+Linear(32,H); share_var likewise.
    # First layers fused side-by-side (cols 0..31 mean-hidden, 32..63 var-hidden);
    # second layers fused so one matmul yields mu in lanes [0,H) and logvar in
    # lanes [64, 64+H) (realigned in-kernel with a lane roll).
    key, km1, kbm1, kv1, kbv1, km2, kbm2, kv2, kbv2 = jax.random.split(key, 9)
    w1h = (jnp.zeros((CPAD, CPAD), jnp.float32)
           .at[:64, :32].set(nrm(km1, (64, 32)))
           .at[:64, 32:64].set(nrm(kv1, (64, 32))))
    b1h = (jnp.zeros((1, CPAD), jnp.float32)
           .at[0, :32].set(nrm(kbm1, (32,), 0.02))
           .at[0, 32:64].set(nrm(kbv1, (32,), 0.02)))
    w2h = (jnp.zeros((CPAD, CPAD), jnp.float32)
           .at[:32, :H].set(nrm(km2, (32, H)))
           .at[32:64, LOGVAR_LANE_OFFSET:LOGVAR_LANE_OFFSET + H].set(nrm(kv2, (32, H))))
    b2h = (jnp.zeros((1, CPAD), jnp.float32)
           .at[0, :H].set(nrm(kbm2, (H,), 0.02))
           .at[0, LOGVAR_LANE_OFFSET:LOGVAR_LANE_OFFSET + H].set(nrm(kbv2, (H,), 0.02)))
    params["head"] = {"w1": w1h.astype(jnp.bfloat16), "b1": b1h,
                      "w2": w2h.astype(jnp.bfloat16), "b2": b2h}
    return params


# ---------------------------------------------------------------------------
# Forward
# ---------------------------------------------------------------------------
def audio_enc_forward(params, inputs, eps):
    """inputs: (B, T, audio_size) f32, eps: (B, T, H) f32 -> z_share (B, T, H) f32."""
    B, T, c_audio = inputs.shape
    H = eps.shape[-1]
    cfg = _block_config(c_audio)

    # One-time lane padding to 128 channels; padded lanes stay exactly zero
    # through every layer (padded weight rows/cols and biases are zero).
    # TODO(synk): at production B,T move these pads inside the kernel to avoid
    # the extra wrapper-side HBM round-trip (negligible at these sizes).
    x2 = jnp.pad(inputs, ((0, 0), (0, 0), (0, CPAD - c_audio))).reshape(B * T, CPAD)
    e2 = jnp.pad(eps, ((0, 0), (0, 0), (0, CPAD - H))).reshape(B * T, CPAD)

    flat = [x2, e2]
    for blk in params["blocks"]:
        flat += [blk["w1"], blk["b1"], blk["w2"], blk["b2"]]
    flat += [params["head"][k] for k in ("w1", "b1", "w2", "b2")]

    kernel = _make_fused_kernel(B, T, H, cfg)
    # Single invocation (no grid): every input/output is a whole-array VMEM
    # block; the entire forward pass runs with activations resident in VMEM.
    z = pl.pallas_call(
        kernel,
        out_shape=jax.ShapeDtypeStruct((B * T, CPAD), jnp.float32),
        compiler_params=pltpu.CompilerParams(vmem_limit_bytes=16 * 1024 * 1024),
    )(*flat)
    return z.reshape(B, T, CPAD)[:, :, :H]


# ---------------------------------------------------------------------------
if __name__ == "__main__":
    B, T = 2, 64
    AUDIO_SIZE = 16            # args.audio_size (input feature channels C)
    AUDIO_HIDDEN = 32          # args.audio_hidden_size

    key = jax.random.PRNGKey(0)
    kp, kx, ke = jax.random.split(key, 3)

    params = init_params(kp, AUDIO_SIZE, AUDIO_HIDDEN)
    x = jax.random.normal(kx, (B, T, AUDIO_SIZE), jnp.float32)       # (B, T, C)
    eps = jax.random.normal(ke, (B, T, AUDIO_HIDDEN), jnp.float32)   # randn_like(logvar)

    z_share = jax.jit(audio_enc_forward)(params, x, eps)
    jax.block_until_ready(z_share)

    assert z_share.shape == (B, T, AUDIO_HIDDEN) and z_share.dtype == jnp.float32
    assert bool(jnp.all(jnp.isfinite(z_share)))
    print("KERNEL_OK")
</pallas_src>

<mosaic_0001>
module attributes {stable_mosaic.version = 11 : i64} {
  func.func @kernel(%arg0: memref<128x128xf32, #tpu.memory_space<vmem>>, %arg1: memref<128x128xf32, #tpu.memory_space<vmem>>, %arg2: memref<384x256xbf16, #tpu.memory_space<vmem>>, %arg3: memref<1x256xf32, #tpu.memory_space<vmem>>, %arg4: memref<384x128xbf16, #tpu.memory_space<vmem>>, %arg5: memref<1x128xf32, #tpu.memory_space<vmem>>, %arg6: memref<384x128xbf16, #tpu.memory_space<vmem>>, %arg7: memref<1x128xf32, #tpu.memory_space<vmem>>, %arg8: memref<384x128xbf16, #tpu.memory_space<vmem>>, %arg9: memref<1x128xf32, #tpu.memory_space<vmem>>, %arg10: memref<384x256xbf16, #tpu.memory_space<vmem>>, %arg11: memref<1x256xf32, #tpu.memory_space<vmem>>, %arg12: memref<384x128xbf16, #tpu.memory_space<vmem>>, %arg13: memref<1x128xf32, #tpu.memory_space<vmem>>, %arg14: memref<384x128xbf16, #tpu.memory_space<vmem>>, %arg15: memref<1x128xf32, #tpu.memory_space<vmem>>, %arg16: memref<384x128xbf16, #tpu.memory_space<vmem>>, %arg17: memref<1x128xf32, #tpu.memory_space<vmem>>, %arg18: memref<384x256xbf16, #tpu.memory_space<vmem>>, %arg19: memref<1x256xf32, #tpu.memory_space<vmem>>, %arg20: memref<384x128xbf16, #tpu.memory_space<vmem>>, %arg21: memref<1x128xf32, #tpu.memory_space<vmem>>, %arg22: memref<128x128xbf16, #tpu.memory_space<vmem>>, %arg23: memref<1x128xf32, #tpu.memory_space<vmem>>, %arg24: memref<128x128xbf16, #tpu.memory_space<vmem>>, %arg25: memref<1x128xf32, #tpu.memory_space<vmem>>, %arg26: memref<128x128xf32, #tpu.memory_space<vmem>>) attributes {dimension_semantics = [], scalar_prefetch = 0 : i64, scratch_operands = 0 : i64, tpu.core_type = #tpu.core_type<tc>} {
    %0 = tpu.iota {dimensions = array<i32: 0>} : vector<64x1xi32>
    %1 = tpu.concatenate %0, %0 in 0 : vector<64x1xi32>, vector<64x1xi32> -> vector<128x1xi32>
    %c1_i32 = arith.constant 1 : i32
    %2 = vector.broadcast %c1_i32 : i32 to vector<128x1xi32>
    %3 = arith.cmpi sge, %1, %2 : vector<128x1xi32>
    %c2_i32 = arith.constant 2 : i32
    %4 = vector.broadcast %c2_i32 : i32 to vector<128x1xi32>
    %5 = arith.cmpi sge, %1, %4 : vector<128x1xi32>
    %c4_i32 = arith.constant 4 : i32
    %6 = vector.broadcast %c4_i32 : i32 to vector<128x1xi32>
    %7 = arith.cmpi sge, %1, %6 : vector<128x1xi32>
    %c8_i32 = arith.constant 8 : i32
    %8 = vector.broadcast %c8_i32 : i32 to vector<128x1xi32>
    %9 = arith.cmpi sge, %1, %8 : vector<128x1xi32>
    %c16_i32 = arith.constant 16 : i32
    %10 = vector.broadcast %c16_i32 : i32 to vector<128x1xi32>
    %11 = arith.cmpi sge, %1, %10 : vector<128x1xi32>
    %c32_i32 = arith.constant 32 : i32
    %12 = vector.broadcast %c32_i32 : i32 to vector<128x1xi32>
    %13 = arith.cmpi sge, %1, %12 : vector<128x1xi32>
    %c0 = arith.constant 0 : index
    %c0_0 = arith.constant 0 : index
    %14 = vector.load %arg0[%c0, %c0_0] : memref<128x128xf32, #tpu.memory_space<vmem>>, vector<128x128xf32>
    %c2_i32_1 = arith.constant 2 : i32
    %15 = tpu.dynamic_rotate %14 by %c2_i32_1 dim 0 : vector<128x128xf32>, i32 -> vector<128x128xf32>
    %cst = arith.constant 0.000000e+00 : f32
    %16 = vector.shape_cast %5 : vector<128x1xi1> to vector<128x1xi1>
    %17 = vector.broadcast %16 : vector<128x1xi1> to vector<128x128xi1>
    %18 = vector.broadcast %cst : f32 to vector<128x128xf32>
    %19 = arith.select %17, %15, %18 : vector<128x128xi1>, vector<128x128xf32>
    %c1_i32_2 = arith.constant 1 : i32
    %20 = tpu.dynamic_rotate %14 by %c1_i32_2 dim 0 : vector<128x128xf32>, i32 -> vector<128x128xf32>
    %cst_3 = arith.constant 0.000000e+00 : f32
    %21 = vector.shape_cast %3 : vector<128x1xi1> to vector<128x1xi1>
    %22 = vector.broadcast %21 : vector<128x1xi1> to vector<128x128xi1>
    %23 = vector.broadcast %cst_3 : f32 to vector<128x128xf32>
    %24 = arith.select %22, %20, %23 : vector<128x128xi1>, vector<128x128xf32>
    %25 = tpu.concatenate %19, %24, %14 in 1 : vector<128x128xf32>, vector<128x128xf32>, vector<128x128xf32> -> vector<128x384xf32>
    %26 = arith.truncf %25 : vector<128x384xf32> to vector<128x384xbf16>
    %c0_4 = arith.constant 0 : index
    %c0_5 = arith.constant 0 : index
    %27 = vector.load %arg2[%c0_4, %c0_5] : memref<384x256xbf16, #tpu.memory_space<vmem>>, vector<384x256xbf16>
    %cst_6 = arith.constant dense<0.000000e+00> : vector<128x256xf32>
    %28 = tpu.matmul %26, %27, %cst_6 {dimension_numbers = #tpu.dot_dimension_numbers<[1], [0], [0], [1], [0, 0, 1, 1], [], []>} : vector<128x384xbf16>, vector<384x256xbf16>, vector<128x256xf32> -> vector<128x256xf32>
    %c0_7 = arith.constant 0 : index
    %c0_8 = arith.constant 0 : index
    %29 = vector.load %arg3[%c0_7, %c0_8] : memref<1x256xf32, #tpu.memory_space<vmem>>, vector<1x256xf32>
    %30 = vector.broadcast %29 : vector<1x256xf32> to vector<128x256xf32>
    %31 = arith.addf %28, %30 : vector<128x256xf32>
    %32 = vector.extract_strided_slice %31 {offsets = [0, 0], sizes = [128, 128], strides = [1, 1]} : vector<128x256xf32> to vector<128x128xf32>
    %cst_9 = arith.constant 0.000000e+00 : f32
    %33 = vector.broadcast %cst_9 : f32 to vector<128x128xf32>
    %34 = arith.maximumf %32, %33 : vector<128x128xf32>
    %35 = vector.extract_strided_slice %31 {offsets = [0, 128], sizes = [128, 128], strides = [1, 1]} : vector<128x256xf32> to vector<128x128xf32>
    %c2_i32_10 = arith.constant 2 : i32
    %36 = tpu.dynamic_rotate %34 by %c2_i32_10 dim 0 : vector<128x128xf32>, i32 -> vector<128x128xf32>
    %cst_11 = arith.constant 0.000000e+00 : f32
    %37 = vector.shape_cast %5 : vector<128x1xi1> to vector<128x1xi1>
    %38 = vector.broadcast %37 : vector<128x1xi1> to vector<128x128xi1>
    %39 = vector.broadcast %cst_11 : f32 to vector<128x128xf32>
    %40 = arith.select %38, %36, %39 : vector<128x128xi1>, vector<128x128xf32>
    %c1_i32_12 = arith.constant 1 : i32
    %41 = tpu.dynamic_rotate %34 by %c1_i32_12 dim 0 : vector<128x128xf32>, i32 -> vector<128x128xf32>
    %cst_13 = arith.constant 0.000000e+00 : f32
    %42 = vector.shape_cast %3 : vector<128x1xi1> to vector<128x1xi1>
    %43 = vector.broadcast %42 : vector<128x1xi1> to vector<128x128xi1>
    %44 = vector.broadcast %cst_13 : f32 to vector<128x128xf32>
    %45 = arith.select %43, %41, %44 : vector<128x128xi1>, vector<128x128xf32>
    %46 = tpu.concatenate %40, %45, %34 in 1 : vector<128x128xf32>, vector<128x128xf32>, vector<128x128xf32> -> vector<128x384xf32>
    %47 = arith.truncf %46 : vector<128x384xf32> to vector<128x384xbf16>
    %c0_14 = arith.constant 0 : index
    %c0_15 = arith.constant 0 : index
    %48 = vector.load %arg4[%c0_14, %c0_15] : memref<384x128xbf16, #tpu.memory_space<vmem>>, vector<384x128xbf16>
    %cst_16 = arith.constant dense<0.000000e+00> : vector<128x128xf32>
    %49 = tpu.matmul %47, %48, %cst_16 {dimension_numbers = #tpu.dot_dimension_numbers<[1], [0], [0], [1], [0, 0, 1, 1], [], []>} : vector<128x384xbf16>, vector<384x128xbf16>, vector<128x128xf32> -> vector<128x128xf32>
    %c0_17 = arith.constant 0 : index
    %c0_18 = arith.constant 0 : index
    %50 = vector.load %arg5[%c0_17, %c0_18] : memref<1x128xf32, #tpu.memory_space<vmem>>, vector<1x128xf32>
    %51 = vector.broadcast %50 : vector<1x128xf32> to vector<128x128xf32>
    %52 = arith.addf %49, %51 : vector<128x128xf32>
    %cst_19 = arith.constant 0.000000e+00 : f32
    %53 = vector.broadcast %cst_19 : f32 to vector<128x128xf32>
    %54 = arith.maximumf %52, %53 : vector<128x128xf32>
    %55 = arith.addf %54, %35 : vector<128x128xf32>
    %cst_20 = arith.constant 0.000000e+00 : f32
    %56 = vector.broadcast %cst_20 : f32 to vector<128x128xf32>
    %57 = arith.maximumf %55, %56 : vector<128x128xf32>
    %c4_i32_21 = arith.constant 4 : i32
    %58 = tpu.dynamic_rotate %57 by %c4_i32_21 dim 0 : vector<128x128xf32>, i32 -> vector<128x128xf32>
    %cst_22 = arith.constant 0.000000e+00 : f32
    %59 = vector.shape_cast %7 : vector<128x1xi1> to vector<128x1xi1>
    %60 = vector.broadcast %59 : vector<128x1xi1> to vector<128x128xi1>
    %61 = vector.broadcast %cst_22 : f32 to vector<128x128xf32>
    %62 = arith.select %60, %58, %61 : vector<128x128xi1>, vector<128x128xf32>
    %c2_i32_23 = arith.constant 2 : i32
    %63 = tpu.dynamic_rotate %57 by %c2_i32_23 dim 0 : vector<128x128xf32>, i32 -> vector<128x128xf32>
    %cst_24 = arith.constant 0.000000e+00 : f32
    %64 = vector.shape_cast %5 : vector<128x1xi1> to vector<128x1xi1>
    %65 = vector.broadcast %64 : vector<128x1xi1> to vector<128x128xi1>
    %66 = vector.broadcast %cst_24 : f32 to vector<128x128xf32>
    %67 = arith.select %65, %63, %66 : vector<128x128xi1>, vector<128x128xf32>
    %68 = tpu.concatenate %62, %67, %57 in 1 : vector<128x128xf32>, vector<128x128xf32>, vector<128x128xf32> -> vector<128x384xf32>
    %69 = arith.truncf %68 : vector<128x384xf32> to vector<128x384xbf16>
    %c0_25 = arith.constant 0 : index
    %c0_26 = arith.constant 0 : index
    %70 = vector.load %arg6[%c0_25, %c0_26] : memref<384x128xbf16, #tpu.memory_space<vmem>>, vector<384x128xbf16>
    %cst_27 = arith.constant dense<0.000000e+00> : vector<128x128xf32>
    %71 = tpu.matmul %69, %70, %cst_27 {dimension_numbers = #tpu.dot_dimension_numbers<[1], [0], [0], [1], [0, 0, 1, 1], [], []>} : vector<128x384xbf16>, vector<384x128xbf16>, vector<128x128xf32> -> vector<128x128xf32>
    %c0_28 = arith.constant 0 : index
    %c0_29 = arith.constant 0 : index
    %72 = vector.load %arg7[%c0_28, %c0_29] : memref<1x128xf32, #tpu.memory_space<vmem>>, vector<1x128xf32>
    %73 = vector.broadcast %72 : vector<1x128xf32> to vector<128x128xf32>
    %74 = arith.addf %71, %73 : vector<128x128xf32>
    %cst_30 = arith.constant 0.000000e+00 : f32
    %75 = vector.broadcast %cst_30 : f32 to vector<128x128xf32>
    %76 = arith.maximumf %74, %75 : vector<128x128xf32>
    %c4_i32_31 = arith.constant 4 : i32
    %77 = tpu.dynamic_rotate %76 by %c4_i32_31 dim 0 : vector<128x128xf32>, i32 -> vector<128x128xf32>
    %cst_32 = arith.constant 0.000000e+00 : f32
    %78 = vector.shape_cast %7 : vector<128x1xi1> to vector<128x1xi1>
    %79 = vector.broadcast %78 : vector<128x1xi1> to vector<128x128xi1>
    %80 = vector.broadcast %cst_32 : f32 to vector<128x128xf32>
    %81 = arith.select %79, %77, %80 : vector<128x128xi1>, vector<128x128xf32>
    %c2_i32_33 = arith.constant 2 : i32
    %82 = tpu.dynamic_rotate %76 by %c2_i32_33 dim 0 : vector<128x128xf32>, i32 -> vector<128x128xf32>
    %cst_34 = arith.constant 0.000000e+00 : f32
    %83 = vector.shape_cast %5 : vector<128x1xi1> to vector<128x1xi1>
    %84 = vector.broadcast %83 : vector<128x1xi1> to vector<128x128xi1>
    %85 = vector.broadcast %cst_34 : f32 to vector<128x128xf32>
    %86 = arith.select %84, %82, %85 : vector<128x128xi1>, vector<128x128xf32>
    %87 = tpu.concatenate %81, %86, %76 in 1 : vector<128x128xf32>, vector<128x128xf32>, vector<128x128xf32> -> vector<128x384xf32>
    %88 = arith.truncf %87 : vector<128x384xf32> to vector<128x384xbf16>
    %c0_35 = arith.constant 0 : index
    %c0_36 = arith.constant 0 : index
    %89 = vector.load %arg8[%c0_35, %c0_36] : memref<384x128xbf16, #tpu.memory_space<vmem>>, vector<384x128xbf16>
    %cst_37 = arith.constant dense<0.000000e+00> : vector<128x128xf32>
    %90 = tpu.matmul %88, %89, %cst_37 {dimension_numbers = #tpu.dot_dimension_numbers<[1], [0], [0], [1], [0, 0, 1, 1], [], []>} : vector<128x384xbf16>, vector<384x128xbf16>, vector<128x128xf32> -> vector<128x128xf32>
    %c0_38 = arith.constant 0 : index
    %c0_39 = arith.constant 0 : index
    %91 = vector.load %arg9[%c0_38, %c0_39] : memref<1x128xf32, #tpu.memory_space<vmem>>, vector<1x128xf32>
    %92 = vector.broadcast %91 : vector<1x128xf32> to vector<128x128xf32>
    %93 = arith.addf %90, %92 : vector<128x128xf32>
    %cst_40 = arith.constant 0.000000e+00 : f32
    %94 = vector.broadcast %cst_40 : f32 to vector<128x128xf32>
    %95 = arith.maximumf %93, %94 : vector<128x128xf32>
    %96 = arith.addf %95, %57 : vector<128x128xf32>
    %cst_41 = arith.constant 0.000000e+00 : f32
    %97 = vector.broadcast %cst_41 : f32 to vector<128x128xf32>
    %98 = arith.maximumf %96, %97 : vector<128x128xf32>
    %c8_i32_42 = arith.constant 8 : i32
    %99 = tpu.dynamic_rotate %98 by %c8_i32_42 dim 0 : vector<128x128xf32>, i32 -> vector<128x128xf32>
    %cst_43 = arith.constant 0.000000e+00 : f32
    %100 = vector.shape_cast %9 : vector<128x1xi1> to vector<128x1xi1>
    %101 = vector.broadcast %100 : vector<128x1xi1> to vector<128x128xi1>
    %102 = vector.broadcast %cst_43 : f32 to vector<128x128xf32>
    %103 = arith.select %101, %99, %102 : vector<128x128xi1>, vector<128x128xf32>
    %c4_i32_44 = arith.constant 4 : i32
    %104 = tpu.dynamic_rotate %98 by %c4_i32_44 dim 0 : vector<128x128xf32>, i32 -> vector<128x128xf32>
    %cst_45 = arith.constant 0.000000e+00 : f32
    %105 = vector.shape_cast %7 : vector<128x1xi1> to vector<128x1xi1>
    %106 = vector.broadcast %105 : vector<128x1xi1> to vector<128x128xi1>
    %107 = vector.broadcast %cst_45 : f32 to vector<128x128xf32>
    %108 = arith.select %106, %104, %107 : vector<128x128xi1>, vector<128x128xf32>
    %109 = tpu.concatenate %103, %108, %98 in 1 : vector<128x128xf32>, vector<128x128xf32>, vector<128x128xf32> -> vector<128x384xf32>
    %110 = arith.truncf %109 : vector<128x384xf32> to vector<128x384xbf16>
    %c0_46 = arith.constant 0 : index
    %c0_47 = arith.constant 0 : index
    %111 = vector.load %arg10[%c0_46, %c0_47] : memref<384x256xbf16, #tpu.memory_space<vmem>>, vector<384x256xbf16>
    %cst_48 = arith.constant dense<0.000000e+00> : vector<128x256xf32>
    %112 = tpu.matmul %110, %111, %cst_48 {dimension_numbers = #tpu.dot_dimension_numbers<[1], [0], [0], [1], [0, 0, 1, 1], [], []>} : vector<128x384xbf16>, vector<384x256xbf16>, vector<128x256xf32> -> vector<128x256xf32>
    %c0_49 = arith.constant 0 : index
    %c0_50 = arith.constant 0 : index
    %113 = vector.load %arg11[%c0_49, %c0_50] : memref<1x256xf32, #tpu.memory_space<vmem>>, vector<1x256xf32>
    %114 = vector.broadcast %113 : vector<1x256xf32> to vector<128x256xf32>
    %115 = arith.addf %112, %114 : vector<128x256xf32>
    %116 = vector.extract_strided_slice %115 {offsets = [0, 0], sizes = [128, 128], strides = [1, 1]} : vector<128x256xf32> to vector<128x128xf32>
    %cst_51 = arith.constant 0.000000e+00 : f32
    %117 = vector.broadcast %cst_51 : f32 to vector<128x128xf32>
    %118 = arith.maximumf %116, %117 : vector<128x128xf32>
    %119 = vector.extract_strided_slice %115 {offsets = [0, 128], sizes = [128, 128], strides = [1, 1]} : vector<128x256xf32> to vector<128x128xf32>
    %c8_i32_52 = arith.constant 8 : i32
    %120 = tpu.dynamic_rotate %118 by %c8_i32_52 dim 0 : vector<128x128xf32>, i32 -> vector<128x128xf32>
    %cst_53 = arith.constant 0.000000e+00 : f32
    %121 = vector.shape_cast %9 : vector<128x1xi1> to vector<128x1xi1>
    %122 = vector.broadcast %121 : vector<128x1xi1> to vector<128x128xi1>
    %123 = vector.broadcast %cst_53 : f32 to vector<128x128xf32>
    %124 = arith.select %122, %120, %123 : vector<128x128xi1>, vector<128x128xf32>
    %c4_i32_54 = arith.constant 4 : i32
    %125 = tpu.dynamic_rotate %118 by %c4_i32_54 dim 0 : vector<128x128xf32>, i32 -> vector<128x128xf32>
    %cst_55 = arith.constant 0.000000e+00 : f32
    %126 = vector.shape_cast %7 : vector<128x1xi1> to vector<128x1xi1>
    %127 = vector.broadcast %126 : vector<128x1xi1> to vector<128x128xi1>
    %128 = vector.broadcast %cst_55 : f32 to vector<128x128xf32>
    %129 = arith.select %127, %125, %128 : vector<128x128xi1>, vector<128x128xf32>
    %130 = tpu.concatenate %124, %129, %118 in 1 : vector<128x128xf32>, vector<128x128xf32>, vector<128x128xf32> -> vector<128x384xf32>
    %131 = arith.truncf %130 : vector<128x384xf32> to vector<128x384xbf16>
    %c0_56 = arith.constant 0 : index
    %c0_57 = arith.constant 0 : index
    %132 = vector.load %arg12[%c0_56, %c0_57] : memref<384x128xbf16, #tpu.memory_space<vmem>>, vector<384x128xbf16>
    %cst_58 = arith.constant dense<0.000000e+00> : vector<128x128xf32>
    %133 = tpu.matmul %131, %132, %cst_58 {dimension_numbers = #tpu.dot_dimension_numbers<[1], [0], [0], [1], [0, 0, 1, 1], [], []>} : vector<128x384xbf16>, vector<384x128xbf16>, vector<128x128xf32> -> vector<128x128xf32>
    %c0_59 = arith.constant 0 : index
    %c0_60 = arith.constant 0 : index
    %134 = vector.load %arg13[%c0_59, %c0_60] : memref<1x128xf32, #tpu.memory_space<vmem>>, vector<1x128xf32>
    %135 = vector.broadcast %134 : vector<1x128xf32> to vector<128x128xf32>
    %136 = arith.addf %133, %135 : vector<128x128xf32>
    %cst_61 = arith.constant 0.000000e+00 : f32
    %137 = vector.broadcast %cst_61 : f32 to vector<128x128xf32>
    %138 = arith.maximumf %136, %137 : vector<128x128xf32>
    %139 = arith.addf %138, %119 : vector<128x128xf32>
    %cst_62 = arith.constant 0.000000e+00 : f32
    %140 = vector.broadcast %cst_62 : f32 to vector<128x128xf32>
    %141 = arith.maximumf %139, %140 : vector<128x128xf32>
    %c16_i32_63 = arith.constant 16 : i32
    %142 = tpu.dynamic_rotate %141 by %c16_i32_63 dim 0 : vector<128x128xf32>, i32 -> vector<128x128xf32>
    %cst_64 = arith.constant 0.000000e+00 : f32
    %143 = vector.shape_cast %11 : vector<128x1xi1> to vector<128x1xi1>
    %144 = vector.broadcast %143 : vector<128x1xi1> to vector<128x128xi1>
    %145 = vector.broadcast %cst_64 : f32 to vector<128x128xf32>
    %146 = arith.select %144, %142, %145 : vector<128x128xi1>, vector<128x128xf32>
    %c8_i32_65 = arith.constant 8 : i32
    %147 = tpu.dynamic_rotate %141 by %c8_i32_65 dim 0 : vector<128x128xf32>, i32 -> vector<128x128xf32>
    %cst_66 = arith.constant 0.000000e+00 : f32
    %148 = vector.shape_cast %9 : vector<128x1xi1> to vector<128x1xi1>
    %149 = vector.broadcast %148 : vector<128x1xi1> to vector<128x128xi1>
    %150 = vector.broadcast %cst_66 : f32 to vector<128x128xf32>
    %151 = arith.select %149, %147, %150 : vector<128x128xi1>, vector<128x128xf32>
    %152 = tpu.concatenate %146, %151, %141 in 1 : vector<128x128xf32>, vector<128x128xf32>, vector<128x128xf32> -> vector<128x384xf32>
    %153 = arith.truncf %152 : vector<128x384xf32> to vector<128x384xbf16>
    %c0_67 = arith.constant 0 : index
    %c0_68 = arith.constant 0 : index
    %154 = vector.load %arg14[%c0_67, %c0_68] : memref<384x128xbf16, #tpu.memory_space<vmem>>, vector<384x128xbf16>
    %cst_69 = arith.constant dense<0.000000e+00> : vector<128x128xf32>
    %155 = tpu.matmul %153, %154, %cst_69 {dimension_numbers = #tpu.dot_dimension_numbers<[1], [0], [0], [1], [0, 0, 1, 1], [], []>} : vector<128x384xbf16>, vector<384x128xbf16>, vector<128x128xf32> -> vector<128x128xf32>
    %c0_70 = arith.constant 0 : index
    %c0_71 = arith.constant 0 : index
    %156 = vector.load %arg15[%c0_70, %c0_71] : memref<1x128xf32, #tpu.memory_space<vmem>>, vector<1x128xf32>
    %157 = vector.broadcast %156 : vector<1x128xf32> to vector<128x128xf32>
    %158 = arith.addf %155, %157 : vector<128x128xf32>
    %cst_72 = arith.constant 0.000000e+00 : f32
    %159 = vector.broadcast %cst_72 : f32 to vector<128x128xf32>
    %160 = arith.maximumf %158, %159 : vector<128x128xf32>
    %c16_i32_73 = arith.constant 16 : i32
    %161 = tpu.dynamic_rotate %160 by %c16_i32_73 dim 0 : vector<128x128xf32>, i32 -> vector<128x128xf32>
    %cst_74 = arith.constant 0.000000e+00 : f32
    %162 = vector.shape_cast %11 : vector<128x1xi1> to vector<128x1xi1>
    %163 = vector.broadcast %162 : vector<128x1xi1> to vector<128x128xi1>
    %164 = vector.broadcast %cst_74 : f32 to vector<128x128xf32>
    %165 = arith.select %163, %161, %164 : vector<128x128xi1>, vector<128x128xf32>
    %c8_i32_75 = arith.constant 8 : i32
    %166 = tpu.dynamic_rotate %160 by %c8_i32_75 dim 0 : vector<128x128xf32>, i32 -> vector<128x128xf32>
    %cst_76 = arith.constant 0.000000e+00 : f32
    %167 = vector.shape_cast %9 : vector<128x1xi1> to vector<128x1xi1>
    %168 = vector.broadcast %167 : vector<128x1xi1> to vector<128x128xi1>
    %169 = vector.broadcast %cst_76 : f32 to vector<128x128xf32>
    %170 = arith.select %168, %166, %169 : vector<128x128xi1>, vector<128x128xf32>
    %171 = tpu.concatenate %165, %170, %160 in 1 : vector<128x128xf32>, vector<128x128xf32>, vector<128x128xf32> -> vector<128x384xf32>
    %172 = arith.truncf %171 : vector<128x384xf32> to vector<128x384xbf16>
    %c0_77 = arith.constant 0 : index
    %c0_78 = arith.constant 0 : index
    %173 = vector.load %arg16[%c0_77, %c0_78] : memref<384x128xbf16, #tpu.memory_space<vmem>>, vector<384x128xbf16>
    %cst_79 = arith.constant dense<0.000000e+00> : vector<128x128xf32>
    %174 = tpu.matmul %172, %173, %cst_79 {dimension_numbers = #tpu.dot_dimension_numbers<[1], [0], [0], [1], [0, 0, 1, 1], [], []>} : vector<128x384xbf16>, vector<384x128xbf16>, vector<128x128xf32> -> vector<128x128xf32>
    %c0_80 = arith.constant 0 : index
    %c0_81 = arith.constant 0 : index
    %175 = vector.load %arg17[%c0_80, %c0_81] : memref<1x128xf32, #tpu.memory_space<vmem>>, vector<1x128xf32>
    %176 = vector.broadcast %175 : vector<1x128xf32> to vector<128x128xf32>
    %177 = arith.addf %174, %176 : vector<128x128xf32>
    %cst_82 = arith.constant 0.000000e+00 : f32
    %178 = vector.broadcast %cst_82 : f32 to vector<128x128xf32>
    %179 = arith.maximumf %177, %178 : vector<128x128xf32>
    %180 = arith.addf %179, %141 : vector<128x128xf32>
    %cst_83 = arith.constant 0.000000e+00 : f32
    %181 = vector.broadcast %cst_83 : f32 to vector<128x128xf32>
    %182 = arith.maximumf %180, %181 : vector<128x128xf32>
    %c32_i32_84 = arith.constant 32 : i32
    %183 = tpu.dynamic_rotate %182 by %c32_i32_84 dim 0 : vector<128x128xf32>, i32 -> vector<128x128xf32>
    %cst_85 = arith.constant 0.000000e+00 : f32
    %184 = vector.shape_cast %13 : vector<128x1xi1> to vector<128x1xi1>
    %185 = vector.broadcast %184 : vector<128x1xi1> to vector<128x128xi1>
    %186 = vector.broadcast %cst_85 : f32 to vector<128x128xf32>
    %187 = arith.select %185, %183, %186 : vector<128x128xi1>, vector<128x128xf32>
    %c16_i32_86 = arith.constant 16 : i32
    %188 = tpu.dynamic_rotate %182 by %c16_i32_86 dim 0 : vector<128x128xf32>, i32 -> vector<128x128xf32>
    %cst_87 = arith.constant 0.000000e+00 : f32
    %189 = vector.shape_cast %11 : vector<128x1xi1> to vector<128x1xi1>
    %190 = vector.broadcast %189 : vector<128x1xi1> to vector<128x128xi1>
    %191 = vector.broadcast %cst_87 : f32 to vector<128x128xf32>
    %192 = arith.select %190, %188, %191 : vector<128x128xi1>, vector<128x128xf32>
    %193 = tpu.concatenate %187, %192, %182 in 1 : vector<128x128xf32>, vector<128x128xf32>, vector<128x128xf32> -> vector<128x384xf32>
    %194 = arith.truncf %193 : vector<128x384xf32> to vector<128x384xbf16>
    %c0_88 = arith.constant 0 : index
    %c0_89 = arith.constant 0 : index
    %195 = vector.load %arg18[%c0_88, %c0_89] : memref<384x256xbf16, #tpu.memory_space<vmem>>, vector<384x256xbf16>
    %cst_90 = arith.constant dense<0.000000e+00> : vector<128x256xf32>
    %196 = tpu.matmul %194, %195, %cst_90 {dimension_numbers = #tpu.dot_dimension_numbers<[1], [0], [0], [1], [0, 0, 1, 1], [], []>} : vector<128x384xbf16>, vector<384x256xbf16>, vector<128x256xf32> -> vector<128x256xf32>
    %c0_91 = arith.constant 0 : index
    %c0_92 = arith.constant 0 : index
    %197 = vector.load %arg19[%c0_91, %c0_92] : memref<1x256xf32, #tpu.memory_space<vmem>>, vector<1x256xf32>
    %198 = vector.broadcast %197 : vector<1x256xf32> to vector<128x256xf32>
    %199 = arith.addf %196, %198 : vector<128x256xf32>
    %200 = vector.extract_strided_slice %199 {offsets = [0, 0], sizes = [128, 128], strides = [1, 1]} : vector<128x256xf32> to vector<128x128xf32>
    %cst_93 = arith.constant 0.000000e+00 : f32
    %201 = vector.broadcast %cst_93 : f32 to vector<128x128xf32>
    %202 = arith.maximumf %200, %201 : vector<128x128xf32>
    %203 = vector.extract_strided_slice %199 {offsets = [0, 128], sizes = [128, 128], strides = [1, 1]} : vector<128x256xf32> to vector<128x128xf32>
    %c32_i32_94 = arith.constant 32 : i32
    %204 = tpu.dynamic_rotate %202 by %c32_i32_94 dim 0 : vector<128x128xf32>, i32 -> vector<128x128xf32>
    %cst_95 = arith.constant 0.000000e+00 : f32
    %205 = vector.shape_cast %13 : vector<128x1xi1> to vector<128x1xi1>
    %206 = vector.broadcast %205 : vector<128x1xi1> to vector<128x128xi1>
    %207 = vector.broadcast %cst_95 : f32 to vector<128x128xf32>
    %208 = arith.select %206, %204, %207 : vector<128x128xi1>, vector<128x128xf32>
    %c16_i32_96 = arith.constant 16 : i32
    %209 = tpu.dynamic_rotate %202 by %c16_i32_96 dim 0 : vector<128x128xf32>, i32 -> vector<128x128xf32>
    %cst_97 = arith.constant 0.000000e+00 : f32
    %210 = vector.shape_cast %11 : vector<128x1xi1> to vector<128x1xi1>
    %211 = vector.broadcast %210 : vector<128x1xi1> to vector<128x128xi1>
    %212 = vector.broadcast %cst_97 : f32 to vector<128x128xf32>
    %213 = arith.select %211, %209, %212 : vector<128x128xi1>, vector<128x128xf32>
    %214 = tpu.concatenate %208, %213, %202 in 1 : vector<128x128xf32>, vector<128x128xf32>, vector<128x128xf32> -> vector<128x384xf32>
    %215 = arith.truncf %214 : vector<128x384xf32> to vector<128x384xbf16>
    %c0_98 = arith.constant 0 : index
    %c0_99 = arith.constant 0 : index
    %216 = vector.load %arg20[%c0_98, %c0_99] : memref<384x128xbf16, #tpu.memory_space<vmem>>, vector<384x128xbf16>
    %cst_100 = arith.constant dense<0.000000e+00> : vector<128x128xf32>
    %217 = tpu.matmul %215, %216, %cst_100 {dimension_numbers = #tpu.dot_dimension_numbers<[1], [0], [0], [1], [0, 0, 1, 1], [], []>} : vector<128x384xbf16>, vector<384x128xbf16>, vector<128x128xf32> -> vector<128x128xf32>
    %c0_101 = arith.constant 0 : index
    %c0_102 = arith.constant 0 : index
    %218 = vector.load %arg21[%c0_101, %c0_102] : memref<1x128xf32, #tpu.memory_space<vmem>>, vector<1x128xf32>
    %219 = vector.broadcast %218 : vector<1x128xf32> to vector<128x128xf32>
    %220 = arith.addf %217, %219 : vector<128x128xf32>
    %cst_103 = arith.constant 0.000000e+00 : f32
    %221 = vector.broadcast %cst_103 : f32 to vector<128x128xf32>
    %222 = arith.maximumf %220, %221 : vector<128x128xf32>
    %223 = arith.addf %222, %203 : vector<128x128xf32>
    %cst_104 = arith.constant 0.000000e+00 : f32
    %224 = vector.broadcast %cst_104 : f32 to vector<128x128xf32>
    %225 = arith.maximumf %223, %224 : vector<128x128xf32>
    %226 = arith.truncf %225 : vector<128x128xf32> to vector<128x128xbf16>
    %c0_105 = arith.constant 0 : index
    %c0_106 = arith.constant 0 : index
    %227 = vector.load %arg22[%c0_105, %c0_106] : memref<128x128xbf16, #tpu.memory_space<vmem>>, vector<128x128xbf16>
    %cst_107 = arith.constant dense<0.000000e+00> : vector<128x128xf32>
    %228 = tpu.matmul %226, %227, %cst_107 {dimension_numbers = #tpu.dot_dimension_numbers<[1], [0], [0], [1], [0, 0, 1, 1], [], []>} : vector<128x128xbf16>, vector<128x128xbf16>, vector<128x128xf32> -> vector<128x128xf32>
    %c0_108 = arith.constant 0 : index
    %c0_109 = arith.constant 0 : index
    %229 = vector.load %arg23[%c0_108, %c0_109] : memref<1x128xf32, #tpu.memory_space<vmem>>, vector<1x128xf32>
    %230 = vector.broadcast %229 : vector<1x128xf32> to vector<128x128xf32>
    %231 = arith.addf %228, %230 : vector<128x128xf32>
    %cst_110 = arith.constant 0.000000e+00 : f32
    %232 = vector.broadcast %cst_110 : f32 to vector<128x128xf32>
    %233 = arith.maximumf %231, %232 : vector<128x128xf32>
    %234 = arith.truncf %233 : vector<128x128xf32> to vector<128x128xbf16>
    %c0_111 = arith.constant 0 : index
    %c0_112 = arith.constant 0 : index
    %235 = vector.load %arg24[%c0_111, %c0_112] : memref<128x128xbf16, #tpu.memory_space<vmem>>, vector<128x128xbf16>
    %cst_113 = arith.constant dense<0.000000e+00> : vector<128x128xf32>
    %236 = tpu.matmul %234, %235, %cst_113 {dimension_numbers = #tpu.dot_dimension_numbers<[1], [0], [0], [1], [0, 0, 1, 1], [], []>} : vector<128x128xbf16>, vector<128x128xbf16>, vector<128x128xf32> -> vector<128x128xf32>
    %c0_114 = arith.constant 0 : index
    %c0_115 = arith.constant 0 : index
    %237 = vector.load %arg25[%c0_114, %c0_115] : memref<1x128xf32, #tpu.memory_space<vmem>>, vector<1x128xf32>
    %238 = vector.broadcast %237 : vector<1x128xf32> to vector<128x128xf32>
    %239 = arith.addf %236, %238 : vector<128x128xf32>
    %c64_i32 = arith.constant 64 : i32
    %240 = tpu.dynamic_rotate %239 by %c64_i32 dim 1 : vector<128x128xf32>, i32 -> vector<128x128xf32>
    %cst_116 = arith.constant 5.000000e-01 : f32
    %241 = vector.broadcast %cst_116 : f32 to vector<128x128xf32>
    %242 = arith.mulf %241, %240 : vector<128x128xf32>
    %243 = math.exp %242 : vector<128x128xf32>
    %c0_117 = arith.constant 0 : index
    %c0_118 = arith.constant 0 : index
    %244 = vector.load %arg1[%c0_117, %c0_118] : memref<128x128xf32, #tpu.memory_space<vmem>>, vector<128x128xf32>
    %245 = arith.mulf %244, %243 : vector<128x128xf32>
    %246 = arith.addf %239, %245 : vector<128x128xf32>
    %247 = tpu.iota {dimensions = array<i32: 1>} : vector<128x128xi32>
    %c32_i32_119 = arith.constant 32 : i32
    %248 = vector.broadcast %c32_i32_119 : i32 to vector<128x128xi32>
    %249 = arith.cmpi slt, %247, %248 : vector<128x128xi32>
    %cst_120 = arith.constant 0.000000e+00 : f32
    %250 = vector.broadcast %cst_120 : f32 to vector<128x128xf32>
    %251 = arith.select %249, %246, %250 : vector<128x128xi1>, vector<128x128xf32>
    %c0_121 = arith.constant 0 : index
    %c0_122 = arith.constant 0 : index
    %252 = vector.load %arg26[%c0_121, %c0_122] : memref<128x128xf32, #tpu.memory_space<vmem>>, vector<128x128xf32>
    tpu.vector_store %arg26[%c0_121, %c0_122], %251 {strides = array<i32>} : memref<128x128xf32, #tpu.memory_space<vmem>>, vector<128x128xf32>,
    return
  }
}

</mosaic_0001>

<llo_original>
// kernel: audio_enc_forward.1
$region0: #{audio_enc_forward.1}
  #allocation0 [shape = 'u32[]', space=smem, size = 0x4, offset = 0x4, fixed_abs, tag = 'smem constant byte address 0x4 - core index']
  #allocation1 [shape = 'u32[72,128]{1,0:T(1,128)}', space=vmem, size = 0x9000, scoped, tag = 'internal scratch']
  %s0 = inlined_call_operand.vmem [shape: f32[128,128], index: 0, kind: input, shape index: {}]
  %s1 = inlined_call_operand.vmem [shape: f32[128,128], index: 1, kind: input, shape index: {}]
  %s2 = inlined_call_operand.vmem [shape: bf16[384,256], index: 2, kind: input, shape index: {}]
  %s3 = inlined_call_operand.vmem [shape: f32[1,256], index: 3, kind: input, shape index: {}]
  %s4 = inlined_call_operand.vmem [shape: bf16[384,128], index: 4, kind: input, shape index: {}]
  %s5 = inlined_call_operand.vmem [shape: f32[1,128], index: 5, kind: input, shape index: {}]
  %s6 = inlined_call_operand.vmem [shape: bf16[384,128], index: 6, kind: input, shape index: {}]
  %s7 = inlined_call_operand.vmem [shape: f32[1,128], index: 7, kind: input, shape index: {}]
  %s8 = inlined_call_operand.hbm [shape: bf16[384,128], index: 8, kind: input, shape index: {}]
  %s9 = inlined_call_operand.vmem [shape: f32[1,128], index: 9, kind: input, shape index: {}]
  %s10 = inlined_call_operand.hbm [shape: bf16[384,256], index: 10, kind: input, shape index: {}]
  %s11 = inlined_call_operand.vmem [shape: f32[1,256], index: 11, kind: input, shape index: {}]
  %s12 = inlined_call_operand.hbm [shape: bf16[384,128], index: 12, kind: input, shape index: {}]
  %s13 = inlined_call_operand.vmem [shape: f32[1,128], index: 13, kind: input, shape index: {}]
  %s14 = inlined_call_operand.hbm [shape: bf16[384,128], index: 14, kind: input, shape index: {}]
  %s15 = inlined_call_operand.vmem [shape: f32[1,128], index: 15, kind: input, shape index: {}]
  %s16 = inlined_call_operand.hbm [shape: bf16[384,128], index: 16, kind: input, shape index: {}]
  %s17 = inlined_call_operand.vmem [shape: f32[1,128], index: 17, kind: input, shape index: {}]
  %s18 = inlined_call_operand.hbm [shape: bf16[384,256], index: 18, kind: input, shape index: {}]
  %s19 = inlined_call_operand.vmem [shape: f32[1,256], index: 19, kind: input, shape index: {}]
  %s20 = inlined_call_operand.hbm [shape: bf16[384,128], index: 20, kind: input, shape index: {}]
  %s21 = inlined_call_operand.vmem [shape: f32[1,128], index: 21, kind: input, shape index: {}]
  %s22 = inlined_call_operand.hbm [shape: bf16[128,128], index: 22, kind: input, shape index: {}]
  %s23 = inlined_call_operand.vmem [shape: f32[1,128], index: 23, kind: input, shape index: {}]
  %s24 = inlined_call_operand.hbm [shape: bf16[128,128], index: 24, kind: input, shape index: {}]
  %s25 = inlined_call_operand.vmem [shape: f32[1,128], index: 25, kind: input, shape index: {}]
  %s26 = inlined_call_operand.vmem [shape: f32[128,128], index: 26, kind: output, shape index: {}]
  %s27 = sld [smem:[#allocation0]]
  $region150: #{audio_enc_forward.1} parent=0
    _
  %s29 = ssub.s32 1, %s27
  %s30 = scalar_select 0, %s29, %s27
  $region1: #{audio_enc_forward.1} parent=0
    #allocation2 [shape = 'u8[98304]{0}', space=vmem, size = 0x18000, scoped, tag = 'input window, operand 8, single buffered']
    #allocation3 [shape = 's32[1]{0}', space=sflag, size = 0x4, scoped, tag = 'scoped memory for audio_enc_forward.1']
    #allocation4 [shape = 'u8[196608]{0}', space=vmem, size = 0x30000, scoped, tag = 'input window, operand 10, single buffered']
    #allocation5 [shape = 's32[1]{0}', space=sflag, size = 0x4, scoped, tag = 'scoped memory for audio_enc_forward.1']
    #allocation6 [shape = 'u8[98304]{0}', space=vmem, size = 0x18000, scoped, tag = 'input window, operand 12, single buffered']
    #allocation7 [shape = 'u8[98304]{0}', space=vmem, size = 0x18000, scoped, tag = 'input window, operand 14, single buffered']
    #allocation8 [shape = 's32[1]{0}', space=sflag, size = 0x4, scoped, tag = 'scoped memory for audio_enc_forward.1']
    #allocation9 [shape = 'u8[98304]{0}', space=vmem, size = 0x18000, scoped, tag = 'input window, operand 16, single buffered']
    #allocation10 [shape = 'u8[196608]{0}', space=vmem, size = 0x30000, scoped, tag = 'input window, operand 18, single buffered']
    #allocation11 [shape = 's32[1]{0}', space=sflag, size = 0x4, scoped, tag = 'scoped memory for audio_enc_forward.1']
    #allocation12 [shape = 'u8[98304]{0}', space=vmem, size = 0x18000, scoped, tag = 'input window, operand 20, single buffered']
    #allocation13 [shape = 'u8[32768]{0}', space=vmem, size = 0x8000, scoped, tag = 'input window, operand 22, single buffered']
    #allocation14 [shape = 's32[1]{0}', space=sflag, size = 0x4, scoped, tag = 'scoped memory for audio_enc_forward.1']
    #allocation15 [shape = 'u8[32768]{0}', space=vmem, size = 0x8000, scoped, tag = 'input window, operand 24, single buffered']
    %31 = vsyncpa [#allocation3], 0
    %32 = vsyncpa [#allocation5], 0
    %33 = vsyncpa [#allocation8], 0
    %34 = vsyncpa [#allocation11], 0
    %35 = vsyncpa [#allocation14], 0
    // Predicated region
    $region2: #{audio_enc_forward.1} parent=1 // pred_check
      _
    $region3: #{audio_enc_forward.1} parent=1 // pred_check_branch
      %37 = sbr.rel (0) target = $region5
    $region4: #{audio_enc_forward.1} parent=1 // pred_region
      _
    $region5: #{audio_enc_forward.1} parent=1 // pred_fallthru
      _
    // Predicated region
    $region6: #{audio_enc_forward.1} parent=1 // pred_check
      _
    $region7: #{audio_enc_forward.1} parent=1 // pred_check_branch
      %39 = sbr.rel (0) target = $region9
    $region8: #{audio_enc_forward.1} parent=1 // pred_region
      _
    $region9: #{audio_enc_forward.1} parent=1 // pred_fallthru
      _
    // Predicated region
    $region10: #{audio_enc_forward.1} parent=1 // pred_check
      _
    $region11: #{audio_enc_forward.1} parent=1 // pred_check_branch
      %41 = sbr.rel (0) target = $region13
    $region12: #{audio_enc_forward.1} parent=1 // pred_region
      _
    $region13: #{audio_enc_forward.1} parent=1 // pred_fallthru
      _
    // Predicated region
    $region14: #{audio_enc_forward.1} parent=1 // pred_check
      _
    $region15: #{audio_enc_forward.1} parent=1 // pred_check_branch
      %43 = sbr.rel (0) target = $region17
    $region16: #{audio_enc_forward.1} parent=1 // pred_region
      _
    $region17: #{audio_enc_forward.1} parent=1 // pred_fallthru
      _
    // Predicated region
    $region18: #{audio_enc_forward.1} parent=1 // pred_check
      _
    $region19: #{audio_enc_forward.1} parent=1 // pred_check_branch
      %45 = sbr.rel (0) target = $region21
    $region20: #{audio_enc_forward.1} parent=1 // pred_region
      _
    $region21: #{audio_enc_forward.1} parent=1 // pred_fallthru
      _
    // Predicated region
    $region22: #{audio_enc_forward.1} parent=1 // pred_check
      _
    $region23: #{audio_enc_forward.1} parent=1 // pred_check_branch
      %47 = sbr.rel (0) target = $region25
    $region24: #{audio_enc_forward.1} parent=1 // pred_region
      _
    $region25: #{audio_enc_forward.1} parent=1 // pred_fallthru
      _
    // Predicated region
    $region26: #{audio_enc_forward.1} parent=1 // pred_check
      _
    $region27: #{audio_enc_forward.1} parent=1 // pred_check_branch
      %49 = sbr.rel (0) target = $region29
    $region28: #{audio_enc_forward.1} parent=1 // pred_region
      _
    $region29: #{audio_enc_forward.1} parent=1 // pred_fallthru
      _
    // Predicated region
    $region30: #{audio_enc_forward.1} parent=1 // pred_check
      _
    $region31: #{audio_enc_forward.1} parent=1 // pred_check_branch
      %51 = sbr.rel (0) target = $region33
    $region32: #{audio_enc_forward.1} parent=1 // pred_region
      _
    $region33: #{audio_enc_forward.1} parent=1 // pred_fallthru
      _
    // Predicated region
    $region34: #{audio_enc_forward.1} parent=1 // pred_check
      _
    $region35: #{audio_enc_forward.1} parent=1 // pred_check_branch
      %53 = sbr.rel (0) target = $region37
    $region36: #{audio_enc_forward.1} parent=1 // pred_region
      %55 = vsyncadd [#allocation3], 0
      %s56 = sshll.u32 %s8, 4
      %s57 = int_to_ptr.hbm [resolvable:$true] %s56
      %s58 = sshll.u32 [#allocation2], 4
      %s59 = int_to_ptr.vmem [resolvable:$true] %s58
      %64 = dma.hbm_to_vmem [thread:$0]  %s57, 3072, %s59, [#allocation3], 64, 64, 4
    $region37: #{audio_enc_forward.1} parent=1 // pred_fallthru
      _
    // Predicated region
    $region38: #{audio_enc_forward.1} parent=1 // pred_check
      _
    $region39: #{audio_enc_forward.1} parent=1 // pred_check_branch
      %66 = sbr.rel (0) target = $region41
    $region40: #{audio_enc_forward.1} parent=1 // pred_region
      _
    $region41: #{audio_enc_forward.1} parent=1 // pred_fallthru
      _
    // Predicated region
    $region42: #{audio_enc_forward.1} parent=1 // pred_check
      _
    $region43: #{audio_enc_forward.1} parent=1 // pred_check_branch
      %68 = sbr.rel (0) target = $region45
    $region44: #{audio_enc_forward.1} parent=1 // pred_region
      %70 = vsyncadd [#allocation5], 0
      %s71 = sshll.u32 %s10, 4
      %s72 = int_to_ptr.hbm [resolvable:$true] %s71
      %s73 = sshll.u32 [#allocation4], 4
      %s74 = int_to_ptr.vmem [resolvable:$true] %s73
      %79 = dma.hbm_to_vmem [thread:$0]  %s72, 6144, %s74, [#allocation5], 128, 128, 8
    $region45: #{audio_enc_forward.1} parent=1 // pred_fallthru
      _
    // Predicated region
    $region46: #{audio_enc_forward.1} parent=1 // pred_check
      _
    $region47: #{audio_enc_forward.1} parent=1 // pred_check_branch
      %81 = sbr.rel (0) target = $region49
    $region48: #{audio_enc_forward.1} parent=1 // pred_region
      _
    $region49: #{audio_enc_forward.1} parent=1 // pred_fallthru
      _
    // Predicated region
    $region50: #{audio_enc_forward.1} parent=1 // pred_check
      _
    $region51: #{audio_enc_forward.1} parent=1 // pred_check_branch
      %83 = sbr.rel (0) target = $region53
    $region52: #{audio_enc_forward.1} parent=1 // pred_region
      %85 = vsyncadd [#allocation5], 0
      %s86 = sshll.u32 %s12, 4
      %s87 = int_to_ptr.hbm [resolvable:$true] %s86
      %s88 = sshll.u32 [#allocation6], 4
      %s89 = int_to_ptr.vmem [resolvable:$true] %s88
      %94 = dma.hbm_to_vmem [thread:$0]  %s87, 3072, %s89, [#allocation5], 64, 64, 4
    $region53: #{audio_enc_forward.1} parent=1 // pred_fallthru
      _
    // Predicated region
    $region54: #{audio_enc_forward.1} parent=1 // pred_check
      _
    $region55: #{audio_enc_forward.1} parent=1 // pred_check_branch
      %96 = sbr.rel (0) target = $region57
    $region56: #{audio_enc_forward.1} parent=1 // pred_region
      _
    $region57: #{audio_enc_forward.1} parent=1 // pred_fallthru
      _
    // Predicated region
    $region58: #{audio_enc_forward.1} parent=1 // pred_check
      _
    $region59: #{audio_enc_forward.1} parent=1 // pred_check_branch
      %98 = sbr.rel (0) target = $region61
    $region60: #{audio_enc_forward.1} parent=1 // pred_region
      %100 = vsyncadd [#allocation8], 0
      %s101 = sshll.u32 %s14, 4
      %s102 = int_to_ptr.hbm [resolvable:$true] %s101
      %s103 = sshll.u32 [#allocation7], 4
      %s104 = int_to_ptr.vmem [resolvable:$true] %s103
      %109 = dma.hbm_to_vmem [thread:$0]  %s102, 3072, %s104, [#allocation8], 64, 64, 4
    $region61: #{audio_enc_forward.1} parent=1 // pred_fallthru
      _
    // Predicated region
    $region62: #{audio_enc_forward.1} parent=1 // pred_check
      _
    $region63: #{audio_enc_forward.1} parent=1 // pred_check_branch
      %111 = sbr.rel (0) target = $region65
    $region64: #{audio_enc_forward.1} parent=1 // pred_region
      _
    $region65: #{audio_enc_forward.1} parent=1 // pred_fallthru
      _
    // Predicated region
    $region66: #{audio_enc_forward.1} parent=1 // pred_check
      _
    $region67: #{audio_enc_forward.1} parent=1 // pred_check_branch
      %113 = sbr.rel (0) target = $region69
    $region68: #{audio_enc_forward.1} parent=1 // pred_region
      %115 = vsyncadd [#allocation8], 0
      %s116 = sshll.u32 %s16, 4
      %s117 = int_to_ptr.hbm [resolvable:$true] %s116
      %s118 = sshll.u32 [#allocation9], 4
      %s119 = int_to_ptr.vmem [resolvable:$true] %s118
      %124 = dma.hbm_to_vmem [thread:$0]  %s117, 3072, %s119, [#allocation8], 64, 64, 4
    $region69: #{audio_enc_forward.1} parent=1 // pred_fallthru
      _
    // Predicated region
    $region70: #{audio_enc_forward.1} parent=1 // pred_check
      _
    $region71: #{audio_enc_forward.1} parent=1 // pred_check_branch
      %126 = sbr.rel (0) target = $region73
    $region72: #{audio_enc_forward.1} parent=1 // pred_region
      _
    $region73: #{audio_enc_forward.1} parent=1 // pred_fallthru
      _
    // Predicated region
    $region74: #{audio_enc_forward.1} parent=1 // pred_check
      _
    $region75: #{audio_enc_forward.1} parent=1 // pred_check_branch
      %128 = sbr.rel (0) target = $region77
    $region76: #{audio_enc_forward.1} parent=1 // pred_region
      %130 = vsyncadd [#allocation11], 0
      %s131 = sshll.u32 %s18, 4
      %s132 = int_to_ptr.hbm [resolvable:$true] %s131
      %s133 = sshll.u32 [#allocation10], 4
      %s134 = int_to_ptr.vmem [resolvable:$true] %s133
      %139 = dma.hbm_to_vmem [thread:$0]  %s132, 6144, %s134, [#allocation11], 128, 128, 8
    $region77: #{audio_enc_forward.1} parent=1 // pred_fallthru
      _
    // Predicated region
    $region78: #{audio_enc_forward.1} parent=1 // pred_check
      _
    $region79: #{audio_enc_forward.1} parent=1 // pred_check_branch
      %141 = sbr.rel (0) target = $region81
    $region80: #{audio_enc_forward.1} parent=1 // pred_region
      _
    $region81: #{audio_enc_forward.1} parent=1 // pred_fallthru
      _
    // Predicated region
    $region82: #{audio_enc_forward.1} parent=1 // pred_check
      _
    $region83: #{audio_enc_forward.1} parent=1 // pred_check_branch
      %143 = sbr.rel (0) target = $region85
    $region84: #{audio_enc_forward.1} parent=1 // pred_region
      %145 = vsyncadd [#allocation11], 0
      %s146 = sshll.u32 %s20, 4
      %s147 = int_to_ptr.hbm [resolvable:$true] %s146
      %s148 = sshll.u32 [#allocation12], 4
      %s149 = int_to_ptr.vmem [resolvable:$true] %s148
      %154 = dma.hbm_to_vmem [thread:$0]  %s147, 3072, %s149, [#allocation11], 64, 64, 4
    $region85: #{audio_enc_forward.1} parent=1 // pred_fallthru
      _
    // Predicated region
    $region86: #{audio_enc_forward.1} parent=1 // pred_check
      _
    $region87: #{audio_enc_forward.1} parent=1 // pred_check_branch
      %156 = sbr.rel (0) target = $region89
    $region88: #{audio_enc_forward.1} parent=1 // pred_region
      _
    $region89: #{audio_enc_forward.1} parent=1 // pred_fallthru
      _
    // Predicated region
    $region90: #{audio_enc_forward.1} parent=1 // pred_check
      _
    $region91: #{audio_enc_forward.1} parent=1 // pred_check_branch
      %158 = sbr.rel (0) target = $region93
    $region92: #{audio_enc_forward.1} parent=1 // pred_region
      %160 = vsyncadd [#allocation14], 0
      %s161 = sshll.u32 %s22, 4
      %s162 = int_to_ptr.hbm [resolvable:$true] %s161
      %s163 = sshll.u32 [#allocation13], 4
      %s164 = int_to_ptr.vmem [resolvable:$true] %s163
      %169 = dma.hbm_to_vmem [thread:$0]  %s162, 1024, %s164, [#allocation14], 64, 64, 4
    $region93: #{audio_enc_forward.1} parent=1 // pred_fallthru
      _
    // Predicated region
    $region94: #{audio_enc_forward.1} parent=1 // pred_check
      _
    $region95: #{audio_enc_forward.1} parent=1 // pred_check_branch
      %171 = sbr.rel (0) target = $region97
    $region96: #{audio_enc_forward.1} parent=1 // pred_region
      _
    $region97: #{audio_enc_forward.1} parent=1 // pred_fallthru
      _
    // Predicated region
    $region98: #{audio_enc_forward.1} parent=1 // pred_check
      _
    $region99: #{audio_enc_forward.1} parent=1 // pred_check_branch
      %173 = sbr.rel (0) target = $region101
    $region100: #{audio_enc_forward.1} parent=1 // pred_region
      %175 = vsyncadd [#allocation14], 0
      %s176 = sshll.u32 %s24, 4
      %s177 = int_to_ptr.hbm [resolvable:$true] %s176
      %s178 = sshll.u32 [#allocation15], 4
      %s179 = int_to_ptr.vmem [resolvable:$true] %s178
      %184 = dma.hbm_to_vmem [thread:$0]  %s177, 1024, %s179, [#allocation14], 64, 64, 4
    $region101: #{audio_enc_forward.1} parent=1 // pred_fallthru
      _
    // Predicated region
    $region102: #{audio_enc_forward.1} parent=1 // pred_check
      _
    $region103: #{audio_enc_forward.1} parent=1 // pred_check_branch
      %186 = sbr.rel (0) target = $region105
    $region104: #{audio_enc_forward.1} parent=1 // pred_region
      _
    $region105: #{audio_enc_forward.1} parent=1 // pred_fallthru
      _
    // Predicated region
    $region106: #{audio_enc_forward.1} parent=1 // pred_check
      _
    $region107: #{audio_enc_forward.1} parent=1 // pred_check_branch
      %188 = sbr.rel (0) target = $region109
    $region108: #{audio_enc_forward.1} parent=1 // pred_region
      %190 = dma.done [#allocation3], 3072
    $region109: #{audio_enc_forward.1} parent=1 // pred_fallthru
      _
    // Predicated region
    $region110: #{audio_enc_forward.1} parent=1 // pred_check
      _
    $region111: #{audio_enc_forward.1} parent=1 // pred_check_branch
      %192 = sbr.rel (0) target = $region113
    $region112: #{audio_enc_forward.1} parent=1 // pred_region
      %194 = dma.done [#allocation5], 6144
    $region113: #{audio_enc_forward.1} parent=1 // pred_fallthru
      _
    // Predicated region
    $region114: #{audio_enc_forward.1} parent=1 // pred_check
      _
    $region115: #{audio_enc_forward.1} parent=1 // pred_check_branch
      %196 = sbr.rel (0) target = $region117
    $region116: #{audio_enc_forward.1} parent=1 // pred_region
      %198 = dma.done [#allocation5], 3072
    $region117: #{audio_enc_forward.1} parent=1 // pred_fallthru
      _
    // Predicated region
    $region118: #{audio_enc_forward.1} parent=1 // pred_check
      _
    $region119: #{audio_enc_forward.1} parent=1 // pred_check_branch
      %200 = sbr.rel (0) target = $region121
    $region120: #{audio_enc_forward.1} parent=1 // pred_region
      %202 = dma.done [#allocation8], 3072
    $region121: #{audio_enc_forward.1} parent=1 // pred_fallthru
      _
    // Predicated region
    $region122: #{audio_enc_forward.1} parent=1 // pred_check
      _
    $region123: #{audio_enc_forward.1} parent=1 // pred_check_branch
      %204 = sbr.rel (0) target = $region125
    $region124: #{audio_enc_forward.1} parent=1 // pred_region
      %206 = dma.done [#allocation8], 3072
    $region125: #{audio_enc_forward.1} parent=1 // pred_fallthru
      _
    // Predicated region
    $region126: #{audio_enc_forward.1} parent=1 // pred_check
      _
    $region127: #{audio_enc_forward.1} parent=1 // pred_check_branch
      %208 = sbr.rel (0) target = $region129
    $region128: #{audio_enc_forward.1} parent=1 // pred_region
      %210 = dma.done [#allocation11], 6144
    $region129: #{audio_enc_forward.1} parent=1 // pred_fallthru
      _
    // Predicated region
    $region130: #{audio_enc_forward.1} parent=1 // pred_check
      _
    $region131: #{audio_enc_forward.1} parent=1 // pred_check_branch
      %212 = sbr.rel (0) target = $region133
    $region132: #{audio_enc_forward.1} parent=1 // pred_region
      %214 = dma.done [#allocation11], 3072
    $region133: #{audio_enc_forward.1} parent=1 // pred_fallthru
      _
    // Predicated region
    $region134: #{audio_enc_forward.1} parent=1 // pred_check
      _
    $region135: #{audio_enc_forward.1} parent=1 // pred_check_branch
      %216 = sbr.rel (0) target = $region137
    $region136: #{audio_enc_forward.1} parent=1 // pred_region
      %218 = dma.done [#allocation14], 1024
    $region137: #{audio_enc_forward.1} parent=1 // pred_fallthru
      _
    // Predicated region
    $region138: #{audio_enc_forward.1} parent=1 // pred_check
      _
    $region139: #{audio_enc_forward.1} parent=1 // pred_check_branch
      %220 = sbr.rel (0) target = $region141
    $region140: #{audio_enc_forward.1} parent=1 // pred_region
      %222 = dma.done [#allocation14], 1024
    $region141: #{audio_enc_forward.1} parent=1 // pred_fallthru
      _
    %v223 = vlaneseq
    %v224 = vshrl.u32 %v223, 7
    %v225 = vadd.s32 %v224, 8
    %v226 = vadd.s32 %v224, 16
    %v227 = vadd.s32 %v224, 24
    %v228 = vadd.s32 %v224, 32
    %v229 = vadd.s32 %v224, 40
    %v230 = vadd.s32 %v224, 48
    %v231 = vadd.s32 %v224, 56
    %vm232 = vcmp.ge.s32.totalorder %v224, 1
    %vm233 = vcmp.ge.s32.totalorder %v225, 1
    %vm234 = vcmp.ge.s32.totalorder %v226, 1
    %vm235 = vcmp.ge.s32.totalorder %v227, 1
    %vm236 = vcmp.ge.s32.totalorder %v228, 1
    %vm237 = vcmp.ge.s32.totalorder %v229, 1
    %vm238 = vcmp.ge.s32.totalorder %v230, 1
    %vm239 = vcmp.ge.s32.totalorder %v231, 1
    %vm240 = vcmp.ge.s32.totalorder %v224, 2
    %vm241 = vcmp.ge.s32.totalorder %v225, 2
    %vm242 = vcmp.ge.s32.totalorder %v226, 2
    %vm243 = vcmp.ge.s32.totalorder %v227, 2
    %vm244 = vcmp.ge.s32.totalorder %v228, 2
    %vm245 = vcmp.ge.s32.totalorder %v229, 2
    %vm246 = vcmp.ge.s32.totalorder %v230, 2
    %vm247 = vcmp.ge.s32.totalorder %v231, 2
    %vm248 = vcmp.ge.s32.totalorder %v224, 4
    %vm249 = vcmp.ge.s32.totalorder %v225, 4
    %vm250 = vcmp.ge.s32.totalorder %v226, 4
    %vm251 = vcmp.ge.s32.totalorder %v227, 4
    %vm252 = vcmp.ge.s32.totalorder %v228, 4
    %vm253 = vcmp.ge.s32.totalorder %v229, 4
    %vm254 = vcmp.ge.s32.totalorder %v230, 4
    %vm255 = vcmp.ge.s32.totalorder %v231, 4
    %vm256 = vcmp.ge.s32.totalorder %v224, 8
    %vm257 = vcmp.ge.s32.totalorder %v225, 8
    %vm258 = vcmp.ge.s32.totalorder %v226, 8
    %vm259 = vcmp.ge.s32.totalorder %v227, 8
    %vm260 = vcmp.ge.s32.totalorder %v228, 8
    %vm261 = vcmp.ge.s32.totalorder %v229, 8
    %vm262 = vcmp.ge.s32.totalorder %v230, 8
    %vm263 = vcmp.ge.s32.totalorder %v231, 8
    %vm264 = vcmp.ge.s32.totalorder %v224, 16
    %vm265 = vcmp.ge.s32.totalorder %v225, 16
    %vm266 = vcmp.ge.s32.totalorder %v226, 16
    %vm267 = vcmp.ge.s32.totalorder %v227, 16
    %vm268 = vcmp.ge.s32.totalorder %v228, 16
    %vm269 = vcmp.ge.s32.totalorder %v229, 16
    %vm270 = vcmp.ge.s32.totalorder %v230, 16
    %vm271 = vcmp.ge.s32.totalorder %v231, 16
    %vm272 = vcmp.ge.s32.totalorder %v224, 32
    %vm273 = vcmp.ge.s32.totalorder %v225, 32
    %vm274 = vcmp.ge.s32.totalorder %v226, 32
    %vm275 = vcmp.ge.s32.totalorder %v227, 32
    %vm276 = vcmp.ge.s32.totalorder %v228, 32
    %vm277 = vcmp.ge.s32.totalorder %v229, 32
    %vm278 = vcmp.ge.s32.totalorder %v230, 32
    %vm279 = vcmp.ge.s32.totalorder %v231, 32
    %v280 = vld [vmem:[%s0] sm:$0xff]
    %v281 = vld [vmem:[%s0 + $0x8] sm:$0xff]
    %v282 = vld [vmem:[%s0 + $0x10] sm:$0xff]
    %v283 = vld [vmem:[%s0 + $0x18] sm:$0xff]
    %v284 = vld [vmem:[%s0 + $0x20] sm:$0xff]
    %v285 = vld [vmem:[%s0 + $0x28] sm:$0xff]
    %v286 = vld [vmem:[%s0 + $0x30] sm:$0xff]
    %v287 = vld [vmem:[%s0 + $0x38] sm:$0xff]
    %v288 = vld [vmem:[%s0 + $0x40] sm:$0xff]
    %v289 = vld [vmem:[%s0 + $0x48] sm:$0xff]
    %v290 = vld [vmem:[%s0 + $0x50] sm:$0xff]
    %v291 = vld [vmem:[%s0 + $0x58] sm:$0xff]
    %v292 = vld [vmem:[%s0 + $0x60] sm:$0xff]
    %v293 = vld [vmem:[%s0 + $0x68] sm:$0xff]
    %v294 = vld [vmem:[%s0 + $0x70] sm:$0xff]
    %v295 = vld [vmem:[%s0 + $0x78] sm:$0xff]
    %v296 = vrot.slane %v280, 6
    %v297 = vrot.slane %v281, 6
    %v298 = vrot.slane %v282, 6
    %v299 = vrot.slane %v283, 6
    %v300 = vrot.slane %v284, 6
    %v301 = vrot.slane %v285, 6
    %v302 = vrot.slane %v286, 6
    %v303 = vrot.slane %v287, 6
    %v304 = vrot.slane %v288, 6
    %v305 = vrot.slane %v289, 6
    %v306 = vrot.slane %v290, 6
    %v307 = vrot.slane %v291, 6
    %v308 = vrot.slane %v292, 6
    %v309 = vrot.slane %v293, 6
    %v310 = vrot.slane %v294, 6
    %v311 = vrot.slane %v295, 6
    %vm312 = vcmp.lt.s32.totalorder %v224, 2
    %v313 = vsel %vm312, %v310, %v311
    %v314 = vsel %vm312, %v309, %v310
    %v315 = vsel %vm312, %v308, %v309
    %v316 = vsel %vm312, %v307, %v308
    %v317 = vsel %vm312, %v306, %v307
    %v318 = vsel %vm312, %v305, %v306
    %v319 = vsel %vm312, %v304, %v305
    %v320 = vsel %vm312, %v303, %v304
    %v321 = vsel %vm312, %v302, %v303
    %v322 = vsel %vm312, %v301, %v302
    %v323 = vsel %vm312, %v300, %v301
    %v324 = vsel %vm312, %v299, %v300
    %v325 = vsel %vm312, %v298, %v299
    %v326 = vsel %vm312, %v297, %v298
    %v327 = vsel %vm312, %v296, %v297
    %v328 = vsel %vm312, %v311, %v296
    %v329 = vsel %vm240, 1, 0
    %v330 = vsel %vm241, 1, 0
    %v331 = vsel %vm242, 1, 0
    %v332 = vsel %vm243, 1, 0
    %v333 = vsel %vm244, 1, 0
    %v334 = vsel %vm245, 1, 0
    %v335 = vsel %vm246, 1, 0
    %v336 = vsel %vm247, 1, 0
    %337 = vset.pattern.permute.xlu0 0
    %338 = vperm.xlu0 %337, %v329
    %v339 = vpop.permute.xlu0 %338
    %340 = vset.pattern.permute.xlu0 0
    %341 = vperm.xlu0 %340, %v330
    %v342 = vpop.permute.xlu0 %341
    %343 = vset.pattern.permute.xlu0 0
    %344 = vperm.xlu0 %343, %v331
    %v345 = vpop.permute.xlu0 %344
    %346 = vset.pattern.permute.xlu0 0
    %347 = vperm.xlu0 %346, %v332
    %v348 = vpop.permute.xlu0 %347
    %349 = vset.pattern.permute.xlu0 0
    %350 = vperm.xlu0 %349, %v333
    %v351 = vpop.permute.xlu0 %350
    %352 = vset.pattern.permute.xlu0 0
    %353 = vperm.xlu0 %352, %v334
    %v354 = vpop.permute.xlu0 %353
    %355 = vset.pattern.permute.xlu0 0
    %356 = vperm.xlu0 %355, %v335
    %v357 = vpop.permute.xlu0 %356
    %358 = vset.pattern.permute.xlu0 0
    %359 = vperm.xlu0 %358, %v336
    %v360 = vpop.permute.xlu0 %359
    %vm361 = vcmp.eq.s32.totalorder %v339, 1
    %vm362 = vcmp.eq.s32.totalorder %v342, 1
    %vm363 = vcmp.eq.s32.totalorder %v345, 1
    %vm364 = vcmp.eq.s32.totalorder %v348, 1
    %vm365 = vcmp.eq.s32.totalorder %v351, 1
    %vm366 = vcmp.eq.s32.totalorder %v354, 1
    %vm367 = vcmp.eq.s32.totalorder %v357, 1
    %vm368 = vcmp.eq.s32.totalorder %v360, 1
    %v369 = vsel %vm361, %v328, 0.0
    %v370 = vsel %vm362, %v327, 0.0
    %v371 = vsel %vm363, %v326, 0.0
    %v372 = vsel %vm364, %v325, 0.0
    %v373 = vsel %vm365, %v324, 0.0
    %v374 = vsel %vm366, %v323, 0.0
    %v375 = vsel %vm367, %v322, 0.0
    %v376 = vsel %vm368, %v321, 0.0
    %v377 = vsel %vm361, %v320, 0.0
    %v378 = vsel %vm362, %v319, 0.0
    %v379 = vsel %vm363, %v318, 0.0
    %v380 = vsel %vm364, %v317, 0.0
    %v381 = vsel %vm365, %v316, 0.0
    %v382 = vsel %vm366, %v315, 0.0
    %v383 = vsel %vm367, %v314, 0.0
    %v384 = vsel %vm368, %v313, 0.0
    %v385 = vrot.slane %v280, 7
    %v386 = vrot.slane %v281, 7
    %v387 = vrot.slane %v282, 7
    %v388 = vrot.slane %v283, 7
    %v389 = vrot.slane %v284, 7
    %v390 = vrot.slane %v285, 7
    %v391 = vrot.slane %v286, 7
    %v392 = vrot.slane %v287, 7
    %v393 = vrot.slane %v288, 7
    %v394 = vrot.slane %v289, 7
    %v395 = vrot.slane %v290, 7
    %v396 = vrot.slane %v291, 7
    %v397 = vrot.slane %v292, 7
    %v398 = vrot.slane %v293, 7
    %v399 = vrot.slane %v294, 7
    %v400 = vrot.slane %v295, 7
    %vm401 = vcmp.lt.s32.totalorder %v224, 1
    %v402 = vsel %vm401, %v399, %v400
    %v403 = vsel %vm401, %v398, %v399
    %v404 = vsel %vm401, %v397, %v398
    %v405 = vsel %vm401, %v396, %v397
    %v406 = vsel %vm401, %v395, %v396
    %v407 = vsel %vm401, %v394, %v395
    %v408 = vsel %vm401, %v393, %v394
    %v409 = vsel %vm401, %v392, %v393
    %v410 = vsel %vm401, %v391, %v392
    %v411 = vsel %vm401, %v390, %v391
    %v412 = vsel %vm401, %v389, %v390
    %v413 = vsel %vm401, %v388, %v389
    %v414 = vsel %vm401, %v387, %v388
    %v415 = vsel %vm401, %v386, %v387
    %v416 = vsel %vm401, %v385, %v386
    %v417 = vsel %vm401, %v400, %v385
    %v418 = vsel %vm232, 1, 0
    %v419 = vsel %vm233, 1, 0
    %v420 = vsel %vm234, 1, 0
    %v421 = vsel %vm235, 1, 0
    %v422 = vsel %vm236, 1, 0
    %v423 = vsel %vm237, 1, 0
    %v424 = vsel %vm238, 1, 0
    %v425 = vsel %vm239, 1, 0
    %426 = vset.pattern.permute.xlu0 0
    %427 = vperm.xlu0 %426, %v418
    %v428 = vpop.permute.xlu0 %427
    %429 = vset.pattern.permute.xlu0 0
    %430 = vperm.xlu0 %429, %v419
    %v431 = vpop.permute.xlu0 %430
    %432 = vset.pattern.permute.xlu0 0
    %433 = vperm.xlu0 %432, %v420
    %v434 = vpop.permute.xlu0 %433
    %435 = vset.pattern.permute.xlu0 0
    %436 = vperm.xlu0 %435, %v421
    %v437 = vpop.permute.xlu0 %436
    %438 = vset.pattern.permute.xlu0 0
    %439 = vperm.xlu0 %438, %v422
    %v440 = vpop.permute.xlu0 %439
    %441 = vset.pattern.permute.xlu0 0
    %442 = vperm.xlu0 %441, %v423
    %v443 = vpop.permute.xlu0 %442
    %444 = vset.pattern.permute.xlu0 0
    %445 = vperm.xlu0 %444, %v424
    %v446 = vpop.permute.xlu0 %445
    %447 = vset.pattern.permute.xlu0 0
    %448 = vperm.xlu0 %447, %v425
    %v449 = vpop.permute.xlu0 %448
    %vm450 = vcmp.eq.s32.totalorder %v428, 1
    %vm451 = vcmp.eq.s32.totalorder %v431, 1
    %vm452 = vcmp.eq.s32.totalorder %v434, 1
    %vm453 = vcmp.eq.s32.totalorder %v437, 1
    %vm454 = vcmp.eq.s32.totalorder %v440, 1
    %vm455 = vcmp.eq.s32.totalorder %v443, 1
    %vm456 = vcmp.eq.s32.totalorder %v446, 1
    %vm457 = vcmp.eq.s32.totalorder %v449, 1
    %v458 = vsel %vm450, %v417, 0.0
    %v459 = vsel %vm451, %v416, 0.0
    %v460 = vsel %vm452, %v415, 0.0
    %v461 = vsel %vm453, %v414, 0.0
    %v462 = vsel %vm454, %v413, 0.0
    %v463 = vsel %vm455, %v412, 0.0
    %v464 = vsel %vm456, %v411, 0.0
    %v465 = vsel %vm457, %v410, 0.0
    %v466 = vsel %vm450, %v409, 0.0
    %v467 = vsel %vm451, %v408, 0.0
    %v468 = vsel %vm452, %v407, 0.0
    %v469 = vsel %vm453, %v406, 0.0
    %v470 = vsel %vm454, %v405, 0.0
    %v471 = vsel %vm455, %v404, 0.0
    %v472 = vsel %vm456, %v403, 0.0
    %v473 = vsel %vm457, %v402, 0.0
    %v474 = vpack.c.bf16 %v370, %v369
    %v475 = vpack.c.bf16 %v459, %v458
    %v476 = vpack.c.bf16 %v281, %v280
    %v477 = vpack.c.bf16 %v372, %v371
    %v478 = vpack.c.bf16 %v461, %v460
    %v479 = vpack.c.bf16 %v283, %v282
    %v480 = vpack.c.bf16 %v374, %v373
    %v481 = vpack.c.bf16 %v463, %v462
    %v482 = vpack.c.bf16 %v285, %v284
    %v483 = vpack.c.bf16 %v376, %v375
    %v484 = vpack.c.bf16 %v465, %v464
    %v485 = vpack.c.bf16 %v287, %v286
    %v486 = vpack.c.bf16 %v378, %v377
    %v487 = vpack.c.bf16 %v467, %v466
    %v488 = vpack.c.bf16 %v289, %v288
    %v489 = vpack.c.bf16 %v380, %v379
    %v490 = vpack.c.bf16 %v469, %v468
    %v491 = vpack.c.bf16 %v291, %v290
    %v492 = vpack.c.bf16 %v382, %v381
    %v493 = vpack.c.bf16 %v471, %v470
    %v494 = vpack.c.bf16 %v293, %v292
    %v495 = vpack.c.bf16 %v384, %v383
    %v496 = vpack.c.bf16 %v473, %v472
    %v497 = vpack.c.bf16 %v295, %v294
    %v498 = vld [vmem:[%s2] sm:$0xff]
    %v499 = vld [vmem:[%s2 + $0x8] sm:$0xff]
    %v500 = vld [vmem:[%s2 + $0x10] sm:$0xff]
    %v501 = vld [vmem:[%s2 + $0x18] sm:$0xff]
    %v502 = vld [vmem:[%s2 + $0x20] sm:$0xff]
    %v503 = vld [vmem:[%s2 + $0x28] sm:$0xff]
    %v504 = vld [vmem:[%s2 + $0x30] sm:$0xff]
    %v505 = vld [vmem:[%s2 + $0x38] sm:$0xff]
    %v506 = vld [vmem:[%s2 + $0x40] sm:$0xff]
    %v507 = vld [vmem:[%s2 + $0x48] sm:$0xff]
    %v508 = vld [vmem:[%s2 + $0x50] sm:$0xff]
    %v509 = vld [vmem:[%s2 + $0x58] sm:$0xff]
    %v510 = vld [vmem:[%s2 + $0x60] sm:$0xff]
    %v511 = vld [vmem:[%s2 + $0x68] sm:$0xff]
    %v512 = vld [vmem:[%s2 + $0x70] sm:$0xff]
    %v513 = vld [vmem:[%s2 + $0x78] sm:$0xff]
    %v514 = vld [vmem:[%s2 + $0x80] sm:$0xff]
    %v515 = vld [vmem:[%s2 + $0x88] sm:$0xff]
    %v516 = vld [vmem:[%s2 + $0x90] sm:$0xff]
    %v517 = vld [vmem:[%s2 + $0x98] sm:$0xff]
    %v518 = vld [vmem:[%s2 + $0xa0] sm:$0xff]
    %v519 = vld [vmem:[%s2 + $0xa8] sm:$0xff]
    %v520 = vld [vmem:[%s2 + $0xb0] sm:$0xff]
    %v521 = vld [vmem:[%s2 + $0xb8] sm:$0xff]
    %v522 = vld [vmem:[%s2 + $0xc0] sm:$0xff]
    %v523 = vld [vmem:[%s2 + $0xc8] sm:$0xff]
    %v524 = vld [vmem:[%s2 + $0xd0] sm:$0xff]
    %v525 = vld [vmem:[%s2 + $0xd8] sm:$0xff]
    %v526 = vld [vmem:[%s2 + $0xe0] sm:$0xff]
    %v527 = vld [vmem:[%s2 + $0xe8] sm:$0xff]
    %v528 = vld [vmem:[%s2 + $0xf0] sm:$0xff]
    %v529 = vld [vmem:[%s2 + $0xf8] sm:$0xff]
    %v530 = vld [vmem:[%s2 + $0x100] sm:$0xff]
    %v531 = vld [vmem:[%s2 + $0x108] sm:$0xff]
    %v532 = vld [vmem:[%s2 + $0x110] sm:$0xff]
    %v533 = vld [vmem:[%s2 + $0x118] sm:$0xff]
    %v534 = vld [vmem:[%s2 + $0x120] sm:$0xff]
    %v535 = vld [vmem:[%s2 + $0x128] sm:$0xff]
    %v536 = vld [vmem:[%s2 + $0x130] sm:$0xff]
    %v537 = vld [vmem:[%s2 + $0x138] sm:$0xff]
    %v538 = vld [vmem:[%s2 + $0x140] sm:$0xff]
    %v539 = vld [vmem:[%s2 + $0x148] sm:$0xff]
    %v540 = vld [vmem:[%s2 + $0x150] sm:$0xff]
    %v541 = vld [vmem:[%s2 + $0x158] sm:$0xff]
    %v542 = vld [vmem:[%s2 + $0x160] sm:$0xff]
    %v543 = vld [vmem:[%s2 + $0x168] sm:$0xff]
    %v544 = vld [vmem:[%s2 + $0x170] sm:$0xff]
    %v545 = vld [vmem:[%s2 + $0x178] sm:$0xff]
    %v546 = vld [vmem:[%s3] sm:$0x3]
    %v548 = vperm.slane %v546, 0
    %v549 = vperm.slane %v546, 1
    %v600 = vunpack.c.l.b16 %v498
    %v601 = vunpack.c.h.b16 %v498
    %v602 = vunpack.c.l.b16 %v499
    %v603 = vunpack.c.h.b16 %v499
    %v604 = vunpack.c.l.b16 %v500
    %v605 = vunpack.c.h.b16 %v500
    %v606 = vunpack.c.l.b16 %v501
    %v607 = vunpack.c.h.b16 %v501
    %v608 = vunpack.c.l.b16 %v502
    %v609 = vunpack.c.h.b16 %v502
    %v610 = vunpack.c.l.b16 %v503
    %v611 = vunpack.c.h.b16 %v503
    %v612 = vunpack.c.l.b16 %v504
    %v613 = vunpack.c.h.b16 %v504
    %v614 = vunpack.c.l.b16 %v505
    %v615 = vunpack.c.h.b16 %v505
    %v616 = vunpack.c.l.b16 %v506
    %v617 = vunpack.c.h.b16 %v506
    %v618 = vunpack.c.l.b16 %v507
    %v619 = vunpack.c.h.b16 %v507
    %v620 = vunpack.c.l.b16 %v508
    %v621 = vunpack.c.h.b16 %v508
    %v622 = vunpack.c.l.b16 %v509
    %v623 = vunpack.c.h.b16 %v509
    %v624 = vunpack.c.l.b16 %v510
    %v625 = vunpack.c.h.b16 %v510
    %v626 = vunpack.c.l.b16 %v511
    %v627 = vunpack.c.h.b16 %v511
    %v628 = vunpack.c.l.b16 %v512
    %v629 = vunpack.c.h.b16 %v512
    %v630 = vunpack.c.l.b16 %v513
    %v631 = vunpack.c.h.b16 %v513
    %v632 = vunpack.c.l.b16 %v514
    %v633 = vunpack.c.h.b16 %v514
    %v634 = vunpack.c.l.b16 %v515
    %v635 = vunpack.c.h.b16 %v515
    %v636 = vunpack.c.l.b16 %v516
    %v637 = vunpack.c.h.b16 %v516
    %v638 = vunpack.c.l.b16 %v517
    %v639 = vunpack.c.h.b16 %v517
    %v640 = vunpack.c.l.b16 %v518
    %v641 = vunpack.c.h.b16 %v518
    %v642 = vunpack.c.l.b16 %v519
    %v643 = vunpack.c.h.b16 %v519
    %v644 = vunpack.c.l.b16 %v520
    %v645 = vunpack.c.h.b16 %v520
    %v646 = vunpack.c.l.b16 %v521
    %v647 = vunpack.c.h.b16 %v521
    %v648 = vunpack.c.l.b16 %v522
    %v649 = vunpack.c.h.b16 %v522
    %v650 = vunpack.c.l.b16 %v523
    %v651 = vunpack.c.h.b16 %v523
    %v652 = vunpack.c.l.b16 %v524
    %v653 = vunpack.c.h.b16 %v524
    %v654 = vunpack.c.l.b16 %v525
    %v655 = vunpack.c.h.b16 %v525
    %v656 = vunpack.c.l.b16 %v526
    %v657 = vunpack.c.h.b16 %v526
    %v658 = vunpack.c.l.b16 %v527
    %v659 = vunpack.c.h.b16 %v527
    %v660 = vunpack.c.l.b16 %v528
    %v661 = vunpack.c.h.b16 %v528
    %v662 = vunpack.c.l.b16 %v529
    %v663 = vunpack.c.h.b16 %v529
    %v664 = vunpack.c.l.b16 %v530
    %v665 = vunpack.c.h.b16 %v530
    %v666 = vunpack.c.l.b16 %v531
    %v667 = vunpack.c.h.b16 %v531
    %v668 = vunpack.c.l.b16 %v532
    %v669 = vunpack.c.h.b16 %v532
    %v670 = vunpack.c.l.b16 %v533
    %v671 = vunpack.c.h.b16 %v533
    %v672 = vunpack.c.l.b16 %v534
    %v673 = vunpack.c.h.b16 %v534
    %v674 = vunpack.c.l.b16 %v535
    %v675 = vunpack.c.h.b16 %v535
    %v676 = vunpack.c.l.b16 %v536
    %v677 = vunpack.c.h.b16 %v536
    %v678 = vunpack.c.l.b16 %v537
    %v679 = vunpack.c.h.b16 %v537
    %v680 = vunpack.c.l.b16 %v538
    %v681 = vunpack.c.h.b16 %v538
    %v682 = vunpack.c.l.b16 %v539
    %v683 = vunpack.c.h.b16 %v539
    %v684 = vunpack.c.l.b16 %v540
    %v685 = vunpack.c.h.b16 %v540
    %v686 = vunpack.c.l.b16 %v541
    %v687 = vunpack.c.h.b16 %v541
    %v688 = vunpack.c.l.b16 %v542
    %v689 = vunpack.c.h.b16 %v542
    %v690 = vunpack.c.l.b16 %v543
    %v691 = vunpack.c.h.b16 %v543
    %v692 = vunpack.c.l.b16 %v544
    %v693 = vunpack.c.h.b16 %v544
    %v694 = vunpack.c.l.b16 %v545
    %v695 = vunpack.c.h.b16 %v545
    %v696 = vpack.c.b16 %v602, %v600
    %v697 = vpack.c.b16 %v603, %v601
    %v698 = vpack.c.b16 %v606, %v604
    %v699 = vpack.c.b16 %v607, %v605
    %v700 = vpack.c.b16 %v610, %v608
    %v701 = vpack.c.b16 %v611, %v609
    %v702 = vpack.c.b16 %v614, %v612
    %v703 = vpack.c.b16 %v615, %v613
    %v704 = vpack.c.b16 %v618, %v616
    %v705 = vpack.c.b16 %v619, %v617
    %v706 = vpack.c.b16 %v622, %v620
    %v707 = vpack.c.b16 %v623, %v621
    %v708 = vpack.c.b16 %v626, %v624
    %v709 = vpack.c.b16 %v627, %v625
    %v710 = vpack.c.b16 %v630, %v628
    %v711 = vpack.c.b16 %v631, %v629
    %v712 = vpack.c.b16 %v634, %v632
    %v713 = vpack.c.b16 %v635, %v633
    %v714 = vpack.c.b16 %v638, %v636
    %v715 = vpack.c.b16 %v639, %v637
    %v716 = vpack.c.b16 %v642, %v640
    %v717 = vpack.c.b16 %v643, %v641
    %v718 = vpack.c.b16 %v646, %v644
    %v719 = vpack.c.b16 %v647, %v645
    %v720 = vpack.c.b16 %v650, %v648
    %v721 = vpack.c.b16 %v651, %v649
    %v722 = vpack.c.b16 %v654, %v652
    %v723 = vpack.c.b16 %v655, %v653
    %v724 = vpack.c.b16 %v658, %v656
    %v725 = vpack.c.b16 %v659, %v657
    %v726 = vpack.c.b16 %v662, %v660
    %v727 = vpack.c.b16 %v663, %v661
    %v728 = vpack.c.b16 %v666, %v664
    %v729 = vpack.c.b16 %v667, %v665
    %v730 = vpack.c.b16 %v670, %v668
    %v731 = vpack.c.b16 %v671, %v669
    %v732 = vpack.c.b16 %v674, %v672
    %v733 = vpack.c.b16 %v675, %v673
    %v734 = vpack.c.b16 %v678, %v676
    %v735 = vpack.c.b16 %v679, %v677
    %v736 = vpack.c.b16 %v682, %v680
    %v737 = vpack.c.b16 %v683, %v681
    %v738 = vpack.c.b16 %v686, %v684
    %v739 = vpack.c.b16 %v687, %v685
    %v740 = vpack.c.b16 %v690, %v688
    %v741 = vpack.c.b16 %v691, %v689
    %v742 = vpack.c.b16 %v694, %v692
    %v743 = vpack.c.b16 %v695, %v693
    %792 = vmatpush.bf16.msra.mxu0 %v710
    %793 = vmatpush.bf16.msra.mxu0 %v708
    %794 = vmatpush.bf16.msra.mxu0 %v706
    %795 = vmatpush.bf16.msra.mxu0 %v704
    %796 = vmatpush.bf16.msra.mxu0 %v702
    %797 = vmatpush.bf16.msra.mxu0 %v700
    %798 = vmatpush.bf16.msra.mxu0 %v698
    %799 = vmatpush.bf16.msra.mxu0 %v696
    %800 = vmatmul.bf16.gmra.mxu0 %v474
    %v801 = vpop.f32.mrf.mxu0
    %v802 = vadd.f32 %v548, %v801
    %v803 = vpop.f32.mrf.mxu0
    %v804 = vadd.f32 %v548, %v803
    %805 = vmatmul.bf16.gmra.mxu0 %v477
    %v806 = vpop.f32.mrf.mxu0
    %v807 = vadd.f32 %v548, %v806
    %v808 = vpop.f32.mrf.mxu0
    %v809 = vadd.f32 %v548, %v808
    %810 = vmatmul.bf16.gmra.mxu0 %v480
    %v811 = vpop.f32.mrf.mxu0
    %v812 = vadd.f32 %v548, %v811
    %v813 = vpop.f32.mrf.mxu0
    %v814 = vadd.f32 %v548, %v813
    %815 = vmatmul.bf16.gmra.mxu0 %v483
    %v816 = vpop.f32.mrf.mxu0
    %v817 = vadd.f32 %v548, %v816
    %v818 = vpop.f32.mrf.mxu0
    %v819 = vadd.f32 %v548, %v818
    %820 = vmatmul.bf16.gmra.mxu0 %v486
    %v821 = vpop.f32.mrf.mxu0
    %v822 = vadd.f32 %v548, %v821
    %v823 = vpop.f32.mrf.mxu0
    %v824 = vadd.f32 %v548, %v823
    %825 = vmatmul.bf16.gmra.mxu0 %v489
    %v826 = vpop.f32.mrf.mxu0
    %v827 = vadd.f32 %v548, %v826
    %v828 = vpop.f32.mrf.mxu0
    %v829 = vadd.f32 %v548, %v828
    %830 = vmatmul.bf16.gmra.mxu0 %v492
    %v831 = vpop.f32.mrf.mxu0
    %v832 = vadd.f32 %v548, %v831
    %v833 = vpop.f32.mrf.mxu0
    %v834 = vadd.f32 %v548, %v833
    %835 = vmatmul.bf16.gmra.mxu0 %v495
    %v836 = vpop.f32.mrf.mxu0
    %v837 = vadd.f32 %v548, %v836
    %v838 = vpop.f32.mrf.mxu0
    %v839 = vadd.f32 %v548, %v838
    %840 = vdwg.mxu0
    %841 = vmatpush.bf16.msra.mxu0 %v726
    %842 = vmatpush.bf16.msra.mxu0 %v724
    %843 = vmatpush.bf16.msra.mxu0 %v722
    %844 = vmatpush.bf16.msra.mxu0 %v720
    %845 = vmatpush.bf16.msra.mxu0 %v718
    %846 = vmatpush.bf16.msra.mxu0 %v716
    %847 = vmatpush.bf16.msra.mxu0 %v714
    %848 = vmatpush.bf16.msra.mxu0 %v712
    %849 = vmatmul.bf16.gmra.mxu0 %v475
    %v850 = vpop.f32.mrf.mxu0
    %v851 = vadd.f32 %v802, %v850
    %v852 = vpop.f32.mrf.mxu0
    %v853 = vadd.f32 %v804, %v852
    %854 = vmatmul.bf16.gmra.mxu0 %v478
    %v855 = vpop.f32.mrf.mxu0
    %v856 = vadd.f32 %v807, %v855
    %v857 = vpop.f32.mrf.mxu0
    %v858 = vadd.f32 %v809, %v857
    %859 = vmatmul.bf16.gmra.mxu0 %v481
    %v860 = vpop.f32.mrf.mxu0
    %v861 = vadd.f32 %v812, %v860
    %v862 = vpop.f32.mrf.mxu0
    %v863 = vadd.f32 %v814, %v862
    %864 = vmatmul.bf16.gmra.mxu0 %v484
    %v865 = vpop.f32.mrf.mxu0
    %v866 = vadd.f32 %v817, %v865
    %v867 = vpop.f32.mrf.mxu0
    %v868 = vadd.f32 %v819, %v867
    %869 = vmatmul.bf16.gmra.mxu0 %v487
    %v870 = vpop.f32.mrf.mxu0
    %v871 = vadd.f32 %v822, %v870
    %v872 = vpop.f32.mrf.mxu0
    %v873 = vadd.f32 %v824, %v872
    %874 = vmatmul.bf16.gmra.mxu0 %v490
    %v875 = vpop.f32.mrf.mxu0
    %v876 = vadd.f32 %v827, %v875
    %v877 = vpop.f32.mrf.mxu0
    %v878 = vadd.f32 %v829, %v877
    %879 = vmatmul.bf16.gmra.mxu0 %v493
    %v880 = vpop.f32.mrf.mxu0
    %v881 = vadd.f32 %v832, %v880
    %v882 = vpop.f32.mrf.mxu0
    %v883 = vadd.f32 %v834, %v882
    %884 = vmatmul.bf16.gmra.mxu0 %v496
    %v885 = vpop.f32.mrf.mxu0
    %v886 = vadd.f32 %v837, %v885
    %v887 = vpop.f32.mrf.mxu0
    %v888 = vadd.f32 %v839, %v887
    %889 = vdwg.mxu0
    %890 = vmatpush.bf16.msra.mxu0 %v742
    %891 = vmatpush.bf16.msra.mxu0 %v740
    %892 = vmatpush.bf16.msra.mxu0 %v738
    %893 = vmatpush.bf16.msra.mxu0 %v736
    %894 = vmatpush.bf16.msra.mxu0 %v734
    %895 = vmatpush.bf16.msra.mxu0 %v732
    %896 = vmatpush.bf16.msra.mxu0 %v730
    %897 = vmatpush.bf16.msra.mxu0 %v728
    %898 = vmatmul.bf16.gmra.mxu0 %v476
    %v899 = vpop.f32.mrf.mxu0
    %v900 = vadd.f32 %v851, %v899
    %v901 = vpop.f32.mrf.mxu0
    %v902 = vadd.f32 %v853, %v901
    %903 = vmatmul.bf16.gmra.mxu0 %v479
    %v904 = vpop.f32.mrf.mxu0
    %v905 = vadd.f32 %v856, %v904
    %v906 = vpop.f32.mrf.mxu0
    %v907 = vadd.f32 %v858, %v906
    %908 = vmatmul.bf16.gmra.mxu0 %v482
    %v909 = vpop.f32.mrf.mxu0
    %v910 = vadd.f32 %v861, %v909
    %v911 = vpop.f32.mrf.mxu0
    %v912 = vadd.f32 %v863, %v911
    %913 = vmatmul.bf16.gmra.mxu0 %v485
    %v914 = vpop.f32.mrf.mxu0
    %v915 = vadd.f32 %v866, %v914
    %v916 = vpop.f32.mrf.mxu0
    %v917 = vadd.f32 %v868, %v916
    %918 = vmatmul.bf16.gmra.mxu0 %v488
    %v919 = vpop.f32.mrf.mxu0
    %v920 = vadd.f32 %v871, %v919
    %v921 = vpop.f32.mrf.mxu0
    %v922 = vadd.f32 %v873, %v921
    %923 = vmatmul.bf16.gmra.mxu0 %v491
    %v924 = vpop.f32.mrf.mxu0
    %v925 = vadd.f32 %v876, %v924
    %v926 = vpop.f32.mrf.mxu0
    %v927 = vadd.f32 %v878, %v926
    %928 = vmatmul.bf16.gmra.mxu0 %v494
    %v929 = vpop.f32.mrf.mxu0
    %v930 = vadd.f32 %v881, %v929
    %v931 = vpop.f32.mrf.mxu0
    %v932 = vadd.f32 %v883, %v931
    %933 = vmatmul.bf16.gmra.mxu0 %v497
    %v934 = vpop.f32.mrf.mxu0
    %v935 = vadd.f32 %v886, %v934
    %v936 = vpop.f32.mrf.mxu0
    %v937 = vadd.f32 %v888, %v936
    %938 = vdwg.mxu0
    %939 = vmatpush.bf16.msra.mxu0 %v711
    %940 = vmatpush.bf16.msra.mxu0 %v709
    %941 = vmatpush.bf16.msra.mxu0 %v707
    %942 = vmatpush.bf16.msra.mxu0 %v705
    %943 = vmatpush.bf16.msra.mxu0 %v703
    %944 = vmatpush.bf16.msra.mxu0 %v701
    %945 = vmatpush.bf16.msra.mxu0 %v699
    %946 = vmatpush.bf16.msra.mxu0 %v697
    %947 = vmatmul.bf16.gmra.mxu0 %v474
    %v948 = vpop.f32.mrf.mxu0
    %v949 = vadd.f32 %v549, %v948
    %v950 = vpop.f32.mrf.mxu0
    %v951 = vadd.f32 %v549, %v950
    %952 = vmatmul.bf16.gmra.mxu0 %v477
    %v953 = vpop.f32.mrf.mxu0
    %v954 = vadd.f32 %v549, %v953
    %v955 = vpop.f32.mrf.mxu0
    %v956 = vadd.f32 %v549, %v955
    %957 = vmatmul.bf16.gmra.mxu0 %v480
    %v958 = vpop.f32.mrf.mxu0
    %v959 = vadd.f32 %v549, %v958
    %v960 = vpop.f32.mrf.mxu0
    %v961 = vadd.f32 %v549, %v960
    %962 = vmatmul.bf16.gmra.mxu0 %v483
    %v963 = vpop.f32.mrf.mxu0
    %v964 = vadd.f32 %v549, %v963
    %v965 = vpop.f32.mrf.mxu0
    %v966 = vadd.f32 %v549, %v965
    %967 = vmatmul.bf16.gmra.mxu0 %v486
    %v968 = vpop.f32.mrf.mxu0
    %v969 = vadd.f32 %v549, %v968
    %v970 = vpop.f32.mrf.mxu0
    %v971 = vadd.f32 %v549, %v970
    %972 = vmatmul.bf16.gmra.mxu0 %v489
    %v973 = vpop.f32.mrf.mxu0
    %v974 = vadd.f32 %v549, %v973
    %v975 = vpop.f32.mrf.mxu0
    %v976 = vadd.f32 %v549, %v975
    %977 = vmatmul.bf16.gmra.mxu0 %v492
    %v978 = vpop.f32.mrf.mxu0
    %v979 = vadd.f32 %v549, %v978
    %v980 = vpop.f32.mrf.mxu0
    %v981 = vadd.f32 %v549, %v980
    %982 = vmatmul.bf16.gmra.mxu0 %v495
    %v983 = vpop.f32.mrf.mxu0
    %v984 = vadd.f32 %v549, %v983
    %v985 = vpop.f32.mrf.mxu0
    %v986 = vadd.f32 %v549, %v985
    %987 = vdwg.mxu0
    %988 = vmatpush.bf16.msra.mxu0 %v727
    %989 = vmatpush.bf16.msra.mxu0 %v725
    %990 = vmatpush.bf16.msra.mxu0 %v723
    %991 = vmatpush.bf16.msra.mxu0 %v721
    %992 = vmatpush.bf16.msra.mxu0 %v719
    %993 = vmatpush.bf16.msra.mxu0 %v717
    %994 = vmatpush.bf16.msra.mxu0 %v715
    %995 = vmatpush.bf16.msra.mxu0 %v713
    %996 = vmatmul.bf16.gmra.mxu0 %v475
    %v997 = vpop.f32.mrf.mxu0
    %v998 = vadd.f32 %v949, %v997
    %v999 = vpop.f32.mrf.mxu0
    %v1000 = vadd.f32 %v951, %v999
    %1001 = vmatmul.bf16.gmra.mxu0 %v478
    %v1002 = vpop.f32.mrf.mxu0
    %v1003 = vadd.f32 %v954, %v1002
    %v1004 = vpop.f32.mrf.mxu0
    %v1005 = vadd.f32 %v956, %v1004
    %1006 = vmatmul.bf16.gmra.mxu0 %v481
    %v1007 = vpop.f32.mrf.mxu0
    %v1008 = vadd.f32 %v959, %v1007
    %v1009 = vpop.f32.mrf.mxu0
    %v1010 = vadd.f32 %v961, %v1009
    %1011 = vmatmul.bf16.gmra.mxu0 %v484
    %v1012 = vpop.f32.mrf.mxu0
    %v1013 = vadd.f32 %v964, %v1012
    %v1014 = vpop.f32.mrf.mxu0
    %v1015 = vadd.f32 %v966, %v1014
    %1016 = vmatmul.bf16.gmra.mxu0 %v487
    %v1017 = vpop.f32.mrf.mxu0
    %v1018 = vadd.f32 %v969, %v1017
    %v1019 = vpop.f32.mrf.mxu0
    %v1020 = vadd.f32 %v971, %v1019
    %1021 = vmatmul.bf16.gmra.mxu0 %v490
    %v1022 = vpop.f32.mrf.mxu0
    %v1023 = vadd.f32 %v974, %v1022
    %v1024 = vpop.f32.mrf.mxu0
    %v1025 = vadd.f32 %v976, %v1024
    %1026 = vmatmul.bf16.gmra.mxu0 %v493
    %v1027 = vpop.f32.mrf.mxu0
    %v1028 = vadd.f32 %v979, %v1027
    %v1029 = vpop.f32.mrf.mxu0
    %v1030 = vadd.f32 %v981, %v1029
    %1031 = vmatmul.bf16.gmra.mxu0 %v496
    %v1032 = vpop.f32.mrf.mxu0
    %v1033 = vadd.f32 %v984, %v1032
    %v1034 = vpop.f32.mrf.mxu0
    %v1035 = vadd.f32 %v986, %v1034
    %1036 = vdwg.mxu0
    %1037 = vmatpush.bf16.msra.mxu0 %v743
    %1038 = vmatpush.bf16.msra.mxu0 %v741
    %1039 = vmatpush.bf16.msra.mxu0 %v739
    %1040 = vmatpush.bf16.msra.mxu0 %v737
    %1041 = vmatpush.bf16.msra.mxu0 %v735
    %1042 = vmatpush.bf16.msra.mxu0 %v733
    %1043 = vmatpush.bf16.msra.mxu0 %v731
    %1044 = vmatpush.bf16.msra.mxu0 %v729
    %1045 = vmatmul.bf16.gmra.mxu0 %v476
    %v1046 = vpop.f32.mrf.mxu0
    %v1047 = vadd.f32 %v998, %v1046
    %v1048 = vpop.f32.mrf.mxu0
    %v1049 = vadd.f32 %v1000, %v1048
    %1050 = vmatmul.bf16.gmra.mxu0 %v479
    %v1051 = vpop.f32.mrf.mxu0
    %v1052 = vadd.f32 %v1003, %v1051
    %v1053 = vpop.f32.mrf.mxu0
    %v1054 = vadd.f32 %v1005, %v1053
    %1055 = vmatmul.bf16.gmra.mxu0 %v482
    %v1056 = vpop.f32.mrf.mxu0
    %v1057 = vadd.f32 %v1008, %v1056
    %v1058 = vpop.f32.mrf.mxu0
    %v1059 = vadd.f32 %v1010, %v1058
    %1060 = vmatmul.bf16.gmra.mxu0 %v485
    %v1061 = vpop.f32.mrf.mxu0
    %v1062 = vadd.f32 %v1013, %v1061
    %v1063 = vpop.f32.mrf.mxu0
    %v1064 = vadd.f32 %v1015, %v1063
    %1065 = vmatmul.bf16.gmra.mxu0 %v488
    %v1066 = vpop.f32.mrf.mxu0
    %v1067 = vadd.f32 %v1018, %v1066
    %v1068 = vpop.f32.mrf.mxu0
    %v1069 = vadd.f32 %v1020, %v1068
    %1070 = vmatmul.bf16.gmra.mxu0 %v491
    %v1071 = vpop.f32.mrf.mxu0
    %v1072 = vadd.f32 %v1023, %v1071
    %v1073 = vpop.f32.mrf.mxu0
    %v1074 = vadd.f32 %v1025, %v1073
    %1075 = vmatmul.bf16.gmra.mxu0 %v494
    %v1076 = vpop.f32.mrf.mxu0
    %v1077 = vadd.f32 %v1028, %v1076
    %v1078 = vpop.f32.mrf.mxu0
    %v1079 = vadd.f32 %v1030, %v1078
    %1080 = vmatmul.bf16.gmra.mxu0 %v497
    %v1081 = vpop.f32.mrf.mxu0
    %v1082 = vadd.f32 %v1033, %v1081
    %v1083 = vpop.f32.mrf.mxu0
    %v1084 = vadd.f32 %v1035, %v1083
    %1085 = vdwg.mxu0
    %v1086 = vmax.f32 %v900, 0.0
    %v1087 = vmax.f32 %v902, 0.0
    %v1088 = vmax.f32 %v905, 0.0
    %v1089 = vmax.f32 %v907, 0.0
    %v1090 = vmax.f32 %v910, 0.0
    %v1091 = vmax.f32 %v912, 0.0
    %v1092 = vmax.f32 %v915, 0.0
    %v1093 = vmax.f32 %v917, 0.0
    %v1094 = vmax.f32 %v920, 0.0
    %v1095 = vmax.f32 %v922, 0.0
    %v1096 = vmax.f32 %v925, 0.0
    %v1097 = vmax.f32 %v927, 0.0
    %v1098 = vmax.f32 %v930, 0.0
    %v1099 = vmax.f32 %v932, 0.0
    %v1100 = vmax.f32 %v935, 0.0
    %v1101 = vmax.f32 %v937, 0.0
    %v1102 = vrot.slane %v1086, 6
    %v1103 = vrot.slane %v1087, 6
    %v1104 = vrot.slane %v1088, 6
    %v1105 = vrot.slane %v1089, 6
    %v1106 = vrot.slane %v1090, 6
    %v1107 = vrot.slane %v1091, 6
    %v1108 = vrot.slane %v1092, 6
    %v1109 = vrot.slane %v1093, 6
    %v1110 = vrot.slane %v1094, 6
    %v1111 = vrot.slane %v1095, 6
    %v1112 = vrot.slane %v1096, 6
    %v1113 = vrot.slane %v1097, 6
    %v1114 = vrot.slane %v1098, 6
    %v1115 = vrot.slane %v1099, 6
    %v1116 = vrot.slane %v1100, 6
    %v1117 = vrot.slane %v1101, 6
    %v1118 = vsel %vm312, %v1116, %v1117
    %v1119 = vsel %vm312, %v1115, %v1116
    %v1120 = vsel %vm312, %v1114, %v1115
    %v1121 = vsel %vm312, %v1113, %v1114
    %v1122 = vsel %vm312, %v1112, %v1113
    %v1123 = vsel %vm312, %v1111, %v1112
    %v1124 = vsel %vm312, %v1110, %v1111
    %v1125 = vsel %vm312, %v1109, %v1110
    %v1126 = vsel %vm312, %v1108, %v1109
    %v1127 = vsel %vm312, %v1107, %v1108
    %v1128 = vsel %vm312, %v1106, %v1107
    %v1129 = vsel %vm312, %v1105, %v1106
    %v1130 = vsel %vm312, %v1104, %v1105
    %v1131 = vsel %vm312, %v1103, %v1104
    %v1132 = vsel %vm312, %v1102, %v1103
    %v1133 = vsel %vm312, %v1117, %v1102
    %v1134 = vsel %vm361, %v1133, 0.0
    %v1135 = vsel %vm362, %v1132, 0.0
    %v1136 = vsel %vm363, %v1131, 0.0
    %v1137 = vsel %vm364, %v1130, 0.0
    %v1138 = vsel %vm365, %v1129, 0.0
    %v1139 = vsel %vm366, %v1128, 0.0
    %v1140 = vsel %vm367, %v1127, 0.0
    %v1141 = vsel %vm368, %v1126, 0.0
    %v1142 = vsel %vm361, %v1125, 0.0
    %v1143 = vsel %vm362, %v1124, 0.0
    %v1144 = vsel %vm363, %v1123, 0.0
    %v1145 = vsel %vm364, %v1122, 0.0
    %v1146 = vsel %vm365, %v1121, 0.0
    %v1147 = vsel %vm366, %v1120, 0.0
    %v1148 = vsel %vm367, %v1119, 0.0
    %v1149 = vsel %vm368, %v1118, 0.0
    %v1150 = vrot.slane %v1086, 7
    %v1151 = vrot.slane %v1087, 7
    %v1152 = vrot.slane %v1088, 7
    %v1153 = vrot.slane %v1089, 7
    %v1154 = vrot.slane %v1090, 7
    %v1155 = vrot.slane %v1091, 7
    %v1156 = vrot.slane %v1092, 7
    %v1157 = vrot.slane %v1093, 7
    %v1158 = vrot.slane %v1094, 7
    %v1159 = vrot.slane %v1095, 7
    %v1160 = vrot.slane %v1096, 7
    %v1161 = vrot.slane %v1097, 7
    %v1162 = vrot.slane %v1098, 7
    %v1163 = vrot.slane %v1099, 7
    %v1164 = vrot.slane %v1100, 7
    %v1165 = vrot.slane %v1101, 7
    %v1166 = vsel %vm401, %v1164, %v1165
    %v1167 = vsel %vm401, %v1163, %v1164
    %v1168 = vsel %vm401, %v1162, %v1163
    %v1169 = vsel %vm401, %v1161, %v1162
    %v1170 = vsel %vm401, %v1160, %v1161
    %v1171 = vsel %vm401, %v1159, %v1160
    %v1172 = vsel %vm401, %v1158, %v1159
    %v1173 = vsel %vm401, %v1157, %v1158
    %v1174 = vsel %vm401, %v1156, %v1157
    %v1175 = vsel %vm401, %v1155, %v1156
    %v1176 = vsel %vm401, %v1154, %v1155
    %v1177 = vsel %vm401, %v1153, %v1154
    %v1178 = vsel %vm401, %v1152, %v1153
    %v1179 = vsel %vm401, %v1151, %v1152
    %v1180 = vsel %vm401, %v1150, %v1151
    %v1181 = vsel %vm401, %v1165, %v1150
    %v1182 = vsel %vm450, %v1181, 0.0
    %v1183 = vsel %vm451, %v1180, 0.0
    %v1184 = vsel %vm452, %v1179, 0.0
    %v1185 = vsel %vm453, %v1178, 0.0
    %v1186 = vsel %vm454, %v1177, 0.0
    %v1187 = vsel %vm455, %v1176, 0.0
    %v1188 = vsel %vm456, %v1175, 0.0
    %v1189 = vsel %vm457, %v1174, 0.0
    %v1190 = vsel %vm450, %v1173, 0.0
    %v1191 = vsel %vm451, %v1172, 0.0
    %v1192 = vsel %vm452, %v1171, 0.0
    %v1193 = vsel %vm453, %v1170, 0.0
    %v1194 = vsel %vm454, %v1169, 0.0
    %v1195 = vsel %vm455, %v1168, 0.0
    %v1196 = vsel %vm456, %v1167, 0.0
    %v1197 = vsel %vm457, %v1166, 0.0
    %v1198 = vpack.c.bf16 %v1135, %v1134
    %v1199 = vpack.c.bf16 %v1183, %v1182
    %v1200 = vpack.c.bf16 %v1087, %v1086
    %v1201 = vpack.c.bf16 %v1137, %v1136
    %v1202 = vpack.c.bf16 %v1185, %v1184
    %v1203 = vpack.c.bf16 %v1089, %v1088
    %v1204 = vpack.c.bf16 %v1139, %v1138
    %v1205 = vpack.c.bf16 %v1187, %v1186
    %v1206 = vpack.c.bf16 %v1091, %v1090
    %v1207 = vpack.c.bf16 %v1141, %v1140
    %v1208 = vpack.c.bf16 %v1189, %v1188
    %v1209 = vpack.c.bf16 %v1093, %v1092
    %v1210 = vpack.c.bf16 %v1143, %v1142
    %v1211 = vpack.c.bf16 %v1191, %v1190
    %v1212 = vpack.c.bf16 %v1095, %v1094
    %v1213 = vpack.c.bf16 %v1145, %v1144
    %v1214 = vpack.c.bf16 %v1193, %v1192
    %v1215 = vpack.c.bf16 %v1097, %v1096
    %v1216 = vpack.c.bf16 %v1147, %v1146
    %v1217 = vpack.c.bf16 %v1195, %v1194
    %v1218 = vpack.c.bf16 %v1099, %v1098
    %v1219 = vpack.c.bf16 %v1149, %v1148
    %v1220 = vpack.c.bf16 %v1197, %v1196
    %v1221 = vpack.c.bf16 %v1101, %v1100
    %v1222 = vld [vmem:[%s4] sm:$0xf]
    %v1223 = vld [vmem:[%s4 + $0x4] sm:$0xf]
    %v1224 = vld [vmem:[%s4 + $0x8] sm:$0xf]
    %v1225 = vld [vmem:[%s4 + $0xc] sm:$0xf]
    %v1226 = vld [vmem:[%s4 + $0x10] sm:$0xf]
    %v1227 = vld [vmem:[%s4 + $0x14] sm:$0xf]
    %v1228 = vld [vmem:[%s4 + $0x18] sm:$0xf]
    %v1229 = vld [vmem:[%s4 + $0x1c] sm:$0xf]
    %v1230 = vld [vmem:[%s4 + $0x20] sm:$0xf]
    %v1231 = vld [vmem:[%s4 + $0x24] sm:$0xf]
    %v1232 = vld [vmem:[%s4 + $0x28] sm:$0xf]
    %v1233 = vld [vmem:[%s4 + $0x2c] sm:$0xf]
    %v1234 = vld [vmem:[%s4 + $0x30] sm:$0xf]
    %v1235 = vld [vmem:[%s4 + $0x34] sm:$0xf]
    %v1236 = vld [vmem:[%s4 + $0x38] sm:$0xf]
    %v1237 = vld [vmem:[%s4 + $0x3c] sm:$0xf]
    %v1238 = vld [vmem:[%s4 + $0x40] sm:$0xf]
    %v1239 = vld [vmem:[%s4 + $0x44] sm:$0xf]
    %v1240 = vld [vmem:[%s4 + $0x48] sm:$0xf]
    %v1241 = vld [vmem:[%s4 + $0x4c] sm:$0xf]
    %v1242 = vld [vmem:[%s4 + $0x50] sm:$0xf]
    %v1243 = vld [vmem:[%s4 + $0x54] sm:$0xf]
    %v1244 = vld [vmem:[%s4 + $0x58] sm:$0xf]
    %v1245 = vld [vmem:[%s4 + $0x5c] sm:$0xf]
    %v1246 = vld [vmem:[%s4 + $0x60] sm:$0xf]
    %v1247 = vld [vmem:[%s4 + $0x64] sm:$0xf]
    %v1248 = vld [vmem:[%s4 + $0x68] sm:$0xf]
    %v1249 = vld [vmem:[%s4 + $0x6c] sm:$0xf]
    %v1250 = vld [vmem:[%s4 + $0x70] sm:$0xf]
    %v1251 = vld [vmem:[%s4 + $0x74] sm:$0xf]
    %v1252 = vld [vmem:[%s4 + $0x78] sm:$0xf]
    %v1253 = vld [vmem:[%s4 + $0x7c] sm:$0xf]
    %v1254 = vld [vmem:[%s4 + $0x80] sm:$0xf]
    %v1255 = vld [vmem:[%s4 + $0x84] sm:$0xf]
    %v1256 = vld [vmem:[%s4 + $0x88] sm:$0xf]
    %v1257 = vld [vmem:[%s4 + $0x8c] sm:$0xf]
    %v1258 = vld [vmem:[%s4 + $0x90] sm:$0xf]
    %v1259 = vld [vmem:[%s4 + $0x94] sm:$0xf]
    %v1260 = vld [vmem:[%s4 + $0x98] sm:$0xf]
    %v1261 = vld [vmem:[%s4 + $0x9c] sm:$0xf]
    %v1262 = vld [vmem:[%s4 + $0xa0] sm:$0xf]
    %v1263 = vld [vmem:[%s4 + $0xa4] sm:$0xf]
    %v1264 = vld [vmem:[%s4 + $0xa8] sm:$0xf]
    %v1265 = vld [vmem:[%s4 + $0xac] sm:$0xf]
    %v1266 = vld [vmem:[%s4 + $0xb0] sm:$0xf]
    %v1267 = vld [vmem:[%s4 + $0xb4] sm:$0xf]
    %v1268 = vld [vmem:[%s4 + $0xb8] sm:$0xf]
    %v1269 = vld [vmem:[%s4 + $0xbc] sm:$0xf]
    %v1270 = vld [vmem:[%s5] sm:$0x1]
    %v1272 = vperm.slane %v1270, 0
    %v1322 = vunpack.c.l.b16 %v1222
    %v1323 = vunpack.c.l.b16 %v1223
    %v1324 = vunpack.c.l.b16 %v1224
    %v1325 = vunpack.c.l.b16 %v1225
    %v1326 = vunpack.c.l.b16 %v1226
    %v1327 = vunpack.c.l.b16 %v1227
    %v1328 = vunpack.c.l.b16 %v1228
    %v1329 = vunpack.c.l.b16 %v1229
    %v1330 = vunpack.c.l.b16 %v1230
    %v1331 = vunpack.c.l.b16 %v1231
    %v1332 = vunpack.c.l.b16 %v1232
    %v1333 = vunpack.c.l.b16 %v1233
    %v1334 = vunpack.c.l.b16 %v1234
    %v1335 = vunpack.c.l.b16 %v1235
    %v1336 = vunpack.c.l.b16 %v1236
    %v1337 = vunpack.c.l.b16 %v1237
    %v1338 = vunpack.c.l.b16 %v1238
    %v1339 = vunpack.c.l.b16 %v1239
    %v1340 = vunpack.c.l.b16 %v1240
    %v1341 = vunpack.c.l.b16 %v1241
    %v1342 = vunpack.c.l.b16 %v1242
    %v1343 = vunpack.c.l.b16 %v1243
    %v1344 = vunpack.c.l.b16 %v1244
    %v1345 = vunpack.c.l.b16 %v1245
    %v1346 = vunpack.c.l.b16 %v1246
    %v1347 = vunpack.c.l.b16 %v1247
    %v1348 = vunpack.c.l.b16 %v1248
    %v1349 = vunpack.c.l.b16 %v1249
    %v1350 = vunpack.c.l.b16 %v1250
    %v1351 = vunpack.c.l.b16 %v1251
    %v1352 = vunpack.c.l.b16 %v1252
    %v1353 = vunpack.c.l.b16 %v1253
    %v1354 = vunpack.c.l.b16 %v1254
    %v1355 = vunpack.c.l.b16 %v1255
    %v1356 = vunpack.c.l.b16 %v1256
    %v1357 = vunpack.c.l.b16 %v1257
    %v1358 = vunpack.c.l.b16 %v1258
    %v1359 = vunpack.c.l.b16 %v1259
    %v1360 = vunpack.c.l.b16 %v1260
    %v1361 = vunpack.c.l.b16 %v1261
    %v1362 = vunpack.c.l.b16 %v1262
    %v1363 = vunpack.c.l.b16 %v1263
    %v1364 = vunpack.c.l.b16 %v1264
    %v1365 = vunpack.c.l.b16 %v1265
    %v1366 = vunpack.c.l.b16 %v1266
    %v1367 = vunpack.c.l.b16 %v1267
    %v1368 = vunpack.c.l.b16 %v1268
    %v1369 = vunpack.c.l.b16 %v1269
    %v1370 = vpack.c.b16 %v1323, %v1322
    %v1371 = vpack.c.b16 %v1325, %v1324
    %v1372 = vpack.c.b16 %v1327, %v1326
    %v1373 = vpack.c.b16 %v1329, %v1328
    %v1374 = vpack.c.b16 %v1331, %v1330
    %v1375 = vpack.c.b16 %v1333, %v1332
    %v1376 = vpack.c.b16 %v1335, %v1334
    %v1377 = vpack.c.b16 %v1337, %v1336
    %v1378 = vpack.c.b16 %v1339, %v1338
    %v1379 = vpack.c.b16 %v1341, %v1340
    %v1380 = vpack.c.b16 %v1343, %v1342
    %v1381 = vpack.c.b16 %v1345, %v1344
    %v1382 = vpack.c.b16 %v1347, %v1346
    %v1383 = vpack.c.b16 %v1349, %v1348
    %v1384 = vpack.c.b16 %v1351, %v1350
    %v1385 = vpack.c.b16 %v1353, %v1352
    %v1386 = vpack.c.b16 %v1355, %v1354
    %v1387 = vpack.c.b16 %v1357, %v1356
    %v1388 = vpack.c.b16 %v1359, %v1358
    %v1389 = vpack.c.b16 %v1361, %v1360
    %v1390 = vpack.c.b16 %v1363, %v1362
    %v1391 = vpack.c.b16 %v1365, %v1364
    %v1392 = vpack.c.b16 %v1367, %v1366
    %v1393 = vpack.c.b16 %v1369, %v1368
    %1418 = vmatpush.bf16.msra.mxu0 %v1377
    %1419 = vmatpush.bf16.msra.mxu0 %v1376
    %1420 = vmatpush.bf16.msra.mxu0 %v1375
    %1421 = vmatpush.bf16.msra.mxu0 %v1374
    %1422 = vmatpush.bf16.msra.mxu0 %v1373
    %1423 = vmatpush.bf16.msra.mxu0 %v1372
    %1424 = vmatpush.bf16.msra.mxu0 %v1371
    %1425 = vmatpush.bf16.msra.mxu0 %v1370
    %1426 = vmatmul.bf16.gmra.mxu0 %v1198
    %v1427 = vpop.f32.mrf.mxu0
    %v1428 = vadd.f32 %v1272, %v1427
    %v1429 = vpop.f32.mrf.mxu0
    %v1430 = vadd.f32 %v1272, %v1429
    %1431 = vmatmul.bf16.gmra.mxu0 %v1201
    %v1432 = vpop.f32.mrf.mxu0
    %v1433 = vadd.f32 %v1272, %v1432
    %v1434 = vpop.f32.mrf.mxu0
    %v1435 = vadd.f32 %v1272, %v1434
    %1436 = vmatmul.bf16.gmra.mxu0 %v1204
    %v1437 = vpop.f32.mrf.mxu0
    %v1438 = vadd.f32 %v1272, %v1437
    %v1439 = vpop.f32.mrf.mxu0
    %v1440 = vadd.f32 %v1272, %v1439
    %1441 = vmatmul.bf16.gmra.mxu0 %v1207
    %v1442 = vpop.f32.mrf.mxu0
    %v1443 = vadd.f32 %v1272, %v1442
    %v1444 = vpop.f32.mrf.mxu0
    %v1445 = vadd.f32 %v1272, %v1444
    %1446 = vmatmul.bf16.gmra.mxu0 %v1210
    %v1447 = vpop.f32.mrf.mxu0
    %v1448 = vadd.f32 %v1272, %v1447
    %v1449 = vpop.f32.mrf.mxu0
    %v1450 = vadd.f32 %v1272, %v1449
    %1451 = vmatmul.bf16.gmra.mxu0 %v1213
    %v1452 = vpop.f32.mrf.mxu0
    %v1453 = vadd.f32 %v1272, %v1452
    %v1454 = vpop.f32.mrf.mxu0
    %v1455 = vadd.f32 %v1272, %v1454
    %1456 = vmatmul.bf16.gmra.mxu0 %v1216
    %v1457 = vpop.f32.mrf.mxu0
    %v1458 = vadd.f32 %v1272, %v1457
    %v1459 = vpop.f32.mrf.mxu0
    %v1460 = vadd.f32 %v1272, %v1459
    %1461 = vmatmul.bf16.gmra.mxu0 %v1219
    %v1462 = vpop.f32.mrf.mxu0
    %v1463 = vadd.f32 %v1272, %v1462
    %v1464 = vpop.f32.mrf.mxu0
    %v1465 = vadd.f32 %v1272, %v1464
    %1466 = vdwg.mxu0
    %1467 = vmatpush.bf16.msra.mxu0 %v1385
    %1468 = vmatpush.bf16.msra.mxu0 %v1384
    %1469 = vmatpush.bf16.msra.mxu0 %v1383
    %1470 = vmatpush.bf16.msra.mxu0 %v1382
    %1471 = vmatpush.bf16.msra.mxu0 %v1381
    %1472 = vmatpush.bf16.msra.mxu0 %v1380
    %1473 = vmatpush.bf16.msra.mxu0 %v1379
    %1474 = vmatpush.bf16.msra.mxu0 %v1378
    %1475 = vmatmul.bf16.gmra.mxu0 %v1199
    %v1476 = vpop.f32.mrf.mxu0
    %v1477 = vadd.f32 %v1428, %v1476
    %v1478 = vpop.f32.mrf.mxu0
    %v1479 = vadd.f32 %v1430, %v1478
    %1480 = vmatmul.bf16.gmra.mxu0 %v1202
    %v1481 = vpop.f32.mrf.mxu0
    %v1482 = vadd.f32 %v1433, %v1481
    %v1483 = vpop.f32.mrf.mxu0
    %v1484 = vadd.f32 %v1435, %v1483
    %1485 = vmatmul.bf16.gmra.mxu0 %v1205
    %v1486 = vpop.f32.mrf.mxu0
    %v1487 = vadd.f32 %v1438, %v1486
    %v1488 = vpop.f32.mrf.mxu0
    %v1489 = vadd.f32 %v1440, %v1488
    %1490 = vmatmul.bf16.gmra.mxu0 %v1208
    %v1491 = vpop.f32.mrf.mxu0
    %v1492 = vadd.f32 %v1443, %v1491
    %v1493 = vpop.f32.mrf.mxu0
    %v1494 = vadd.f32 %v1445, %v1493
    %1495 = vmatmul.bf16.gmra.mxu0 %v1211
    %v1496 = vpop.f32.mrf.mxu0
    %v1497 = vadd.f32 %v1448, %v1496
    %v1498 = vpop.f32.mrf.mxu0
    %v1499 = vadd.f32 %v1450, %v1498
    %1500 = vmatmul.bf16.gmra.mxu0 %v1214
    %v1501 = vpop.f32.mrf.mxu0
    %v1502 = vadd.f32 %v1453, %v1501
    %v1503 = vpop.f32.mrf.mxu0
    %v1504 = vadd.f32 %v1455, %v1503
    %1505 = vmatmul.bf16.gmra.mxu0 %v1217
    %v1506 = vpop.f32.mrf.mxu0
    %v1507 = vadd.f32 %v1458, %v1506
    %v1508 = vpop.f32.mrf.mxu0
    %v1509 = vadd.f32 %v1460, %v1508
    %1510 = vmatmul.bf16.gmra.mxu0 %v1220
    %v1511 = vpop.f32.mrf.mxu0
    %v1512 = vadd.f32 %v1463, %v1511
    %v1513 = vpop.f32.mrf.mxu0
    %v1514 = vadd.f32 %v1465, %v1513
    %1515 = vdwg.mxu0
    %1516 = vmatpush.bf16.msra.mxu0 %v1393
    %1517 = vmatpush.bf16.msra.mxu0 %v1392
    %1518 = vmatpush.bf16.msra.mxu0 %v1391
    %1519 = vmatpush.bf16.msra.mxu0 %v1390
    %1520 = vmatpush.bf16.msra.mxu0 %v1389
    %1521 = vmatpush.bf16.msra.mxu0 %v1388
    %1522 = vmatpush.bf16.msra.mxu0 %v1387
    %1523 = vmatpush.bf16.msra.mxu0 %v1386
    %1524 = vmatmul.bf16.gmra.mxu0 %v1200
    %v1525 = vpop.f32.mrf.mxu0
    %v1526 = vadd.f32 %v1477, %v1525
    %v1527 = vpop.f32.mrf.mxu0
    %v1528 = vadd.f32 %v1479, %v1527
    %1529 = vmatmul.bf16.gmra.mxu0 %v1203
    %v1530 = vpop.f32.mrf.mxu0
    %v1531 = vadd.f32 %v1482, %v1530
    %v1532 = vpop.f32.mrf.mxu0
    %v1533 = vadd.f32 %v1484, %v1532
    %1534 = vmatmul.bf16.gmra.mxu0 %v1206
    %v1535 = vpop.f32.mrf.mxu0
    %v1536 = vadd.f32 %v1487, %v1535
    %v1537 = vpop.f32.mrf.mxu0
    %v1538 = vadd.f32 %v1489, %v1537
    %1539 = vmatmul.bf16.gmra.mxu0 %v1209
    %v1540 = vpop.f32.mrf.mxu0
    %v1541 = vadd.f32 %v1492, %v1540
    %v1542 = vpop.f32.mrf.mxu0
    %v1543 = vadd.f32 %v1494, %v1542
    %1544 = vmatmul.bf16.gmra.mxu0 %v1212
    %v1545 = vpop.f32.mrf.mxu0
    %v1546 = vadd.f32 %v1497, %v1545
    %v1547 = vpop.f32.mrf.mxu0
    %v1548 = vadd.f32 %v1499, %v1547
    %1549 = vmatmul.bf16.gmra.mxu0 %v1215
    %v1550 = vpop.f32.mrf.mxu0
    %v1551 = vadd.f32 %v1502, %v1550
    %v1552 = vpop.f32.mrf.mxu0
    %v1553 = vadd.f32 %v1504, %v1552
    %1554 = vmatmul.bf16.gmra.mxu0 %v1218
    %v1555 = vpop.f32.mrf.mxu0
    %v1556 = vadd.f32 %v1507, %v1555
    %v1557 = vpop.f32.mrf.mxu0
    %v1558 = vadd.f32 %v1509, %v1557
    %1559 = vmatmul.bf16.gmra.mxu0 %v1221
    %v1560 = vpop.f32.mrf.mxu0
    %v1561 = vadd.f32 %v1512, %v1560
    %v1562 = vpop.f32.mrf.mxu0
    %v1563 = vadd.f32 %v1514, %v1562
    %1564 = vdwg.mxu0
    %v1565 = vmax.f32 %v1526, 0.0
    %v1566 = vmax.f32 %v1528, 0.0
    %v1567 = vmax.f32 %v1531, 0.0
    %v1568 = vmax.f32 %v1533, 0.0
    %v1569 = vmax.f32 %v1536, 0.0
    %v1570 = vmax.f32 %v1538, 0.0
    %v1571 = vmax.f32 %v1541, 0.0
    %v1572 = vmax.f32 %v1543, 0.0
    %v1573 = vmax.f32 %v1546, 0.0
    %v1574 = vmax.f32 %v1548, 0.0
    %v1575 = vmax.f32 %v1551, 0.0
    %v1576 = vmax.f32 %v1553, 0.0
    %v1577 = vmax.f32 %v1556, 0.0
    %v1578 = vmax.f32 %v1558, 0.0
    %v1579 = vmax.f32 %v1561, 0.0
    %v1580 = vmax.f32 %v1563, 0.0
    %v1581 = vadd.f32 %v1565, %v1047
    %v1582 = vadd.f32 %v1566, %v1049
    %v1583 = vadd.f32 %v1567, %v1052
    %v1584 = vadd.f32 %v1568, %v1054
    %v1585 = vadd.f32 %v1569, %v1057
    %v1586 = vadd.f32 %v1570, %v1059
    %v1587 = vadd.f32 %v1571, %v1062
    %v1588 = vadd.f32 %v1572, %v1064
    %v1589 = vadd.f32 %v1573, %v1067
    %v1590 = vadd.f32 %v1574, %v1069
    %v1591 = vadd.f32 %v1575, %v1072
    %v1592 = vadd.f32 %v1576, %v1074
    %v1593 = vadd.f32 %v1577, %v1077
    %v1594 = vadd.f32 %v1578, %v1079
    %v1595 = vadd.f32 %v1579, %v1082
    %v1596 = vadd.f32 %v1580, %v1084
    %v1597 = vmax.f32 %v1581, 0.0
    %v1598 = vmax.f32 %v1582, 0.0
    %v1599 = vmax.f32 %v1583, 0.0
    %v1600 = vmax.f32 %v1584, 0.0
    %v1601 = vmax.f32 %v1585, 0.0
    %v1602 = vmax.f32 %v1586, 0.0
    %v1603 = vmax.f32 %v1587, 0.0
    %v1604 = vmax.f32 %v1588, 0.0
    %v1605 = vmax.f32 %v1589, 0.0
    %v1606 = vmax.f32 %v1590, 0.0
    %v1607 = vmax.f32 %v1591, 0.0
    %v1608 = vmax.f32 %v1592, 0.0
    %v1609 = vmax.f32 %v1593, 0.0
    %v1610 = vmax.f32 %v1594, 0.0
    %v1611 = vmax.f32 %v1595, 0.0
    %v1612 = vmax.f32 %v1596, 0.0
    %v1613 = vrot.slane %v1597, 4
    %v1614 = vrot.slane %v1598, 4
    %v1615 = vrot.slane %v1599, 4
    %v1616 = vrot.slane %v1600, 4
    %v1617 = vrot.slane %v1601, 4
    %v1618 = vrot.slane %v1602, 4
    %v1619 = vrot.slane %v1603, 4
    %v1620 = vrot.slane %v1604, 4
    %v1621 = vrot.slane %v1605, 4
    %v1622 = vrot.slane %v1606, 4
    %v1623 = vrot.slane %v1607, 4
    %v1624 = vrot.slane %v1608, 4
    %v1625 = vrot.slane %v1609, 4
    %v1626 = vrot.slane %v1610, 4
    %v1627 = vrot.slane %v1611, 4
    %v1628 = vrot.slane %v1612, 4
    %vm1629 = vcmp.lt.s32.totalorder %v224, 4
    %v1630 = vsel %vm1629, %v1627, %v1628
    %v1631 = vsel %vm1629, %v1626, %v1627
    %v1632 = vsel %vm1629, %v1625, %v1626
    %v1633 = vsel %vm1629, %v1624, %v1625
    %v1634 = vsel %vm1629, %v1623, %v1624
    %v1635 = vsel %vm1629, %v1622, %v1623
    %v1636 = vsel %vm1629, %v1621, %v1622
    %v1637 = vsel %vm1629, %v1620, %v1621
    %v1638 = vsel %vm1629, %v1619, %v1620
    %v1639 = vsel %vm1629, %v1618, %v1619
    %v1640 = vsel %vm1629, %v1617, %v1618
    %v1641 = vsel %vm1629, %v1616, %v1617
    %v1642 = vsel %vm1629, %v1615, %v1616
    %v1643 = vsel %vm1629, %v1614, %v1615
    %v1644 = vsel %vm1629, %v1613, %v1614
    %v1645 = vsel %vm1629, %v1628, %v1613
    %v1646 = vsel %vm248, 1, 0
    %v1647 = vsel %vm249, 1, 0
    %v1648 = vsel %vm250, 1, 0
    %v1649 = vsel %vm251, 1, 0
    %v1650 = vsel %vm252, 1, 0
    %v1651 = vsel %vm253, 1, 0
    %v1652 = vsel %vm254, 1, 0
    %v1653 = vsel %vm255, 1, 0
    %1654 = vset.pattern.permute.xlu0 0
    %1655 = vperm.xlu0 %1654, %v1646
    %v1656 = vpop.permute.xlu0 %1655
    %1657 = vset.pattern.permute.xlu0 0
    %1658 = vperm.xlu0 %1657, %v1647
    %v1659 = vpop.permute.xlu0 %1658
    %1660 = vset.pattern.permute.xlu0 0
    %1661 = vperm.xlu0 %1660, %v1648
    %v1662 = vpop.permute.xlu0 %1661
    %1663 = vset.pattern.permute.xlu0 0
    %1664 = vperm.xlu0 %1663, %v1649
    %v1665 = vpop.permute.xlu0 %1664
    %1666 = vset.pattern.permute.xlu0 0
    %1667 = vperm.xlu0 %1666, %v1650
    %v1668 = vpop.permute.xlu0 %1667
    %1669 = vset.pattern.permute.xlu0 0
    %1670 = vperm.xlu0 %1669, %v1651
    %v1671 = vpop.permute.xlu0 %1670
    %1672 = vset.pattern.permute.xlu0 0
    %1673 = vperm.xlu0 %1672, %v1652
    %v1674 = vpop.permute.xlu0 %1673
    %1675 = vset.pattern.permute.xlu0 0
    %1676 = vperm.xlu0 %1675, %v1653
    %v1677 = vpop.permute.xlu0 %1676
    %vm1678 = vcmp.eq.s32.totalorder %v1656, 1
    %vm1679 = vcmp.eq.s32.totalorder %v1659, 1
    %vm1680 = vcmp.eq.s32.totalorder %v1662, 1
    %vm1681 = vcmp.eq.s32.totalorder %v1665, 1
    %vm1682 = vcmp.eq.s32.totalorder %v1668, 1
    %vm1683 = vcmp.eq.s32.totalorder %v1671, 1
    %vm1684 = vcmp.eq.s32.totalorder %v1674, 1
    %vm1685 = vcmp.eq.s32.totalorder %v1677, 1
    %v1686 = vsel %vm1678, %v1645, 0.0
    %v1687 = vsel %vm1679, %v1644, 0.0
    %v1688 = vsel %vm1680, %v1643, 0.0
    %v1689 = vsel %vm1681, %v1642, 0.0
    %v1690 = vsel %vm1682, %v1641, 0.0
    %v1691 = vsel %vm1683, %v1640, 0.0
    %v1692 = vsel %vm1684, %v1639, 0.0
    %v1693 = vsel %vm1685, %v1638, 0.0
    %v1694 = vsel %vm1678, %v1637, 0.0
    %v1695 = vsel %vm1679, %v1636, 0.0
    %v1696 = vsel %vm1680, %v1635, 0.0
    %v1697 = vsel %vm1681, %v1634, 0.0
    %v1698 = vsel %vm1682, %v1633, 0.0
    %v1699 = vsel %vm1683, %v1632, 0.0
    %v1700 = vsel %vm1684, %v1631, 0.0
    %v1701 = vsel %vm1685, %v1630, 0.0
    %v1702 = vrot.slane %v1597, 6
    %v1703 = vrot.slane %v1598, 6
    %v1704 = vrot.slane %v1599, 6
    %v1705 = vrot.slane %v1600, 6
    %v1706 = vrot.slane %v1601, 6
    %v1707 = vrot.slane %v1602, 6
    %v1708 = vrot.slane %v1603, 6
    %v1709 = vrot.slane %v1604, 6
    %v1710 = vrot.slane %v1605, 6
    %v1711 = vrot.slane %v1606, 6
    %v1712 = vrot.slane %v1607, 6
    %v1713 = vrot.slane %v1608, 6
    %v1714 = vrot.slane %v1609, 6
    %v1715 = vrot.slane %v1610, 6
    %v1716 = vrot.slane %v1611, 6
    %v1717 = vrot.slane %v1612, 6
    %v1718 = vsel %vm312, %v1716, %v1717
    %v1719 = vsel %vm312, %v1715, %v1716
    %v1720 = vsel %vm312, %v1714, %v1715
    %v1721 = vsel %vm312, %v1713, %v1714
    %v1722 = vsel %vm312, %v1712, %v1713
    %v1723 = vsel %vm312, %v1711, %v1712
    %v1724 = vsel %vm312, %v1710, %v1711
    %v1725 = vsel %vm312, %v1709, %v1710
    %v1726 = vsel %vm312, %v1708, %v1709
    %v1727 = vsel %vm312, %v1707, %v1708
    %v1728 = vsel %vm312, %v1706, %v1707
    %v1729 = vsel %vm312, %v1705, %v1706
    %v1730 = vsel %vm312, %v1704, %v1705
    %v1731 = vsel %vm312, %v1703, %v1704
    %v1732 = vsel %vm312, %v1702, %v1703
    %v1733 = vsel %vm312, %v1717, %v1702
    %v1734 = vsel %vm361, %v1733, 0.0
    %v1735 = vsel %vm362, %v1732, 0.0
    %v1736 = vsel %vm363, %v1731, 0.0
    %v1737 = vsel %vm364, %v1730, 0.0
    %v1738 = vsel %vm365, %v1729, 0.0
    %v1739 = vsel %vm366, %v1728, 0.0
    %v1740 = vsel %vm367, %v1727, 0.0
    %v1741 = vsel %vm368, %v1726, 0.0
    %v1742 = vsel %vm361, %v1725, 0.0
    %v1743 = vsel %vm362, %v1724, 0.0
    %v1744 = vsel %vm363, %v1723, 0.0
    %v1745 = vsel %vm364, %v1722, 0.0
    %v1746 = vsel %vm365, %v1721, 0.0
    %v1747 = vsel %vm366, %v1720, 0.0
    %v1748 = vsel %vm367, %v1719, 0.0
    %v1749 = vsel %vm368, %v1718, 0.0
    %v1750 = vpack.c.bf16 %v1687, %v1686
    %v1751 = vpack.c.bf16 %v1735, %v1734
    %v1752 = vpack.c.bf16 %v1598, %v1597
    %v1753 = vpack.c.bf16 %v1689, %v1688
    %v1754 = vpack.c.bf16 %v1737, %v1736
    %v1755 = vpack.c.bf16 %v1600, %v1599
    %v1756 = vpack.c.bf16 %v1691, %v1690
    %v1757 = vpack.c.bf16 %v1739, %v1738
    %v1758 = vpack.c.bf16 %v1602, %v1601
    %v1759 = vpack.c.bf16 %v1693, %v1692
    %v1760 = vpack.c.bf16 %v1741, %v1740
    %v1761 = vpack.c.bf16 %v1604, %v1603
    %v1762 = vpack.c.bf16 %v1695, %v1694
    %v1763 = vpack.c.bf16 %v1743, %v1742
    %v1764 = vpack.c.bf16 %v1606, %v1605
    %v1765 = vpack.c.bf16 %v1697, %v1696
    %v1766 = vpack.c.bf16 %v1745, %v1744
    %v1767 = vpack.c.bf16 %v1608, %v1607
    %v1768 = vpack.c.bf16 %v1699, %v1698
    %v1769 = vpack.c.bf16 %v1747, %v1746
    %v1770 = vpack.c.bf16 %v1610, %v1609
    %v1771 = vpack.c.bf16 %v1701, %v1700
    %v1772 = vpack.c.bf16 %v1749, %v1748
    %v1773 = vpack.c.bf16 %v1612, %v1611
    %v1774 = vld [vmem:[%s6] sm:$0xf]
    %v1775 = vld [vmem:[%s6 + $0x4] sm:$0xf]
    %v1776 = vld [vmem:[%s6 + $0x8] sm:$0xf]
    %v1777 = vld [vmem:[%s6 + $0xc] sm:$0xf]
    %v1778 = vld [vmem:[%s6 + $0x10] sm:$0xf]
    %v1779 = vld [vmem:[%s6 + $0x14] sm:$0xf]
    %v1780 = vld [vmem:[%s6 + $0x18] sm:$0xf]
    %v1781 = vld [vmem:[%s6 + $0x1c] sm:$0xf]
    %v1782 = vld [vmem:[%s6 + $0x20] sm:$0xf]
    %v1783 = vld [vmem:[%s6 + $0x24] sm:$0xf]
    %v1784 = vld [vmem:[%s6 + $0x28] sm:$0xf]
    %v1785 = vld [vmem:[%s6 + $0x2c] sm:$0xf]
    %v1786 = vld [vmem:[%s6 + $0x30] sm:$0xf]
    %v1787 = vld [vmem:[%s6 + $0x34] sm:$0xf]
    %v1788 = vld [vmem:[%s6 + $0x38] sm:$0xf]
    %v1789 = vld [vmem:[%s6 + $0x3c] sm:$0xf]
    %v1790 = vld [vmem:[%s6 + $0x40] sm:$0xf]
    %v1791 = vld [vmem:[%s6 + $0x44] sm:$0xf]
    %v1792 = vld [vmem:[%s6 + $0x48] sm:$0xf]
    %v1793 = vld [vmem:[%s6 + $0x4c] sm:$0xf]
    %v1794 = vld [vmem:[%s6 + $0x50] sm:$0xf]
    %v1795 = vld [vmem:[%s6 + $0x54] sm:$0xf]
    %v1796 = vld [vmem:[%s6 + $0x58] sm:$0xf]
    %v1797 = vld [vmem:[%s6 + $0x5c] sm:$0xf]
    %v1798 = vld [vmem:[%s6 + $0x60] sm:$0xf]
    %v1799 = vld [vmem:[%s6 + $0x64] sm:$0xf]
    %v1800 = vld [vmem:[%s6 + $0x68] sm:$0xf]
    %v1801 = vld [vmem:[%s6 + $0x6c] sm:$0xf]
    %v1802 = vld [vmem:[%s6 + $0x70] sm:$0xf]
    %v1803 = vld [vmem:[%s6 + $0x74] sm:$0xf]
    %v1804 = vld [vmem:[%s6 + $0x78] sm:$0xf]
    %v1805 = vld [vmem:[%s6 + $0x7c] sm:$0xf]
    %v1806 = vld [vmem:[%s6 + $0x80] sm:$0xf]
    %v1807 = vld [vmem:[%s6 + $0x84] sm:$0xf]
    %v1808 = vld [vmem:[%s6 + $0x88] sm:$0xf]
    %v1809 = vld [vmem:[%s6 + $0x8c] sm:$0xf]
    %v1810 = vld [vmem:[%s6 + $0x90] sm:$0xf]
    %v1811 = vld [vmem:[%s6 + $0x94] sm:$0xf]
    %v1812 = vld [vmem:[%s6 + $0x98] sm:$0xf]
    %v1813 = vld [vmem:[%s6 + $0x9c] sm:$0xf]
    %v1814 = vld [vmem:[%s6 + $0xa0] sm:$0xf]
    %v1815 = vld [vmem:[%s6 + $0xa4] sm:$0xf]
    %v1816 = vld [vmem:[%s6 + $0xa8] sm:$0xf]
    %v1817 = vld [vmem:[%s6 + $0xac] sm:$0xf]
    %v1818 = vld [vmem:[%s6 + $0xb0] sm:$0xf]
    %v1819 = vld [vmem:[%s6 + $0xb4] sm:$0xf]
    %v1820 = vld [vmem:[%s6 + $0xb8] sm:$0xf]
    %v1821 = vld [vmem:[%s6 + $0xbc] sm:$0xf]
    %v1822 = vld [vmem:[%s7] sm:$0x1]
    %v1824 = vperm.slane %v1822, 0
    %v1874 = vunpack.c.l.b16 %v1774
    %v1875 = vunpack.c.l.b16 %v1775
    %v1876 = vunpack.c.l.b16 %v1776
    %v1877 = vunpack.c.l.b16 %v1777
    %v1878 = vunpack.c.l.b16 %v1778
    %v1879 = vunpack.c.l.b16 %v1779
    %v1880 = vunpack.c.l.b16 %v1780
    %v1881 = vunpack.c.l.b16 %v1781
    %v1882 = vunpack.c.l.b16 %v1782
    %v1883 = vunpack.c.l.b16 %v1783
    %v1884 = vunpack.c.l.b16 %v1784
    %v1885 = vunpack.c.l.b16 %v1785
    %v1886 = vunpack.c.l.b16 %v1786
    %v1887 = vunpack.c.l.b16 %v1787
    %v1888 = vunpack.c.l.b16 %v1788
    %v1889 = vunpack.c.l.b16 %v1789
    %v1890 = vunpack.c.l.b16 %v1790
    %v1891 = vunpack.c.l.b16 %v1791
    %v1892 = vunpack.c.l.b16 %v1792
    %v1893 = vunpack.c.l.b16 %v1793
    %v1894 = vunpack.c.l.b16 %v1794
    %v1895 = vunpack.c.l.b16 %v1795
    %v1896 = vunpack.c.l.b16 %v1796
    %v1897 = vunpack.c.l.b16 %v1797
    %v1898 = vunpack.c.l.b16 %v1798
    %v1899 = vunpack.c.l.b16 %v1799
    %v1900 = vunpack.c.l.b16 %v1800
    %v1901 = vunpack.c.l.b16 %v1801
    %v1902 = vunpack.c.l.b16 %v1802
    %v1903 = vunpack.c.l.b16 %v1803
    %v1904 = vunpack.c.l.b16 %v1804
    %v1905 = vunpack.c.l.b16 %v1805
    %v1906 = vunpack.c.l.b16 %v1806
    %v1907 = vunpack.c.l.b16 %v1807
    %v1908 = vunpack.c.l.b16 %v1808
    %v1909 = vunpack.c.l.b16 %v1809
    %v1910 = vunpack.c.l.b16 %v1810
    %v1911 = vunpack.c.l.b16 %v1811
    %v1912 = vunpack.c.l.b16 %v1812
    %v1913 = vunpack.c.l.b16 %v1813
    %v1914 = vunpack.c.l.b16 %v1814
    %v1915 = vunpack.c.l.b16 %v1815
    %v1916 = vunpack.c.l.b16 %v1816
    %v1917 = vunpack.c.l.b16 %v1817
    %v1918 = vunpack.c.l.b16 %v1818
    %v1919 = vunpack.c.l.b16 %v1819
    %v1920 = vunpack.c.l.b16 %v1820
    %v1921 = vunpack.c.l.b16 %v1821
    %v1922 = vpack.c.b16 %v1875, %v1874
    %v1923 = vpack.c.b16 %v1877, %v1876
    %v1924 = vpack.c.b16 %v1879, %v1878
    %v1925 = vpack.c.b16 %v1881, %v1880
    %v1926 = vpack.c.b16 %v1883, %v1882
    %v1927 = vpack.c.b16 %v1885, %v1884
    %v1928 = vpack.c.b16 %v1887, %v1886
    %v1929 = vpack.c.b16 %v1889, %v1888
    %v1930 = vpack.c.b16 %v1891, %v1890
    %v1931 = vpack.c.b16 %v1893, %v1892
    %v1932 = vpack.c.b16 %v1895, %v1894
    %v1933 = vpack.c.b16 %v1897, %v1896
    %v1934 = vpack.c.b16 %v1899, %v1898
    %v1935 = vpack.c.b16 %v1901, %v1900
    %v1936 = vpack.c.b16 %v1903, %v1902
    %v1937 = vpack.c.b16 %v1905, %v1904
    %v1938 = vpack.c.b16 %v1907, %v1906
    %v1939 = vpack.c.b16 %v1909, %v1908
    %v1940 = vpack.c.b16 %v1911, %v1910
    %v1941 = vpack.c.b16 %v1913, %v1912
    %v1942 = vpack.c.b16 %v1915, %v1914
    %v1943 = vpack.c.b16 %v1917, %v1916
    %v1944 = vpack.c.b16 %v1919, %v1918
    %v1945 = vpack.c.b16 %v1921, %v1920
    %1970 = vmatpush.bf16.msra.mxu0 %v1929
    %1971 = vmatpush.bf16.msra.mxu0 %v1928
    %1972 = vmatpush.bf16.msra.mxu0 %v1927
    %1973 = vmatpush.bf16.msra.mxu0 %v1926
    %1974 = vmatpush.bf16.msra.mxu0 %v1925
    %1975 = vmatpush.bf16.msra.mxu0 %v1924
    %1976 = vmatpush.bf16.msra.mxu0 %v1923
    %1977 = vmatpush.bf16.msra.mxu0 %v1922
    %1978 = vmatmul.bf16.gmra.mxu0 %v1750
    %v1979 = vpop.f32.mrf.mxu0
    %v1980 = vadd.f32 %v1824, %v1979
    %v1981 = vpop.f32.mrf.mxu0
    %v1982 = vadd.f32 %v1824, %v1981
    %1983 = vmatmul.bf16.gmra.mxu0 %v1753
    %v1984 = vpop.f32.mrf.mxu0
    %v1985 = vadd.f32 %v1824, %v1984
    %v1986 = vpop.f32.mrf.mxu0
    %v1987 = vadd.f32 %v1824, %v1986
    %1988 = vmatmul.bf16.gmra.mxu0 %v1756
    %v1989 = vpop.f32.mrf.mxu0
    %v1990 = vadd.f32 %v1824, %v1989
    %v1991 = vpop.f32.mrf.mxu0
    %v1992 = vadd.f32 %v1824, %v1991
    %1993 = vmatmul.bf16.gmra.mxu0 %v1759
    %v1994 = vpop.f32.mrf.mxu0
    %v1995 = vadd.f32 %v1824, %v1994
    %v1996 = vpop.f32.mrf.mxu0
    %v1997 = vadd.f32 %v1824, %v1996
    %1998 = vmatmul.bf16.gmra.mxu0 %v1762
    %v1999 = vpop.f32.mrf.mxu0
    %v2000 = vadd.f32 %v1824, %v1999
    %v2001 = vpop.f32.mrf.mxu0
    %v2002 = vadd.f32 %v1824, %v2001
    %2003 = vmatmul.bf16.gmra.mxu0 %v1765
    %v2004 = vpop.f32.mrf.mxu0
    %v2005 = vadd.f32 %v1824, %v2004
    %v2006 = vpop.f32.mrf.mxu0
    %v2007 = vadd.f32 %v1824, %v2006
    %2008 = vmatmul.bf16.gmra.mxu0 %v1768
    %v2009 = vpop.f32.mrf.mxu0
    %v2010 = vadd.f32 %v1824, %v2009
    %v2011 = vpop.f32.mrf.mxu0
    %v2012 = vadd.f32 %v1824, %v2011
    %2013 = vmatmul.bf16.gmra.mxu0 %v1771
    %v2014 = vpop.f32.mrf.mxu0
    %v2015 = vadd.f32 %v1824, %v2014
    %v2016 = vpop.f32.mrf.mxu0
    %v2017 = vadd.f32 %v1824, %v2016
    %2018 = vdwg.mxu0
    %2019 = vmatpush.bf16.msra.mxu0 %v1937
    %2020 = vmatpush.bf16.msra.mxu0 %v1936
    %2021 = vmatpush.bf16.msra.mxu0 %v1935
    %2022 = vmatpush.bf16.msra.mxu0 %v1934
    %2023 = vmatpush.bf16.msra.mxu0 %v1933
    %2024 = vmatpush.bf16.msra.mxu0 %v1932
    %2025 = vmatpush.bf16.msra.mxu0 %v1931
    %2026 = vmatpush.bf16.msra.mxu0 %v1930
    %2027 = vmatmul.bf16.gmra.mxu0 %v1751
    %v2028 = vpop.f32.mrf.mxu0
    %v2029 = vadd.f32 %v1980, %v2028
    %v2030 = vpop.f32.mrf.mxu0
    %v2031 = vadd.f32 %v1982, %v2030
    %2032 = vmatmul.bf16.gmra.mxu0 %v1754
    %v2033 = vpop.f32.mrf.mxu0
    %v2034 = vadd.f32 %v1985, %v2033
    %v2035 = vpop.f32.mrf.mxu0
    %v2036 = vadd.f32 %v1987, %v2035
    %2037 = vmatmul.bf16.gmra.mxu0 %v1757
    %v2038 = vpop.f32.mrf.mxu0
    %v2039 = vadd.f32 %v1990, %v2038
    %v2040 = vpop.f32.mrf.mxu0
    %v2041 = vadd.f32 %v1992, %v2040
    %2042 = vmatmul.bf16.gmra.mxu0 %v1760
    %v2043 = vpop.f32.mrf.mxu0
    %v2044 = vadd.f32 %v1995, %v2043
    %v2045 = vpop.f32.mrf.mxu0
    %v2046 = vadd.f32 %v1997, %v2045
    %2047 = vmatmul.bf16.gmra.mxu0 %v1763
    %v2048 = vpop.f32.mrf.mxu0
    %v2049 = vadd.f32 %v2000, %v2048
    %v2050 = vpop.f32.mrf.mxu0
    %v2051 = vadd.f32 %v2002, %v2050
    %2052 = vmatmul.bf16.gmra.mxu0 %v1766
    %v2053 = vpop.f32.mrf.mxu0
    %v2054 = vadd.f32 %v2005, %v2053
    %v2055 = vpop.f32.mrf.mxu0
    %v2056 = vadd.f32 %v2007, %v2055
    %2057 = vmatmul.bf16.gmra.mxu0 %v1769
    %v2058 = vpop.f32.mrf.mxu0
    %v2059 = vadd.f32 %v2010, %v2058
    %v2060 = vpop.f32.mrf.mxu0
    %v2061 = vadd.f32 %v2012, %v2060
    %2062 = vmatmul.bf16.gmra.mxu0 %v1772
    %v2063 = vpop.f32.mrf.mxu0
    %v2064 = vadd.f32 %v2015, %v2063
    %v2065 = vpop.f32.mrf.mxu0
    %v2066 = vadd.f32 %v2017, %v2065
    %2067 = vdwg.mxu0
    %2068 = vmatpush.bf16.msra.mxu0 %v1945
    %2069 = vmatpush.bf16.msra.mxu0 %v1944
    %2070 = vmatpush.bf16.msra.mxu0 %v1943
    %2071 = vmatpush.bf16.msra.mxu0 %v1942
    %2072 = vmatpush.bf16.msra.mxu0 %v1941
    %2073 = vmatpush.bf16.msra.mxu0 %v1940
    %2074 = vmatpush.bf16.msra.mxu0 %v1939
    %2075 = vmatpush.bf16.msra.mxu0 %v1938
    %2076 = vmatmul.bf16.gmra.mxu0 %v1752
    %v2077 = vpop.f32.mrf.mxu0
    %v2078 = vadd.f32 %v2029, %v2077
    %v2079 = vpop.f32.mrf.mxu0
    %v2080 = vadd.f32 %v2031, %v2079
    %2081 = vmatmul.bf16.gmra.mxu0 %v1755
    %v2082 = vpop.f32.mrf.mxu0
    %v2083 = vadd.f32 %v2034, %v2082
    %v2084 = vpop.f32.mrf.mxu0
    %v2085 = vadd.f32 %v2036, %v2084
    %2086 = vmatmul.bf16.gmra.mxu0 %v1758
    %v2087 = vpop.f32.mrf.mxu0
    %v2088 = vadd.f32 %v2039, %v2087
    %v2089 = vpop.f32.mrf.mxu0
    %v2090 = vadd.f32 %v2041, %v2089
    %2091 = vmatmul.bf16.gmra.mxu0 %v1761
    %v2092 = vpop.f32.mrf.mxu0
    %v2093 = vadd.f32 %v2044, %v2092
    %v2094 = vpop.f32.mrf.mxu0
    %v2095 = vadd.f32 %v2046, %v2094
    %2096 = vmatmul.bf16.gmra.mxu0 %v1764
    %v2097 = vpop.f32.mrf.mxu0
    %v2098 = vadd.f32 %v2049, %v2097
    %v2099 = vpop.f32.mrf.mxu0
    %v2100 = vadd.f32 %v2051, %v2099
    %2101 = vmatmul.bf16.gmra.mxu0 %v1767
    %v2102 = vpop.f32.mrf.mxu0
    %v2103 = vadd.f32 %v2054, %v2102
    %v2104 = vpop.f32.mrf.mxu0
    %v2105 = vadd.f32 %v2056, %v2104
    %2106 = vmatmul.bf16.gmra.mxu0 %v1770
    %v2107 = vpop.f32.mrf.mxu0
    %v2108 = vadd.f32 %v2059, %v2107
    %v2109 = vpop.f32.mrf.mxu0
    %v2110 = vadd.f32 %v2061, %v2109
    %2111 = vmatmul.bf16.gmra.mxu0 %v1773
    %v2112 = vpop.f32.mrf.mxu0
    %v2113 = vadd.f32 %v2064, %v2112
    %v2114 = vpop.f32.mrf.mxu0
    %v2115 = vadd.f32 %v2066, %v2114
    %2116 = vdwg.mxu0
    %v2117 = vmax.f32 %v2078, 0.0
    %v2118 = vmax.f32 %v2080, 0.0
    %v2119 = vmax.f32 %v2083, 0.0
    %v2120 = vmax.f32 %v2085, 0.0
    %v2121 = vmax.f32 %v2088, 0.0
    %v2122 = vmax.f32 %v2090, 0.0
    %v2123 = vmax.f32 %v2093, 0.0
    %v2124 = vmax.f32 %v2095, 0.0
    %v2125 = vmax.f32 %v2098, 0.0
    %v2126 = vmax.f32 %v2100, 0.0
    %v2127 = vmax.f32 %v2103, 0.0
    %v2128 = vmax.f32 %v2105, 0.0
    %v2129 = vmax.f32 %v2108, 0.0
    %v2130 = vmax.f32 %v2110, 0.0
    %v2131 = vmax.f32 %v2113, 0.0
    %v2132 = vmax.f32 %v2115, 0.0
    %v2133 = vrot.slane %v2117, 4
    %v2134 = vrot.slane %v2118, 4
    %v2135 = vrot.slane %v2119, 4
    %v2136 = vrot.slane %v2120, 4
    %v2137 = vrot.slane %v2121, 4
    %v2138 = vrot.slane %v2122, 4
    %v2139 = vrot.slane %v2123, 4
    %v2140 = vrot.slane %v2124, 4
    %v2141 = vrot.slane %v2125, 4
    %v2142 = vrot.slane %v2126, 4
    %v2143 = vrot.slane %v2127, 4
    %v2144 = vrot.slane %v2128, 4
    %v2145 = vrot.slane %v2129, 4
    %v2146 = vrot.slane %v2130, 4
    %v2147 = vrot.slane %v2131, 4
    %v2148 = vrot.slane %v2132, 4
    %v2149 = vsel %vm1629, %v2147, %v2148
    %v2150 = vsel %vm1629, %v2146, %v2147
    %v2151 = vsel %vm1629, %v2145, %v2146
    %v2152 = vsel %vm1629, %v2144, %v2145
    %v2153 = vsel %vm1629, %v2143, %v2144
    %v2154 = vsel %vm1629, %v2142, %v2143
    %v2155 = vsel %vm1629, %v2141, %v2142
    %v2156 = vsel %vm1629, %v2140, %v2141
    %v2157 = vsel %vm1629, %v2139, %v2140
    %v2158 = vsel %vm1629, %v2138, %v2139
    %v2159 = vsel %vm1629, %v2137, %v2138
    %v2160 = vsel %vm1629, %v2136, %v2137
    %v2161 = vsel %vm1629, %v2135, %v2136
    %v2162 = vsel %vm1629, %v2134, %v2135
    %v2163 = vsel %vm1629, %v2133, %v2134
    %v2164 = vsel %vm1629, %v2148, %v2133
    %v2165 = vsel %vm1678, %v2164, 0.0
    %v2166 = vsel %vm1679, %v2163, 0.0
    %v2167 = vsel %vm1680, %v2162, 0.0
    %v2168 = vsel %vm1681, %v2161, 0.0
    %v2169 = vsel %vm1682, %v2160, 0.0
    %v2170 = vsel %vm1683, %v2159, 0.0
    %v2171 = vsel %vm1684, %v2158, 0.0
    %v2172 = vsel %vm1685, %v2157, 0.0
    %v2173 = vsel %vm1678, %v2156, 0.0
    %v2174 = vsel %vm1679, %v2155, 0.0
    %v2175 = vsel %vm1680, %v2154, 0.0
    %v2176 = vsel %vm1681, %v2153, 0.0
    %v2177 = vsel %vm1682, %v2152, 0.0
    %v2178 = vsel %vm1683, %v2151, 0.0
    %v2179 = vsel %vm1684, %v2150, 0.0
    %v2180 = vsel %vm1685, %v2149, 0.0
    %v2181 = vrot.slane %v2117, 6
    %v2182 = vrot.slane %v2118, 6
    %v2183 = vrot.slane %v2119, 6
    %v2184 = vrot.slane %v2120, 6
    %v2185 = vrot.slane %v2121, 6
    %v2186 = vrot.slane %v2122, 6
    %v2187 = vrot.slane %v2123, 6
    %v2188 = vrot.slane %v2124, 6
    %v2189 = vrot.slane %v2125, 6
    %v2190 = vrot.slane %v2126, 6
    %v2191 = vrot.slane %v2127, 6
    %v2192 = vrot.slane %v2128, 6
    %v2193 = vrot.slane %v2129, 6
    %v2194 = vrot.slane %v2130, 6
    %v2195 = vrot.slane %v2131, 6
    %v2196 = vrot.slane %v2132, 6
    %v2197 = vsel %vm312, %v2195, %v2196
    %v2198 = vsel %vm312, %v2194, %v2195
    %v2199 = vsel %vm312, %v2193, %v2194
    %v2200 = vsel %vm312, %v2192, %v2193
    %v2201 = vsel %vm312, %v2191, %v2192
    %v2202 = vsel %vm312, %v2190, %v2191
    %v2203 = vsel %vm312, %v2189, %v2190
    %v2204 = vsel %vm312, %v2188, %v2189
    %v2205 = vsel %vm312, %v2187, %v2188
    %v2206 = vsel %vm312, %v2186, %v2187
    %v2207 = vsel %vm312, %v2185, %v2186
    %v2208 = vsel %vm312, %v2184, %v2185
    %v2209 = vsel %vm312, %v2183, %v2184
    %v2210 = vsel %vm312, %v2182, %v2183
    %v2211 = vsel %vm312, %v2181, %v2182
    %v2212 = vsel %vm312, %v2196, %v2181
    %v2213 = vsel %vm361, %v2212, 0.0
    %v2214 = vsel %vm362, %v2211, 0.0
    %v2215 = vsel %vm363, %v2210, 0.0
    %v2216 = vsel %vm364, %v2209, 0.0
    %v2217 = vsel %vm365, %v2208, 0.0
    %v2218 = vsel %vm366, %v2207, 0.0
    %v2219 = vsel %vm367, %v2206, 0.0
    %v2220 = vsel %vm368, %v2205, 0.0
    %v2221 = vsel %vm361, %v2204, 0.0
    %v2222 = vsel %vm362, %v2203, 0.0
    %v2223 = vsel %vm363, %v2202, 0.0
    %v2224 = vsel %vm364, %v2201, 0.0
    %v2225 = vsel %vm365, %v2200, 0.0
    %v2226 = vsel %vm366, %v2199, 0.0
    %v2227 = vsel %vm367, %v2198, 0.0
    %v2228 = vsel %vm368, %v2197, 0.0
    %v2229 = vpack.c.bf16 %v2166, %v2165
    %v2230 = vpack.c.bf16 %v2214, %v2213
    %v2231 = vpack.c.bf16 %v2118, %v2117
    %v2232 = vpack.c.bf16 %v2168, %v2167
    %v2233 = vpack.c.bf16 %v2216, %v2215
    %v2234 = vpack.c.bf16 %v2120, %v2119
    %v2235 = vpack.c.bf16 %v2170, %v2169
    %v2236 = vpack.c.bf16 %v2218, %v2217
    %v2237 = vpack.c.bf16 %v2122, %v2121
    %v2238 = vpack.c.bf16 %v2172, %v2171
    %v2239 = vpack.c.bf16 %v2220, %v2219
    %v2240 = vpack.c.bf16 %v2124, %v2123
    %v2241 = vpack.c.bf16 %v2174, %v2173
    %v2242 = vpack.c.bf16 %v2222, %v2221
    %v2243 = vpack.c.bf16 %v2126, %v2125
    %v2244 = vpack.c.bf16 %v2176, %v2175
    %v2245 = vpack.c.bf16 %v2224, %v2223
    %v2246 = vpack.c.bf16 %v2128, %v2127
    %v2247 = vpack.c.bf16 %v2178, %v2177
    %v2248 = vpack.c.bf16 %v2226, %v2225
    %v2249 = vpack.c.bf16 %v2130, %v2129
    %v2250 = vpack.c.bf16 %v2180, %v2179
    %v2251 = vpack.c.bf16 %v2228, %v2227
    %v2252 = vpack.c.bf16 %v2132, %v2131
    %v2253 = vld [vmem:[#allocation2] sm:$0xf]
    %v2254 = vld [vmem:[#allocation2 + $0x4] sm:$0xf]
    %v2255 = vld [vmem:[#allocation2 + $0x8] sm:$0xf]
    %v2256 = vld [vmem:[#allocation2 + $0xc] sm:$0xf]
    %v2257 = vld [vmem:[#allocation2 + $0x10] sm:$0xf]
    %v2258 = vld [vmem:[#allocation2 + $0x14] sm:$0xf]
    %v2259 = vld [vmem:[#allocation2 + $0x18] sm:$0xf]
    %v2260 = vld [vmem:[#allocation2 + $0x1c] sm:$0xf]
    %v2261 = vld [vmem:[#allocation2 + $0x20] sm:$0xf]
    %v2262 = vld [vmem:[#allocation2 + $0x24] sm:$0xf]
    %v2263 = vld [vmem:[#allocation2 + $0x28] sm:$0xf]
    %v2264 = vld [vmem:[#allocation2 + $0x2c] sm:$0xf]
    %v2265 = vld [vmem:[#allocation2 + $0x30] sm:$0xf]
    %v2266 = vld [vmem:[#allocation2 + $0x34] sm:$0xf]
    %v2267 = vld [vmem:[#allocation2 + $0x38] sm:$0xf]
    %v2268 = vld [vmem:[#allocation2 + $0x3c] sm:$0xf]
    %v2269 = vld [vmem:[#allocation2 + $0x40] sm:$0xf]
    %v2270 = vld [vmem:[#allocation2 + $0x44] sm:$0xf]
    %v2271 = vld [vmem:[#allocation2 + $0x48] sm:$0xf]
    %v2272 = vld [vmem:[#allocation2 + $0x4c] sm:$0xf]
    %v2273 = vld [vmem:[#allocation2 + $0x50] sm:$0xf]
    %v2274 = vld [vmem:[#allocation2 + $0x54] sm:$0xf]
    %v2275 = vld [vmem:[#allocation2 + $0x58] sm:$0xf]
    %v2276 = vld [vmem:[#allocation2 + $0x5c] sm:$0xf]
    %v2277 = vld [vmem:[#allocation2 + $0x60] sm:$0xf]
    %v2278 = vld [vmem:[#allocation2 + $0x64] sm:$0xf]
    %v2279 = vld [vmem:[#allocation2 + $0x68] sm:$0xf]
    %v2280 = vld [vmem:[#allocation2 + $0x6c] sm:$0xf]
    %v2281 = vld [vmem:[#allocation2 + $0x70] sm:$0xf]
    %v2282 = vld [vmem:[#allocation2 + $0x74] sm:$0xf]
    %v2283 = vld [vmem:[#allocation2 + $0x78] sm:$0xf]
    %v2284 = vld [vmem:[#allocation2 + $0x7c] sm:$0xf]
    %v2285 = vld [vmem:[#allocation2 + $0x80] sm:$0xf]
    %v2286 = vld [vmem:[#allocation2 + $0x84] sm:$0xf]
    %v2287 = vld [vmem:[#allocation2 + $0x88] sm:$0xf]
    %v2288 = vld [vmem:[#allocation2 + $0x8c] sm:$0xf]
    %v2289 = vld [vmem:[#allocation2 + $0x90] sm:$0xf]
    %v2290 = vld [vmem:[#allocation2 + $0x94] sm:$0xf]
    %v2291 = vld [vmem:[#allocation2 + $0x98] sm:$0xf]
    %v2292 = vld [vmem:[#allocation2 + $0x9c] sm:$0xf]
    %v2293 = vld [vmem:[#allocation2 + $0xa0] sm:$0xf]
    %v2294 = vld [vmem:[#allocation2 + $0xa4] sm:$0xf]
    %v2295 = vld [vmem:[#allocation2 + $0xa8] sm:$0xf]
    %v2296 = vld [vmem:[#allocation2 + $0xac] sm:$0xf]
    %v2297 = vld [vmem:[#allocation2 + $0xb0] sm:$0xf]
    %v2298 = vld [vmem:[#allocation2 + $0xb4] sm:$0xf]
    %v2299 = vld [vmem:[#allocation2 + $0xb8] sm:$0xf]
    %v2300 = vld [vmem:[#allocation2 + $0xbc] sm:$0xf]
    %v2301 = vld [vmem:[%s9] sm:$0x1]
    %v2303 = vperm.slane %v2301, 0
    %v2353 = vunpack.c.l.b16 %v2253
    %v2354 = vunpack.c.l.b16 %v2254
    %v2355 = vunpack.c.l.b16 %v2255
    %v2356 = vunpack.c.l.b16 %v2256
    %v2357 = vunpack.c.l.b16 %v2257
    %v2358 = vunpack.c.l.b16 %v2258
    %v2359 = vunpack.c.l.b16 %v2259
    %v2360 = vunpack.c.l.b16 %v2260
    %v2361 = vunpack.c.l.b16 %v2261
    %v2362 = vunpack.c.l.b16 %v2262
    %v2363 = vunpack.c.l.b16 %v2263
    %v2364 = vunpack.c.l.b16 %v2264
    %v2365 = vunpack.c.l.b16 %v2265
    %v2366 = vunpack.c.l.b16 %v2266
    %v2367 = vunpack.c.l.b16 %v2267
    %v2368 = vunpack.c.l.b16 %v2268
    %v2369 = vunpack.c.l.b16 %v2269
    %v2370 = vunpack.c.l.b16 %v2270
    %v2371 = vunpack.c.l.b16 %v2271
    %v2372 = vunpack.c.l.b16 %v2272
    %v2373 = vunpack.c.l.b16 %v2273
    %v2374 = vunpack.c.l.b16 %v2274
    %v2375 = vunpack.c.l.b16 %v2275
    %v2376 = vunpack.c.l.b16 %v2276
    %v2377 = vunpack.c.l.b16 %v2277
    %v2378 = vunpack.c.l.b16 %v2278
    %v2379 = vunpack.c.l.b16 %v2279
    %v2380 = vunpack.c.l.b16 %v2280
    %v2381 = vunpack.c.l.b16 %v2281
    %v2382 = vunpack.c.l.b16 %v2282
    %v2383 = vunpack.c.l.b16 %v2283
    %v2384 = vunpack.c.l.b16 %v2284
    %v2385 = vunpack.c.l.b16 %v2285
    %v2386 = vunpack.c.l.b16 %v2286
    %v2387 = vunpack.c.l.b16 %v2287
    %v2388 = vunpack.c.l.b16 %v2288
    %v2389 = vunpack.c.l.b16 %v2289
    %v2390 = vunpack.c.l.b16 %v2290
    %v2391 = vunpack.c.l.b16 %v2291
    %v2392 = vunpack.c.l.b16 %v2292
    %v2393 = vunpack.c.l.b16 %v2293
    %v2394 = vunpack.c.l.b16 %v2294
    %v2395 = vunpack.c.l.b16 %v2295
    %v2396 = vunpack.c.l.b16 %v2296
    %v2397 = vunpack.c.l.b16 %v2297
    %v2398 = vunpack.c.l.b16 %v2298
    %v2399 = vunpack.c.l.b16 %v2299
    %v2400 = vunpack.c.l.b16 %v2300
    %v2401 = vpack.c.b16 %v2354, %v2353
    %v2402 = vpack.c.b16 %v2356, %v2355
    %v2403 = vpack.c.b16 %v2358, %v2357
    %v2404 = vpack.c.b16 %v2360, %v2359
    %v2405 = vpack.c.b16 %v2362, %v2361
    %v2406 = vpack.c.b16 %v2364, %v2363
    %v2407 = vpack.c.b16 %v2366, %v2365
    %v2408 = vpack.c.b16 %v2368, %v2367
    %v2409 = vpack.c.b16 %v2370, %v2369
    %v2410 = vpack.c.b16 %v2372, %v2371
    %v2411 = vpack.c.b16 %v2374, %v2373
    %v2412 = vpack.c.b16 %v2376, %v2375
    %v2413 = vpack.c.b16 %v2378, %v2377
    %v2414 = vpack.c.b16 %v2380, %v2379
    %v2415 = vpack.c.b16 %v2382, %v2381
    %v2416 = vpack.c.b16 %v2384, %v2383
    %v2417 = vpack.c.b16 %v2386, %v2385
    %v2418 = vpack.c.b16 %v2388, %v2387
    %v2419 = vpack.c.b16 %v2390, %v2389
    %v2420 = vpack.c.b16 %v2392, %v2391
    %v2421 = vpack.c.b16 %v2394, %v2393
    %v2422 = vpack.c.b16 %v2396, %v2395
    %v2423 = vpack.c.b16 %v2398, %v2397
    %v2424 = vpack.c.b16 %v2400, %v2399
    %2449 = vmatpush.bf16.msra.mxu0 %v2408
    %2450 = vmatpush.bf16.msra.mxu0 %v2407
    %2451 = vmatpush.bf16.msra.mxu0 %v2406
    %2452 = vmatpush.bf16.msra.mxu0 %v2405
    %2453 = vmatpush.bf16.msra.mxu0 %v2404
    %2454 = vmatpush.bf16.msra.mxu0 %v2403
    %2455 = vmatpush.bf16.msra.mxu0 %v2402
    %2456 = vmatpush.bf16.msra.mxu0 %v2401
    %2457 = vmatmul.bf16.gmra.mxu0 %v2229
    %v2458 = vpop.f32.mrf.mxu0
    %v2459 = vadd.f32 %v2303, %v2458
    %v2460 = vpop.f32.mrf.mxu0
    %v2461 = vadd.f32 %v2303, %v2460
    %2462 = vmatmul.bf16.gmra.mxu0 %v2232
    %v2463 = vpop.f32.mrf.mxu0
    %v2464 = vadd.f32 %v2303, %v2463
    %v2465 = vpop.f32.mrf.mxu0
    %v2466 = vadd.f32 %v2303, %v2465
    %2467 = vmatmul.bf16.gmra.mxu0 %v2235
    %v2468 = vpop.f32.mrf.mxu0
    %v2469 = vadd.f32 %v2303, %v2468
    %v2470 = vpop.f32.mrf.mxu0
    %v2471 = vadd.f32 %v2303, %v2470
    %2472 = vmatmul.bf16.gmra.mxu0 %v2238
    %v2473 = vpop.f32.mrf.mxu0
    %v2474 = vadd.f32 %v2303, %v2473
    %v2475 = vpop.f32.mrf.mxu0
    %v2476 = vadd.f32 %v2303, %v2475
    %2477 = vmatmul.bf16.gmra.mxu0 %v2241
    %v2478 = vpop.f32.mrf.mxu0
    %v2479 = vadd.f32 %v2303, %v2478
    %v2480 = vpop.f32.mrf.mxu0
    %v2481 = vadd.f32 %v2303, %v2480
    %2482 = vmatmul.bf16.gmra.mxu0 %v2244
    %v2483 = vpop.f32.mrf.mxu0
    %v2484 = vadd.f32 %v2303, %v2483
    %v2485 = vpop.f32.mrf.mxu0
    %v2486 = vadd.f32 %v2303, %v2485
    %2487 = vmatmul.bf16.gmra.mxu0 %v2247
    %v2488 = vpop.f32.mrf.mxu0
    %v2489 = vadd.f32 %v2303, %v2488
    %v2490 = vpop.f32.mrf.mxu0
    %v2491 = vadd.f32 %v2303, %v2490
    %2492 = vmatmul.bf16.gmra.mxu0 %v2250
    %v2493 = vpop.f32.mrf.mxu0
    %v2494 = vadd.f32 %v2303, %v2493
    %v2495 = vpop.f32.mrf.mxu0
    %v2496 = vadd.f32 %v2303, %v2495
    %2497 = vdwg.mxu0
    %2498 = vmatpush.bf16.msra.mxu0 %v2416
    %2499 = vmatpush.bf16.msra.mxu0 %v2415
    %2500 = vmatpush.bf16.msra.mxu0 %v2414
    %2501 = vmatpush.bf16.msra.mxu0 %v2413
    %2502 = vmatpush.bf16.msra.mxu0 %v2412
    %2503 = vmatpush.bf16.msra.mxu0 %v2411
    %2504 = vmatpush.bf16.msra.mxu0 %v2410
    %2505 = vmatpush.bf16.msra.mxu0 %v2409
    %2506 = vmatmul.bf16.gmra.mxu0 %v2230
    %v2507 = vpop.f32.mrf.mxu0
    %v2508 = vadd.f32 %v2459, %v2507
    %v2509 = vpop.f32.mrf.mxu0
    %v2510 = vadd.f32 %v2461, %v2509
    %2511 = vmatmul.bf16.gmra.mxu0 %v2233
    %v2512 = vpop.f32.mrf.mxu0
    %v2513 = vadd.f32 %v2464, %v2512
    %v2514 = vpop.f32.mrf.mxu0
    %v2515 = vadd.f32 %v2466, %v2514
    %2516 = vmatmul.bf16.gmra.mxu0 %v2236
    %v2517 = vpop.f32.mrf.mxu0
    %v2518 = vadd.f32 %v2469, %v2517
    %v2519 = vpop.f32.mrf.mxu0
    %v2520 = vadd.f32 %v2471, %v2519
    %2521 = vmatmul.bf16.gmra.mxu0 %v2239
    %v2522 = vpop.f32.mrf.mxu0
    %v2523 = vadd.f32 %v2474, %v2522
    %v2524 = vpop.f32.mrf.mxu0
    %v2525 = vadd.f32 %v2476, %v2524
    %2526 = vmatmul.bf16.gmra.mxu0 %v2242
    %v2527 = vpop.f32.mrf.mxu0
    %v2528 = vadd.f32 %v2479, %v2527
    %v2529 = vpop.f32.mrf.mxu0
    %v2530 = vadd.f32 %v2481, %v2529
    %2531 = vmatmul.bf16.gmra.mxu0 %v2245
    %v2532 = vpop.f32.mrf.mxu0
    %v2533 = vadd.f32 %v2484, %v2532
    %v2534 = vpop.f32.mrf.mxu0
    %v2535 = vadd.f32 %v2486, %v2534
    %2536 = vmatmul.bf16.gmra.mxu0 %v2248
    %v2537 = vpop.f32.mrf.mxu0
    %v2538 = vadd.f32 %v2489, %v2537
    %v2539 = vpop.f32.mrf.mxu0
    %v2540 = vadd.f32 %v2491, %v2539
    %2541 = vmatmul.bf16.gmra.mxu0 %v2251
    %v2542 = vpop.f32.mrf.mxu0
    %v2543 = vadd.f32 %v2494, %v2542
    %v2544 = vpop.f32.mrf.mxu0
    %v2545 = vadd.f32 %v2496, %v2544
    %2546 = vdwg.mxu0
    %2547 = vmatpush.bf16.msra.mxu0 %v2424
    %2548 = vmatpush.bf16.msra.mxu0 %v2423
    %2549 = vmatpush.bf16.msra.mxu0 %v2422
    %2550 = vmatpush.bf16.msra.mxu0 %v2421
    %2551 = vmatpush.bf16.msra.mxu0 %v2420
    %2552 = vmatpush.bf16.msra.mxu0 %v2419
    %2553 = vmatpush.bf16.msra.mxu0 %v2418
    %2554 = vmatpush.bf16.msra.mxu0 %v2417
    %2555 = vmatmul.bf16.gmra.mxu0 %v2231
    %v2556 = vpop.f32.mrf.mxu0
    %v2557 = vadd.f32 %v2508, %v2556
    %v2558 = vpop.f32.mrf.mxu0
    %v2559 = vadd.f32 %v2510, %v2558
    %2560 = vmatmul.bf16.gmra.mxu0 %v2234
    %v2561 = vpop.f32.mrf.mxu0
    %v2562 = vadd.f32 %v2513, %v2561
    %v2563 = vpop.f32.mrf.mxu0
    %v2564 = vadd.f32 %v2515, %v2563
    %2565 = vmatmul.bf16.gmra.mxu0 %v2237
    %v2566 = vpop.f32.mrf.mxu0
    %v2567 = vadd.f32 %v2518, %v2566
    %v2568 = vpop.f32.mrf.mxu0
    %v2569 = vadd.f32 %v2520, %v2568
    %2570 = vmatmul.bf16.gmra.mxu0 %v2240
    %v2571 = vpop.f32.mrf.mxu0
    %v2572 = vadd.f32 %v2523, %v2571
    %v2573 = vpop.f32.mrf.mxu0
    %v2574 = vadd.f32 %v2525, %v2573
    %2575 = vmatmul.bf16.gmra.mxu0 %v2243
    %v2576 = vpop.f32.mrf.mxu0
    %v2577 = vadd.f32 %v2528, %v2576
    %v2578 = vpop.f32.mrf.mxu0
    %v2579 = vadd.f32 %v2530, %v2578
    %2580 = vmatmul.bf16.gmra.mxu0 %v2246
    %v2581 = vpop.f32.mrf.mxu0
    %v2582 = vadd.f32 %v2533, %v2581
    %v2583 = vpop.f32.mrf.mxu0
    %v2584 = vadd.f32 %v2535, %v2583
    %2585 = vmatmul.bf16.gmra.mxu0 %v2249
    %v2586 = vpop.f32.mrf.mxu0
    %v2587 = vadd.f32 %v2538, %v2586
    %v2588 = vpop.f32.mrf.mxu0
    %v2589 = vadd.f32 %v2540, %v2588
    %2590 = vmatmul.bf16.gmra.mxu0 %v2252
    %v2591 = vpop.f32.mrf.mxu0
    %v2592 = vadd.f32 %v2543, %v2591
    %v2593 = vpop.f32.mrf.mxu0
    %v2594 = vadd.f32 %v2545, %v2593
    %2595 = vdwg.mxu0
    %v2596 = vmax.f32 %v2557, 0.0
    %v2597 = vmax.f32 %v2559, 0.0
    %v2598 = vmax.f32 %v2562, 0.0
    %v2599 = vmax.f32 %v2564, 0.0
    %v2600 = vmax.f32 %v2567, 0.0
    %v2601 = vmax.f32 %v2569, 0.0
    %v2602 = vmax.f32 %v2572, 0.0
    %v2603 = vmax.f32 %v2574, 0.0
    %v2604 = vmax.f32 %v2577, 0.0
    %v2605 = vmax.f32 %v2579, 0.0
    %v2606 = vmax.f32 %v2582, 0.0
    %v2607 = vmax.f32 %v2584, 0.0
    %v2608 = vmax.f32 %v2587, 0.0
    %v2609 = vmax.f32 %v2589, 0.0
    %v2610 = vmax.f32 %v2592, 0.0
    %v2611 = vmax.f32 %v2594, 0.0
    %v2612 = vadd.f32 %v2596, %v1597
    %v2613 = vadd.f32 %v2597, %v1598
    %v2614 = vadd.f32 %v2598, %v1599
    %v2615 = vadd.f32 %v2599, %v1600
    %v2616 = vadd.f32 %v2600, %v1601
    %v2617 = vadd.f32 %v2601, %v1602
    %v2618 = vadd.f32 %v2602, %v1603
    %v2619 = vadd.f32 %v2603, %v1604
    %v2620 = vadd.f32 %v2604, %v1605
    %v2621 = vadd.f32 %v2605, %v1606
    %v2622 = vadd.f32 %v2606, %v1607
    %v2623 = vadd.f32 %v2607, %v1608
    %v2624 = vadd.f32 %v2608, %v1609
    %v2625 = vadd.f32 %v2609, %v1610
    %v2626 = vadd.f32 %v2610, %v1611
    %v2627 = vadd.f32 %v2611, %v1612
    %v2628 = vmax.f32 %v2612, 0.0
    %v2629 = vmax.f32 %v2613, 0.0
    %v2630 = vmax.f32 %v2614, 0.0
    %v2631 = vmax.f32 %v2615, 0.0
    %v2632 = vmax.f32 %v2616, 0.0
    %v2633 = vmax.f32 %v2617, 0.0
    %v2634 = vmax.f32 %v2618, 0.0
    %v2635 = vmax.f32 %v2619, 0.0
    %v2636 = vmax.f32 %v2620, 0.0
    %v2637 = vmax.f32 %v2621, 0.0
    %v2638 = vmax.f32 %v2622, 0.0
    %v2639 = vmax.f32 %v2623, 0.0
    %v2640 = vmax.f32 %v2624, 0.0
    %v2641 = vmax.f32 %v2625, 0.0
    %v2642 = vmax.f32 %v2626, 0.0
    %v2643 = vmax.f32 %v2627, 0.0
    %v2644 = vsel %vm256, 1, 0
    %v2645 = vsel %vm257, 1, 0
    %v2646 = vsel %vm258, 1, 0
    %v2647 = vsel %vm259, 1, 0
    %v2648 = vsel %vm260, 1, 0
    %v2649 = vsel %vm261, 1, 0
    %v2650 = vsel %vm262, 1, 0
    %v2651 = vsel %vm263, 1, 0
    %2652 = vset.pattern.permute.xlu0 0
    %2653 = vperm.xlu0 %2652, %v2644
    %v2654 = vpop.permute.xlu0 %2653
    %2655 = vset.pattern.permute.xlu0 0
    %2656 = vperm.xlu0 %2655, %v2645
    %v2657 = vpop.permute.xlu0 %2656
    %2658 = vset.pattern.permute.xlu0 0
    %2659 = vperm.xlu0 %2658, %v2646
    %v2660 = vpop.permute.xlu0 %2659
    %2661 = vset.pattern.permute.xlu0 0
    %2662 = vperm.xlu0 %2661, %v2647
    %v2663 = vpop.permute.xlu0 %2662
    %2664 = vset.pattern.permute.xlu0 0
    %2665 = vperm.xlu0 %2664, %v2648
    %v2666 = vpop.permute.xlu0 %2665
    %2667 = vset.pattern.permute.xlu0 0
    %2668 = vperm.xlu0 %2667, %v2649
    %v2669 = vpop.permute.xlu0 %2668
    %2670 = vset.pattern.permute.xlu0 0
    %2671 = vperm.xlu0 %2670, %v2650
    %v2672 = vpop.permute.xlu0 %2671
    %2673 = vset.pattern.permute.xlu0 0
    %2674 = vperm.xlu0 %2673, %v2651
    %v2675 = vpop.permute.xlu0 %2674
    %vm2676 = vcmp.eq.s32.totalorder %v2654, 1
    %vm2677 = vcmp.eq.s32.totalorder %v2657, 1
    %vm2678 = vcmp.eq.s32.totalorder %v2660, 1
    %vm2679 = vcmp.eq.s32.totalorder %v2663, 1
    %vm2680 = vcmp.eq.s32.totalorder %v2666, 1
    %vm2681 = vcmp.eq.s32.totalorder %v2669, 1
    %vm2682 = vcmp.eq.s32.totalorder %v2672, 1
    %vm2683 = vcmp.eq.s32.totalorder %v2675, 1
    %v2684 = vsel %vm2676, %v2643, 0.0
    %v2685 = vsel %vm2677, %v2628, 0.0
    %v2686 = vsel %vm2678, %v2629, 0.0
    %v2687 = vsel %vm2679, %v2630, 0.0
    %v2688 = vsel %vm2680, %v2631, 0.0
    %v2689 = vsel %vm2681, %v2632, 0.0
    %v2690 = vsel %vm2682, %v2633, 0.0
    %v2691 = vsel %vm2683, %v2634, 0.0
    %v2692 = vsel %vm2676, %v2635, 0.0
    %v2693 = vsel %vm2677, %v2636, 0.0
    %v2694 = vsel %vm2678, %v2637, 0.0
    %v2695 = vsel %vm2679, %v2638, 0.0
    %v2696 = vsel %vm2680, %v2639, 0.0
    %v2697 = vsel %vm2681, %v2640, 0.0
    %v2698 = vsel %vm2682, %v2641, 0.0
    %v2699 = vsel %vm2683, %v2642, 0.0
    %v2700 = vrot.slane %v2628, 4
    %v2701 = vrot.slane %v2629, 4
    %v2702 = vrot.slane %v2630, 4
    %v2703 = vrot.slane %v2631, 4
    %v2704 = vrot.slane %v2632, 4
    %v2705 = vrot.slane %v2633, 4
    %v2706 = vrot.slane %v2634, 4
    %v2707 = vrot.slane %v2635, 4
    %v2708 = vrot.slane %v2636, 4
    %v2709 = vrot.slane %v2637, 4
    %v2710 = vrot.slane %v2638, 4
    %v2711 = vrot.slane %v2639, 4
    %v2712 = vrot.slane %v2640, 4
    %v2713 = vrot.slane %v2641, 4
    %v2714 = vrot.slane %v2642, 4
    %v2715 = vrot.slane %v2643, 4
    %v2716 = vsel %vm1629, %v2714, %v2715
    %v2717 = vsel %vm1629, %v2713, %v2714
    %v2718 = vsel %vm1629, %v2712, %v2713
    %v2719 = vsel %vm1629, %v2711, %v2712
    %v2720 = vsel %vm1629, %v2710, %v2711
    %v2721 = vsel %vm1629, %v2709, %v2710
    %v2722 = vsel %vm1629, %v2708, %v2709
    %v2723 = vsel %vm1629, %v2707, %v2708
    %v2724 = vsel %vm1629, %v2706, %v2707
    %v2725 = vsel %vm1629, %v2705, %v2706
    %v2726 = vsel %vm1629, %v2704, %v2705
    %v2727 = vsel %vm1629, %v2703, %v2704
    %v2728 = vsel %vm1629, %v2702, %v2703
    %v2729 = vsel %vm1629, %v2701, %v2702
    %v2730 = vsel %vm1629, %v2700, %v2701
    %v2731 = vsel %vm1629, %v2715, %v2700
    %v2732 = vsel %vm1678, %v2731, 0.0
    %v2733 = vsel %vm1679, %v2730, 0.0
    %v2734 = vsel %vm1680, %v2729, 0.0
    %v2735 = vsel %vm1681, %v2728, 0.0
    %v2736 = vsel %vm1682, %v2727, 0.0
    %v2737 = vsel %vm1683, %v2726, 0.0
    %v2738 = vsel %vm1684, %v2725, 0.0
    %v2739 = vsel %vm1685, %v2724, 0.0
    %v2740 = vsel %vm1678, %v2723, 0.0
    %v2741 = vsel %vm1679, %v2722, 0.0
    %v2742 = vsel %vm1680, %v2721, 0.0
    %v2743 = vsel %vm1681, %v2720, 0.0
    %v2744 = vsel %vm1682, %v2719, 0.0
    %v2745 = vsel %vm1683, %v2718, 0.0
    %v2746 = vsel %vm1684, %v2717, 0.0
    %v2747 = vsel %vm1685, %v2716, 0.0
    %v2748 = vpack.c.bf16 %v2685, %v2684
    %v2749 = vpack.c.bf16 %v2733, %v2732
    %v2750 = vpack.c.bf16 %v2629, %v2628
    %v2751 = vpack.c.bf16 %v2687, %v2686
    %v2752 = vpack.c.bf16 %v2735, %v2734
    %v2753 = vpack.c.bf16 %v2631, %v2630
    %v2754 = vpack.c.bf16 %v2689, %v2688
    %v2755 = vpack.c.bf16 %v2737, %v2736
    %v2756 = vpack.c.bf16 %v2633, %v2632
    %v2757 = vpack.c.bf16 %v2691, %v2690
    %v2758 = vpack.c.bf16 %v2739, %v2738
    %v2759 = vpack.c.bf16 %v2635, %v2634
    %v2760 = vpack.c.bf16 %v2693, %v2692
    %v2761 = vpack.c.bf16 %v2741, %v2740
    %v2762 = vpack.c.bf16 %v2637, %v2636
    %v2763 = vpack.c.bf16 %v2695, %v2694
    %v2764 = vpack.c.bf16 %v2743, %v2742
    %v2765 = vpack.c.bf16 %v2639, %v2638
    %v2766 = vpack.c.bf16 %v2697, %v2696
    %v2767 = vpack.c.bf16 %v2745, %v2744
    %v2768 = vpack.c.bf16 %v2641, %v2640
    %v2769 = vpack.c.bf16 %v2699, %v2698
    %v2770 = vpack.c.bf16 %v2747, %v2746
    %v2771 = vpack.c.bf16 %v2643, %v2642
    %v2772 = vld [vmem:[#allocation4] sm:$0xff]
    %v2773 = vld [vmem:[#allocation4 + $0x8] sm:$0xff]
    %v2774 = vld [vmem:[#allocation4 + $0x10] sm:$0xff]
    %v2775 = vld [vmem:[#allocation4 + $0x18] sm:$0xff]
    %v2776 = vld [vmem:[#allocation4 + $0x20] sm:$0xff]
    %v2777 = vld [vmem:[#allocation4 + $0x28] sm:$0xff]
    %v2778 = vld [vmem:[#allocation4 + $0x30] sm:$0xff]
    %v2779 = vld [vmem:[#allocation4 + $0x38] sm:$0xff]
    %v2780 = vld [vmem:[#allocation4 + $0x40] sm:$0xff]
    %v2781 = vld [vmem:[#allocation4 + $0x48] sm:$0xff]
    %v2782 = vld [vmem:[#allocation4 + $0x50] sm:$0xff]
    %v2783 = vld [vmem:[#allocation4 + $0x58] sm:$0xff]
    %v2784 = vld [vmem:[#allocation4 + $0x60] sm:$0xff]
    %v2785 = vld [vmem:[#allocation4 + $0x68] sm:$0xff]
    %v2786 = vld [vmem:[#allocation4 + $0x70] sm:$0xff]
    %v2787 = vld [vmem:[#allocation4 + $0x78] sm:$0xff]
    %v2788 = vld [vmem:[#allocation4 + $0x80] sm:$0xff]
    %v2789 = vld [vmem:[#allocation4 + $0x88] sm:$0xff]
    %v2790 = vld [vmem:[#allocation4 + $0x90] sm:$0xff]
    %v2791 = vld [vmem:[#allocation4 + $0x98] sm:$0xff]
    %v2792 = vld [vmem:[#allocation4 + $0xa0] sm:$0xff]
    %v2793 = vld [vmem:[#allocation4 + $0xa8] sm:$0xff]
    %v2794 = vld [vmem:[#allocation4 + $0xb0] sm:$0xff]
    %v2795 = vld [vmem:[#allocation4 + $0xb8] sm:$0xff]
    %v2796 = vld [vmem:[#allocation4 + $0xc0] sm:$0xff]
    %v2797 = vld [vmem:[#allocation4 + $0xc8] sm:$0xff]
    %v2798 = vld [vmem:[#allocation4 + $0xd0] sm:$0xff]
    %v2799 = vld [vmem:[#allocation4 + $0xd8] sm:$0xff]
    %v2800 = vld [vmem:[#allocation4 + $0xe0] sm:$0xff]
    %v2801 = vld [vmem:[#allocation4 + $0xe8] sm:$0xff]
    %v2802 = vld [vmem:[#allocation4 + $0xf0] sm:$0xff]
    %v2803 = vld [vmem:[#allocation4 + $0xf8] sm:$0xff]
    %v2804 = vld [vmem:[#allocation4 + $0x100] sm:$0xff]
    %v2805 = vld [vmem:[#allocation4 + $0x108] sm:$0xff]
    %v2806 = vld [vmem:[#allocation4 + $0x110] sm:$0xff]
    %v2807 = vld [vmem:[#allocation4 + $0x118] sm:$0xff]
    %v2808 = vld [vmem:[#allocation4 + $0x120] sm:$0xff]
    %v2809 = vld [vmem:[#allocation4 + $0x128] sm:$0xff]
    %v2810 = vld [vmem:[#allocation4 + $0x130] sm:$0xff]
    %v2811 = vld [vmem:[#allocation4 + $0x138] sm:$0xff]
    %v2812 = vld [vmem:[#allocation4 + $0x140] sm:$0xff]
    %v2813 = vld [vmem:[#allocation4 + $0x148] sm:$0xff]
    %v2814 = vld [vmem:[#allocation4 + $0x150] sm:$0xff]
    %v2815 = vld [vmem:[#allocation4 + $0x158] sm:$0xff]
    %v2816 = vld [vmem:[#allocation4 + $0x160] sm:$0xff]
    %v2817 = vld [vmem:[#allocation4 + $0x168] sm:$0xff]
    %v2818 = vld [vmem:[#allocation4 + $0x170] sm:$0xff]
    %v2819 = vld [vmem:[#allocation4 + $0x178] sm:$0xff]
    %v2820 = vld [vmem:[%s11] sm:$0x3]
    %v2822 = vperm.slane %v2820, 0
    %v2823 = vperm.slane %v2820, 1
    %v2874 = vunpack.c.l.b16 %v2772
    %v2875 = vunpack.c.h.b16 %v2772
    %v2876 = vunpack.c.l.b16 %v2773
    %v2877 = vunpack.c.h.b16 %v2773
    %v2878 = vunpack.c.l.b16 %v2774
    %v2879 = vunpack.c.h.b16 %v2774
    %v2880 = vunpack.c.l.b16 %v2775
    %v2881 = vunpack.c.h.b16 %v2775
    %v2882 = vunpack.c.l.b16 %v2776
    %v2883 = vunpack.c.h.b16 %v2776
    %v2884 = vunpack.c.l.b16 %v2777
    %v2885 = vunpack.c.h.b16 %v2777
    %v2886 = vunpack.c.l.b16 %v2778
    %v2887 = vunpack.c.h.b16 %v2778
    %v2888 = vunpack.c.l.b16 %v2779
    %v2889 = vunpack.c.h.b16 %v2779
    %v2890 = vunpack.c.l.b16 %v2780
    %v2891 = vunpack.c.h.b16 %v2780
    %v2892 = vunpack.c.l.b16 %v2781
    %v2893 = vunpack.c.h.b16 %v2781
    %v2894 = vunpack.c.l.b16 %v2782
    %v2895 = vunpack.c.h.b16 %v2782
    %v2896 = vunpack.c.l.b16 %v2783
    %v2897 = vunpack.c.h.b16 %v2783
    %v2898 = vunpack.c.l.b16 %v2784
    %v2899 = vunpack.c.h.b16 %v2784
    %v2900 = vunpack.c.l.b16 %v2785
    %v2901 = vunpack.c.h.b16 %v2785
    %v2902 = vunpack.c.l.b16 %v2786
    %v2903 = vunpack.c.h.b16 %v2786
    %v2904 = vunpack.c.l.b16 %v2787
    %v2905 = vunpack.c.h.b16 %v2787
    %v2906 = vunpack.c.l.b16 %v2788
    %v2907 = vunpack.c.h.b16 %v2788
    %v2908 = vunpack.c.l.b16 %v2789
    %v2909 = vunpack.c.h.b16 %v2789
    %v2910 = vunpack.c.l.b16 %v2790
    %v2911 = vunpack.c.h.b16 %v2790
    %v2912 = vunpack.c.l.b16 %v2791
    %v2913 = vunpack.c.h.b16 %v2791
    %v2914 = vunpack.c.l.b16 %v2792
    %v2915 = vunpack.c.h.b16 %v2792
    %v2916 = vunpack.c.l.b16 %v2793
    %v2917 = vunpack.c.h.b16 %v2793
    %v2918 = vunpack.c.l.b16 %v2794
    %v2919 = vunpack.c.h.b16 %v2794
    %v2920 = vunpack.c.l.b16 %v2795
    %v2921 = vunpack.c.h.b16 %v2795
    %v2922 = vunpack.c.l.b16 %v2796
    %v2923 = vunpack.c.h.b16 %v2796
    %v2924 = vunpack.c.l.b16 %v2797
    %v2925 = vunpack.c.h.b16 %v2797
    %v2926 = vunpack.c.l.b16 %v2798
    %v2927 = vunpack.c.h.b16 %v2798
    %v2928 = vunpack.c.l.b16 %v2799
    %v2929 = vunpack.c.h.b16 %v2799
    %v2930 = vunpack.c.l.b16 %v2800
    %v2931 = vunpack.c.h.b16 %v2800
    %v2932 = vunpack.c.l.b16 %v2801
    %v2933 = vunpack.c.h.b16 %v2801
    %v2934 = vunpack.c.l.b16 %v2802
    %v2935 = vunpack.c.h.b16 %v2802
    %v2936 = vunpack.c.l.b16 %v2803
    %v2937 = vunpack.c.h.b16 %v2803
    %v2938 = vunpack.c.l.b16 %v2804
    %v2939 = vunpack.c.h.b16 %v2804
    %v2940 = vunpack.c.l.b16 %v2805
    %v2941 = vunpack.c.h.b16 %v2805
    %v2942 = vunpack.c.l.b16 %v2806
    %v2943 = vunpack.c.h.b16 %v2806
    %v2944 = vunpack.c.l.b16 %v2807
    %v2945 = vunpack.c.h.b16 %v2807
    %v2946 = vunpack.c.l.b16 %v2808
    %v2947 = vunpack.c.h.b16 %v2808
    %v2948 = vunpack.c.l.b16 %v2809
    %v2949 = vunpack.c.h.b16 %v2809
    %v2950 = vunpack.c.l.b16 %v2810
    %v2951 = vunpack.c.h.b16 %v2810
    %v2952 = vunpack.c.l.b16 %v2811
    %v2953 = vunpack.c.h.b16 %v2811
    %v2954 = vunpack.c.l.b16 %v2812
    %v2955 = vunpack.c.h.b16 %v2812
    %v2956 = vunpack.c.l.b16 %v2813
    %v2957 = vunpack.c.h.b16 %v2813
    %v2958 = vunpack.c.l.b16 %v2814
    %v2959 = vunpack.c.h.b16 %v2814
    %v2960 = vunpack.c.l.b16 %v2815
    %v2961 = vunpack.c.h.b16 %v2815
    %v2962 = vunpack.c.l.b16 %v2816
    %v2963 = vunpack.c.h.b16 %v2816
    %v2964 = vunpack.c.l.b16 %v2817
    %v2965 = vunpack.c.h.b16 %v2817
    %v2966 = vunpack.c.l.b16 %v2818
    %v2967 = vunpack.c.h.b16 %v2818
    %v2968 = vunpack.c.l.b16 %v2819
    %v2969 = vunpack.c.h.b16 %v2819
    %v2970 = vpack.c.b16 %v2876, %v2874
    %v2971 = vpack.c.b16 %v2877, %v2875
    %v2972 = vpack.c.b16 %v2880, %v2878
    %v2973 = vpack.c.b16 %v2881, %v2879
    %v2974 = vpack.c.b16 %v2884, %v2882
    %v2975 = vpack.c.b16 %v2885, %v2883
    %v2976 = vpack.c.b16 %v2888, %v2886
    %v2977 = vpack.c.b16 %v2889, %v2887
    %v2978 = vpack.c.b16 %v2892, %v2890
    %v2979 = vpack.c.b16 %v2893, %v2891
    %v2980 = vpack.c.b16 %v2896, %v2894
    %v2981 = vpack.c.b16 %v2897, %v2895
    %v2982 = vpack.c.b16 %v2900, %v2898
    %v2983 = vpack.c.b16 %v2901, %v2899
    %v2984 = vpack.c.b16 %v2904, %v2902
    %v2985 = vpack.c.b16 %v2905, %v2903
    %v2986 = vpack.c.b16 %v2908, %v2906
    %v2987 = vpack.c.b16 %v2909, %v2907
    %v2988 = vpack.c.b16 %v2912, %v2910
    %v2989 = vpack.c.b16 %v2913, %v2911
    %v2990 = vpack.c.b16 %v2916, %v2914
    %v2991 = vpack.c.b16 %v2917, %v2915
    %v2992 = vpack.c.b16 %v2920, %v2918
    %v2993 = vpack.c.b16 %v2921, %v2919
    %v2994 = vpack.c.b16 %v2924, %v2922
    %v2995 = vpack.c.b16 %v2925, %v2923
    %v2996 = vpack.c.b16 %v2928, %v2926
    %v2997 = vpack.c.b16 %v2929, %v2927
    %v2998 = vpack.c.b16 %v2932, %v2930
    %v2999 = vpack.c.b16 %v2933, %v2931
    %v3000 = vpack.c.b16 %v2936, %v2934
    %v3001 = vpack.c.b16 %v2937, %v2935
    %v3002 = vpack.c.b16 %v2940, %v2938
    %v3003 = vpack.c.b16 %v2941, %v2939
    %v3004 = vpack.c.b16 %v2944, %v2942
    %v3005 = vpack.c.b16 %v2945, %v2943
    %v3006 = vpack.c.b16 %v2948, %v2946
    %v3007 = vpack.c.b16 %v2949, %v2947
    %v3008 = vpack.c.b16 %v2952, %v2950
    %v3009 = vpack.c.b16 %v2953, %v2951
    %v3010 = vpack.c.b16 %v2956, %v2954
    %v3011 = vpack.c.b16 %v2957, %v2955
    %v3012 = vpack.c.b16 %v2960, %v2958
    %v3013 = vpack.c.b16 %v2961, %v2959
    %v3014 = vpack.c.b16 %v2964, %v2962
    %v3015 = vpack.c.b16 %v2965, %v2963
    %v3016 = vpack.c.b16 %v2968, %v2966
    %v3017 = vpack.c.b16 %v2969, %v2967
    %3066 = vmatpush.bf16.msra.mxu0 %v2984
    %3067 = vmatpush.bf16.msra.mxu0 %v2982
    %3068 = vmatpush.bf16.msra.mxu0 %v2980
    %3069 = vmatpush.bf16.msra.mxu0 %v2978
    %3070 = vmatpush.bf16.msra.mxu0 %v2976
    %3071 = vmatpush.bf16.msra.mxu0 %v2974
    %3072 = vmatpush.bf16.msra.mxu0 %v2972
    %3073 = vmatpush.bf16.msra.mxu0 %v2970
    %3074 = vmatmul.bf16.gmra.mxu0 %v2748
    %v3075 = vpop.f32.mrf.mxu0
    %v3076 = vadd.f32 %v2822, %v3075
    %v3077 = vpop.f32.mrf.mxu0
    %v3078 = vadd.f32 %v2822, %v3077
    %3079 = vmatmul.bf16.gmra.mxu0 %v2751
    %v3080 = vpop.f32.mrf.mxu0
    %v3081 = vadd.f32 %v2822, %v3080
    %v3082 = vpop.f32.mrf.mxu0
    %v3083 = vadd.f32 %v2822, %v3082
    %3084 = vmatmul.bf16.gmra.mxu0 %v2754
    %v3085 = vpop.f32.mrf.mxu0
    %v3086 = vadd.f32 %v2822, %v3085
    %v3087 = vpop.f32.mrf.mxu0
    %v3088 = vadd.f32 %v2822, %v3087
    %3089 = vmatmul.bf16.gmra.mxu0 %v2757
    %v3090 = vpop.f32.mrf.mxu0
    %v3091 = vadd.f32 %v2822, %v3090
    %v3092 = vpop.f32.mrf.mxu0
    %v3093 = vadd.f32 %v2822, %v3092
    %3094 = vmatmul.bf16.gmra.mxu0 %v2760
    %v3095 = vpop.f32.mrf.mxu0
    %v3096 = vadd.f32 %v2822, %v3095
    %v3097 = vpop.f32.mrf.mxu0
    %v3098 = vadd.f32 %v2822, %v3097
    %3099 = vmatmul.bf16.gmra.mxu0 %v2763
    %v3100 = vpop.f32.mrf.mxu0
    %v3101 = vadd.f32 %v2822, %v3100
    %v3102 = vpop.f32.mrf.mxu0
    %v3103 = vadd.f32 %v2822, %v3102
    %3104 = vmatmul.bf16.gmra.mxu0 %v2766
    %v3105 = vpop.f32.mrf.mxu0
    %v3106 = vadd.f32 %v2822, %v3105
    %v3107 = vpop.f32.mrf.mxu0
    %v3108 = vadd.f32 %v2822, %v3107
    %3109 = vmatmul.bf16.gmra.mxu0 %v2769
    %v3110 = vpop.f32.mrf.mxu0
    %v3111 = vadd.f32 %v2822, %v3110
    %v3112 = vpop.f32.mrf.mxu0
    %v3113 = vadd.f32 %v2822, %v3112
    %3114 = vdwg.mxu0
    %3115 = vmatpush.bf16.msra.mxu0 %v3000
    %3116 = vmatpush.bf16.msra.mxu0 %v2998
    %3117 = vmatpush.bf16.msra.mxu0 %v2996
    %3118 = vmatpush.bf16.msra.mxu0 %v2994
    %3119 = vmatpush.bf16.msra.mxu0 %v2992
    %3120 = vmatpush.bf16.msra.mxu0 %v2990
    %3121 = vmatpush.bf16.msra.mxu0 %v2988
    %3122 = vmatpush.bf16.msra.mxu0 %v2986
    %3123 = vmatmul.bf16.gmra.mxu0 %v2749
    %v3124 = vpop.f32.mrf.mxu0
    %v3125 = vadd.f32 %v3076, %v3124
    %v3126 = vpop.f32.mrf.mxu0
    %v3127 = vadd.f32 %v3078, %v3126
    %3128 = vmatmul.bf16.gmra.mxu0 %v2752
    %v3129 = vpop.f32.mrf.mxu0
    %v3130 = vadd.f32 %v3081, %v3129
    %v3131 = vpop.f32.mrf.mxu0
    %v3132 = vadd.f32 %v3083, %v3131
    %3133 = vmatmul.bf16.gmra.mxu0 %v2755
    %v3134 = vpop.f32.mrf.mxu0
    %v3135 = vadd.f32 %v3086, %v3134
    %v3136 = vpop.f32.mrf.mxu0
    %v3137 = vadd.f32 %v3088, %v3136
    %3138 = vmatmul.bf16.gmra.mxu0 %v2758
    %v3139 = vpop.f32.mrf.mxu0
    %v3140 = vadd.f32 %v3091, %v3139
    %v3141 = vpop.f32.mrf.mxu0
    %v3142 = vadd.f32 %v3093, %v3141
    %3143 = vmatmul.bf16.gmra.mxu0 %v2761
    %v3144 = vpop.f32.mrf.mxu0
    %v3145 = vadd.f32 %v3096, %v3144
    %v3146 = vpop.f32.mrf.mxu0
    %v3147 = vadd.f32 %v3098, %v3146
    %3148 = vmatmul.bf16.gmra.mxu0 %v2764
    %v3149 = vpop.f32.mrf.mxu0
    %v3150 = vadd.f32 %v3101, %v3149
    %v3151 = vpop.f32.mrf.mxu0
    %v3152 = vadd.f32 %v3103, %v3151
    %3153 = vmatmul.bf16.gmra.mxu0 %v2767
    %v3154 = vpop.f32.mrf.mxu0
    %v3155 = vadd.f32 %v3106, %v3154
    %v3156 = vpop.f32.mrf.mxu0
    %v3157 = vadd.f32 %v3108, %v3156
    %3158 = vmatmul.bf16.gmra.mxu0 %v2770
    %v3159 = vpop.f32.mrf.mxu0
    %v3160 = vadd.f32 %v3111, %v3159
    %v3161 = vpop.f32.mrf.mxu0
    %v3162 = vadd.f32 %v3113, %v3161
    %3163 = vdwg.mxu0
    %3164 = vmatpush.bf16.msra.mxu0 %v3016
    %3165 = vmatpush.bf16.msra.mxu0 %v3014
    %3166 = vmatpush.bf16.msra.mxu0 %v3012
    %3167 = vmatpush.bf16.msra.mxu0 %v3010
    %3168 = vmatpush.bf16.msra.mxu0 %v3008
    %3169 = vmatpush.bf16.msra.mxu0 %v3006
    %3170 = vmatpush.bf16.msra.mxu0 %v3004
    %3171 = vmatpush.bf16.msra.mxu0 %v3002
    %3172 = vmatmul.bf16.gmra.mxu0 %v2750
    %v3173 = vpop.f32.mrf.mxu0
    %v3174 = vadd.f32 %v3125, %v3173
    %v3175 = vpop.f32.mrf.mxu0
    %v3176 = vadd.f32 %v3127, %v3175
    %3177 = vmatmul.bf16.gmra.mxu0 %v2753
    %v3178 = vpop.f32.mrf.mxu0
    %v3179 = vadd.f32 %v3130, %v3178
    %v3180 = vpop.f32.mrf.mxu0
    %v3181 = vadd.f32 %v3132, %v3180
    %3182 = vmatmul.bf16.gmra.mxu0 %v2756
    %v3183 = vpop.f32.mrf.mxu0
    %v3184 = vadd.f32 %v3135, %v3183
    %v3185 = vpop.f32.mrf.mxu0
    %v3186 = vadd.f32 %v3137, %v3185
    %3187 = vmatmul.bf16.gmra.mxu0 %v2759
    %v3188 = vpop.f32.mrf.mxu0
    %v3189 = vadd.f32 %v3140, %v3188
    %v3190 = vpop.f32.mrf.mxu0
    %v3191 = vadd.f32 %v3142, %v3190
    %3192 = vmatmul.bf16.gmra.mxu0 %v2762
    %v3193 = vpop.f32.mrf.mxu0
    %v3194 = vadd.f32 %v3145, %v3193
    %v3195 = vpop.f32.mrf.mxu0
    %v3196 = vadd.f32 %v3147, %v3195
    %3197 = vmatmul.bf16.gmra.mxu0 %v2765
    %v3198 = vpop.f32.mrf.mxu0
    %v3199 = vadd.f32 %v3150, %v3198
    %v3200 = vpop.f32.mrf.mxu0
    %v3201 = vadd.f32 %v3152, %v3200
    %3202 = vmatmul.bf16.gmra.mxu0 %v2768
    %v3203 = vpop.f32.mrf.mxu0
    %v3204 = vadd.f32 %v3155, %v3203
    %v3205 = vpop.f32.mrf.mxu0
    %v3206 = vadd.f32 %v3157, %v3205
    %3207 = vmatmul.bf16.gmra.mxu0 %v2771
    %v3208 = vpop.f32.mrf.mxu0
    %v3209 = vadd.f32 %v3160, %v3208
    %v3210 = vpop.f32.mrf.mxu0
    %v3211 = vadd.f32 %v3162, %v3210
    %3212 = vdwg.mxu0
    %3213 = vmatpush.bf16.msra.mxu0 %v2985
    %3214 = vmatpush.bf16.msra.mxu0 %v2983
    %3215 = vmatpush.bf16.msra.mxu0 %v2981
    %3216 = vmatpush.bf16.msra.mxu0 %v2979
    %3217 = vmatpush.bf16.msra.mxu0 %v2977
    %3218 = vmatpush.bf16.msra.mxu0 %v2975
    %3219 = vmatpush.bf16.msra.mxu0 %v2973
    %3220 = vmatpush.bf16.msra.mxu0 %v2971
    %3221 = vmatmul.bf16.gmra.mxu0 %v2748
    %v3222 = vpop.f32.mrf.mxu0
    %v3223 = vadd.f32 %v2823, %v3222
    %v3224 = vpop.f32.mrf.mxu0
    %v3225 = vadd.f32 %v2823, %v3224
    %3226 = vmatmul.bf16.gmra.mxu0 %v2751
    %v3227 = vpop.f32.mrf.mxu0
    %v3228 = vadd.f32 %v2823, %v3227
    %v3229 = vpop.f32.mrf.mxu0
    %v3230 = vadd.f32 %v2823, %v3229
    %3231 = vmatmul.bf16.gmra.mxu0 %v2754
    %v3232 = vpop.f32.mrf.mxu0
    %v3233 = vadd.f32 %v2823, %v3232
    %v3234 = vpop.f32.mrf.mxu0
    %v3235 = vadd.f32 %v2823, %v3234
    %3236 = vmatmul.bf16.gmra.mxu0 %v2757
    %v3237 = vpop.f32.mrf.mxu0
    %v3238 = vadd.f32 %v2823, %v3237
    %v3239 = vpop.f32.mrf.mxu0
    %v3240 = vadd.f32 %v2823, %v3239
    %3241 = vmatmul.bf16.gmra.mxu0 %v2760
    %v3242 = vpop.f32.mrf.mxu0
    %v3243 = vadd.f32 %v2823, %v3242
    %v3244 = vpop.f32.mrf.mxu0
    %v3245 = vadd.f32 %v2823, %v3244
    %3246 = vmatmul.bf16.gmra.mxu0 %v2763
    %v3247 = vpop.f32.mrf.mxu0
    %v3248 = vadd.f32 %v2823, %v3247
    %v3249 = vpop.f32.mrf.mxu0
    %v3250 = vadd.f32 %v2823, %v3249
    %3251 = vmatmul.bf16.gmra.mxu0 %v2766
    %v3252 = vpop.f32.mrf.mxu0
    %v3253 = vadd.f32 %v2823, %v3252
    %v3254 = vpop.f32.mrf.mxu0
    %v3255 = vadd.f32 %v2823, %v3254
    %3256 = vmatmul.bf16.gmra.mxu0 %v2769
    %v3257 = vpop.f32.mrf.mxu0
    %v3258 = vadd.f32 %v2823, %v3257
    %v3259 = vpop.f32.mrf.mxu0
    %v3260 = vadd.f32 %v2823, %v3259
    %3261 = vdwg.mxu0
    %3262 = vmatpush.bf16.msra.mxu0 %v3001
    %3263 = vmatpush.bf16.msra.mxu0 %v2999
    %3264 = vmatpush.bf16.msra.mxu0 %v2997
    %3265 = vmatpush.bf16.msra.mxu0 %v2995
    %3266 = vmatpush.bf16.msra.mxu0 %v2993
    %3267 = vmatpush.bf16.msra.mxu0 %v2991
    %3268 = vmatpush.bf16.msra.mxu0 %v2989
    %3269 = vmatpush.bf16.msra.mxu0 %v2987
    %3270 = vmatmul.bf16.gmra.mxu0 %v2749
    %v3271 = vpop.f32.mrf.mxu0
    %v3272 = vadd.f32 %v3223, %v3271
    %v3273 = vpop.f32.mrf.mxu0
    %v3274 = vadd.f32 %v3225, %v3273
    %3275 = vmatmul.bf16.gmra.mxu0 %v2752
    %v3276 = vpop.f32.mrf.mxu0
    %v3277 = vadd.f32 %v3228, %v3276
    %v3278 = vpop.f32.mrf.mxu0
    %v3279 = vadd.f32 %v3230, %v3278
    %3280 = vmatmul.bf16.gmra.mxu0 %v2755
    %v3281 = vpop.f32.mrf.mxu0
    %v3282 = vadd.f32 %v3233, %v3281
    %v3283 = vpop.f32.mrf.mxu0
    %v3284 = vadd.f32 %v3235, %v3283
    %3285 = vmatmul.bf16.gmra.mxu0 %v2758
    %v3286 = vpop.f32.mrf.mxu0
    %v3287 = vadd.f32 %v3238, %v3286
    %v3288 = vpop.f32.mrf.mxu0
    %v3289 = vadd.f32 %v3240, %v3288
    %3290 = vmatmul.bf16.gmra.mxu0 %v2761
    %v3291 = vpop.f32.mrf.mxu0
    %v3292 = vadd.f32 %v3243, %v3291
    %v3293 = vpop.f32.mrf.mxu0
    %v3294 = vadd.f32 %v3245, %v3293
    %3295 = vmatmul.bf16.gmra.mxu0 %v2764
    %v3296 = vpop.f32.mrf.mxu0
    %v3297 = vadd.f32 %v3248, %v3296
    %v3298 = vpop.f32.mrf.mxu0
    %v3299 = vadd.f32 %v3250, %v3298
    %3300 = vmatmul.bf16.gmra.mxu0 %v2767
    %v3301 = vpop.f32.mrf.mxu0
    %v3302 = vadd.f32 %v3253, %v3301
    %v3303 = vpop.f32.mrf.mxu0
    %v3304 = vadd.f32 %v3255, %v3303
    %3305 = vmatmul.bf16.gmra.mxu0 %v2770
    %v3306 = vpop.f32.mrf.mxu0
    %v3307 = vadd.f32 %v3258, %v3306
    %v3308 = vpop.f32.mrf.mxu0
    %v3309 = vadd.f32 %v3260, %v3308
    %3310 = vdwg.mxu0
    %3311 = vmatpush.bf16.msra.mxu0 %v3017
    %3312 = vmatpush.bf16.msra.mxu0 %v3015
    %3313 = vmatpush.bf16.msra.mxu0 %v3013
    %3314 = vmatpush.bf16.msra.mxu0 %v3011
    %3315 = vmatpush.bf16.msra.mxu0 %v3009
    %3316 = vmatpush.bf16.msra.mxu0 %v3007
    %3317 = vmatpush.bf16.msra.mxu0 %v3005
    %3318 = vmatpush.bf16.msra.mxu0 %v3003
    %3319 = vmatmul.bf16.gmra.mxu0 %v2750
    %v3320 = vpop.f32.mrf.mxu0
    %v3321 = vadd.f32 %v3272, %v3320
    %v3322 = vpop.f32.mrf.mxu0
    %v3323 = vadd.f32 %v3274, %v3322
    %3324 = vmatmul.bf16.gmra.mxu0 %v2753
    %v3325 = vpop.f32.mrf.mxu0
    %v3326 = vadd.f32 %v3277, %v3325
    %v3327 = vpop.f32.mrf.mxu0
    %v3328 = vadd.f32 %v3279, %v3327
    %3329 = vmatmul.bf16.gmra.mxu0 %v2756
    %v3330 = vpop.f32.mrf.mxu0
    %v3331 = vadd.f32 %v3282, %v3330
    %v3332 = vpop.f32.mrf.mxu0
    %v3333 = vadd.f32 %v3284, %v3332
    %3334 = vmatmul.bf16.gmra.mxu0 %v2759
    %v3335 = vpop.f32.mrf.mxu0
    %v3336 = vadd.f32 %v3287, %v3335
    %v3337 = vpop.f32.mrf.mxu0
    %v3338 = vadd.f32 %v3289, %v3337
    %3339 = vmatmul.bf16.gmra.mxu0 %v2762
    %v3340 = vpop.f32.mrf.mxu0
    %v3341 = vadd.f32 %v3292, %v3340
    %v3342 = vpop.f32.mrf.mxu0
    %v3343 = vadd.f32 %v3294, %v3342
    %3344 = vmatmul.bf16.gmra.mxu0 %v2765
    %v3345 = vpop.f32.mrf.mxu0
    %v3346 = vadd.f32 %v3297, %v3345
    %v3347 = vpop.f32.mrf.mxu0
    %v3348 = vadd.f32 %v3299, %v3347
    %3349 = vmatmul.bf16.gmra.mxu0 %v2768
    %v3350 = vpop.f32.mrf.mxu0
    %v3351 = vadd.f32 %v3302, %v3350
    %v3352 = vpop.f32.mrf.mxu0
    %v3353 = vadd.f32 %v3304, %v3352
    %3354 = vmatmul.bf16.gmra.mxu0 %v2771
    %v3355 = vpop.f32.mrf.mxu0
    %v3356 = vadd.f32 %v3307, %v3355
    %v3357 = vpop.f32.mrf.mxu0
    %v3358 = vadd.f32 %v3309, %v3357
    %3359 = vdwg.mxu0
    %v3360 = vmax.f32 %v3174, 0.0
    %v3361 = vmax.f32 %v3176, 0.0
    %v3362 = vmax.f32 %v3179, 0.0
    %v3363 = vmax.f32 %v3181, 0.0
    %v3364 = vmax.f32 %v3184, 0.0
    %v3365 = vmax.f32 %v3186, 0.0
    %v3366 = vmax.f32 %v3189, 0.0
    %v3367 = vmax.f32 %v3191, 0.0
    %v3368 = vmax.f32 %v3194, 0.0
    %v3369 = vmax.f32 %v3196, 0.0
    %v3370 = vmax.f32 %v3199, 0.0
    %v3371 = vmax.f32 %v3201, 0.0
    %v3372 = vmax.f32 %v3204, 0.0
    %v3373 = vmax.f32 %v3206, 0.0
    %v3374 = vmax.f32 %v3209, 0.0
    %v3375 = vmax.f32 %v3211, 0.0
    %v3376 = vsel %vm2676, %v3375, 0.0
    %v3377 = vsel %vm2677, %v3360, 0.0
    %v3378 = vsel %vm2678, %v3361, 0.0
    %v3379 = vsel %vm2679, %v3362, 0.0
    %v3380 = vsel %vm2680, %v3363, 0.0
    %v3381 = vsel %vm2681, %v3364, 0.0
    %v3382 = vsel %vm2682, %v3365, 0.0
    %v3383 = vsel %vm2683, %v3366, 0.0
    %v3384 = vsel %vm2676, %v3367, 0.0
    %v3385 = vsel %vm2677, %v3368, 0.0
    %v3386 = vsel %vm2678, %v3369, 0.0
    %v3387 = vsel %vm2679, %v3370, 0.0
    %v3388 = vsel %vm2680, %v3371, 0.0
    %v3389 = vsel %vm2681, %v3372, 0.0
    %v3390 = vsel %vm2682, %v3373, 0.0
    %v3391 = vsel %vm2683, %v3374, 0.0
    %v3392 = vrot.slane %v3360, 4
    %v3393 = vrot.slane %v3361, 4
    %v3394 = vrot.slane %v3362, 4
    %v3395 = vrot.slane %v3363, 4
    %v3396 = vrot.slane %v3364, 4
    %v3397 = vrot.slane %v3365, 4
    %v3398 = vrot.slane %v3366, 4
    %v3399 = vrot.slane %v3367, 4
    %v3400 = vrot.slane %v3368, 4
    %v3401 = vrot.slane %v3369, 4
    %v3402 = vrot.slane %v3370, 4
    %v3403 = vrot.slane %v3371, 4
    %v3404 = vrot.slane %v3372, 4
    %v3405 = vrot.slane %v3373, 4
    %v3406 = vrot.slane %v3374, 4
    %v3407 = vrot.slane %v3375, 4
    %v3408 = vsel %vm1629, %v3406, %v3407
    %v3409 = vsel %vm1629, %v3405, %v3406
    %v3410 = vsel %vm1629, %v3404, %v3405
    %v3411 = vsel %vm1629, %v3403, %v3404
    %v3412 = vsel %vm1629, %v3402, %v3403
    %v3413 = vsel %vm1629, %v3401, %v3402
    %v3414 = vsel %vm1629, %v3400, %v3401
    %v3415 = vsel %vm1629, %v3399, %v3400
    %v3416 = vsel %vm1629, %v3398, %v3399
    %v3417 = vsel %vm1629, %v3397, %v3398
    %v3418 = vsel %vm1629, %v3396, %v3397
    %v3419 = vsel %vm1629, %v3395, %v3396
    %v3420 = vsel %vm1629, %v3394, %v3395
    %v3421 = vsel %vm1629, %v3393, %v3394
    %v3422 = vsel %vm1629, %v3392, %v3393
    %v3423 = vsel %vm1629, %v3407, %v3392
    %v3424 = vsel %vm1678, %v3423, 0.0
    %v3425 = vsel %vm1679, %v3422, 0.0
    %v3426 = vsel %vm1680, %v3421, 0.0
    %v3427 = vsel %vm1681, %v3420, 0.0
    %v3428 = vsel %vm1682, %v3419, 0.0
    %v3429 = vsel %vm1683, %v3418, 0.0
    %v3430 = vsel %vm1684, %v3417, 0.0
    %v3431 = vsel %vm1685, %v3416, 0.0
    %v3432 = vsel %vm1678, %v3415, 0.0
    %v3433 = vsel %vm1679, %v3414, 0.0
    %v3434 = vsel %vm1680, %v3413, 0.0
    %v3435 = vsel %vm1681, %v3412, 0.0
    %v3436 = vsel %vm1682, %v3411, 0.0
    %v3437 = vsel %vm1683, %v3410, 0.0
    %v3438 = vsel %vm1684, %v3409, 0.0
    %v3439 = vsel %vm1685, %v3408, 0.0
    %v3440 = vpack.c.bf16 %v3377, %v3376
    %v3441 = vpack.c.bf16 %v3425, %v3424
    %v3442 = vpack.c.bf16 %v3361, %v3360
    %v3443 = vpack.c.bf16 %v3379, %v3378
    %v3444 = vpack.c.bf16 %v3427, %v3426
    %v3445 = vpack.c.bf16 %v3363, %v3362
    %v3446 = vpack.c.bf16 %v3381, %v3380
    %v3447 = vpack.c.bf16 %v3429, %v3428
    %v3448 = vpack.c.bf16 %v3365, %v3364
    %v3449 = vpack.c.bf16 %v3383, %v3382
    %v3450 = vpack.c.bf16 %v3431, %v3430
    %v3451 = vpack.c.bf16 %v3367, %v3366
    %v3452 = vpack.c.bf16 %v3385, %v3384
    %v3453 = vpack.c.bf16 %v3433, %v3432
    %v3454 = vpack.c.bf16 %v3369, %v3368
    %v3455 = vpack.c.bf16 %v3387, %v3386
    %v3456 = vpack.c.bf16 %v3435, %v3434
    %v3457 = vpack.c.bf16 %v3371, %v3370
    %v3458 = vpack.c.bf16 %v3389, %v3388
    %v3459 = vpack.c.bf16 %v3437, %v3436
    %v3460 = vpack.c.bf16 %v3373, %v3372
    %v3461 = vpack.c.bf16 %v3391, %v3390
    %v3462 = vpack.c.bf16 %v3439, %v3438
    %v3463 = vpack.c.bf16 %v3375, %v3374
    %v3464 = vld [vmem:[#allocation6] sm:$0xf]
    %v3465 = vld [vmem:[#allocation6 + $0x4] sm:$0xf]
    %v3466 = vld [vmem:[#allocation6 + $0x8] sm:$0xf]
    %v3467 = vld [vmem:[#allocation6 + $0xc] sm:$0xf]
    %v3468 = vld [vmem:[#allocation6 + $0x10] sm:$0xf]
    %v3469 = vld [vmem:[#allocation6 + $0x14] sm:$0xf]
    %v3470 = vld [vmem:[#allocation6 + $0x18] sm:$0xf]
    %v3471 = vld [vmem:[#allocation6 + $0x1c] sm:$0xf]
    %v3472 = vld [vmem:[#allocation6 + $0x20] sm:$0xf]
    %v3473 = vld [vmem:[#allocation6 + $0x24] sm:$0xf]
    %v3474 = vld [vmem:[#allocation6 + $0x28] sm:$0xf]
    %v3475 = vld [vmem:[#allocation6 + $0x2c] sm:$0xf]
    %v3476 = vld [vmem:[#allocation6 + $0x30] sm:$0xf]
    %v3477 = vld [vmem:[#allocation6 + $0x34] sm:$0xf]
    %v3478 = vld [vmem:[#allocation6 + $0x38] sm:$0xf]
    %v3479 = vld [vmem:[#allocation6 + $0x3c] sm:$0xf]
    %v3480 = vld [vmem:[#allocation6 + $0x40] sm:$0xf]
    %v3481 = vld [vmem:[#allocation6 + $0x44] sm:$0xf]
    %v3482 = vld [vmem:[#allocation6 + $0x48] sm:$0xf]
    %v3483 = vld [vmem:[#allocation6 + $0x4c] sm:$0xf]
    %v3484 = vld [vmem:[#allocation6 + $0x50] sm:$0xf]
    %v3485 = vld [vmem:[#allocation6 + $0x54] sm:$0xf]
    %v3486 = vld [vmem:[#allocation6 + $0x58] sm:$0xf]
    %v3487 = vld [vmem:[#allocation6 + $0x5c] sm:$0xf]
    %v3488 = vld [vmem:[#allocation6 + $0x60] sm:$0xf]
    %v3489 = vld [vmem:[#allocation6 + $0x64] sm:$0xf]
    %v3490 = vld [vmem:[#allocation6 + $0x68] sm:$0xf]
    %v3491 = vld [vmem:[#allocation6 + $0x6c] sm:$0xf]
    %v3492 = vld [vmem:[#allocation6 + $0x70] sm:$0xf]
    %v3493 = vld [vmem:[#allocation6 + $0x74] sm:$0xf]
    %v3494 = vld [vmem:[#allocation6 + $0x78] sm:$0xf]
    %v3495 = vld [vmem:[#allocation6 + $0x7c] sm:$0xf]
    %v3496 = vld [vmem:[#allocation6 + $0x80] sm:$0xf]
    %v3497 = vld [vmem:[#allocation6 + $0x84] sm:$0xf]
    %v3498 = vld [vmem:[#allocation6 + $0x88] sm:$0xf]
    %v3499 = vld [vmem:[#allocation6 + $0x8c] sm:$0xf]
    %v3500 = vld [vmem:[#allocation6 + $0x90] sm:$0xf]
    %v3501 = vld [vmem:[#allocation6 + $0x94] sm:$0xf]
    %v3502 = vld [vmem:[#allocation6 + $0x98] sm:$0xf]
    %v3503 = vld [vmem:[#allocation6 + $0x9c] sm:$0xf]
    %v3504 = vld [vmem:[#allocation6 + $0xa0] sm:$0xf]
    %v3505 = vld [vmem:[#allocation6 + $0xa4] sm:$0xf]
    %v3506 = vld [vmem:[#allocation6 + $0xa8] sm:$0xf]
    %v3507 = vld [vmem:[#allocation6 + $0xac] sm:$0xf]
    %v3508 = vld [vmem:[#allocation6 + $0xb0] sm:$0xf]
    %v3509 = vld [vmem:[#allocation6 + $0xb4] sm:$0xf]
    %v3510 = vld [vmem:[#allocation6 + $0xb8] sm:$0xf]
    %v3511 = vld [vmem:[#allocation6 + $0xbc] sm:$0xf]
    %v3512 = vld [vmem:[%s13] sm:$0x1]
    %v3514 = vperm.slane %v3512, 0
    %v3564 = vunpack.c.l.b16 %v3464
    %v3565 = vunpack.c.l.b16 %v3465
    %v3566 = vunpack.c.l.b16 %v3466
    %v3567 = vunpack.c.l.b16 %v3467
    %v3568 = vunpack.c.l.b16 %v3468
    %v3569 = vunpack.c.l.b16 %v3469
    %v3570 = vunpack.c.l.b16 %v3470
    %v3571 = vunpack.c.l.b16 %v3471
    %v3572 = vunpack.c.l.b16 %v3472
    %v3573 = vunpack.c.l.b16 %v3473
    %v3574 = vunpack.c.l.b16 %v3474
    %v3575 = vunpack.c.l.b16 %v3475
    %v3576 = vunpack.c.l.b16 %v3476
    %v3577 = vunpack.c.l.b16 %v3477
    %v3578 = vunpack.c.l.b16 %v3478
    %v3579 = vunpack.c.l.b16 %v3479
    %v3580 = vunpack.c.l.b16 %v3480
    %v3581 = vunpack.c.l.b16 %v3481
    %v3582 = vunpack.c.l.b16 %v3482
    %v3583 = vunpack.c.l.b16 %v3483
    %v3584 = vunpack.c.l.b16 %v3484
    %v3585 = vunpack.c.l.b16 %v3485
    %v3586 = vunpack.c.l.b16 %v3486
    %v3587 = vunpack.c.l.b16 %v3487
    %v3588 = vunpack.c.l.b16 %v3488
    %v3589 = vunpack.c.l.b16 %v3489
    %v3590 = vunpack.c.l.b16 %v3490
    %v3591 = vunpack.c.l.b16 %v3491
    %v3592 = vunpack.c.l.b16 %v3492
    %v3593 = vunpack.c.l.b16 %v3493
    %v3594 = vunpack.c.l.b16 %v3494
    %v3595 = vunpack.c.l.b16 %v3495
    %v3596 = vunpack.c.l.b16 %v3496
    %v3597 = vunpack.c.l.b16 %v3497
    %v3598 = vunpack.c.l.b16 %v3498
    %v3599 = vunpack.c.l.b16 %v3499
    %v3600 = vunpack.c.l.b16 %v3500
    %v3601 = vunpack.c.l.b16 %v3501
    %v3602 = vunpack.c.l.b16 %v3502
    %v3603 = vunpack.c.l.b16 %v3503
    %v3604 = vunpack.c.l.b16 %v3504
    %v3605 = vunpack.c.l.b16 %v3505
    %v3606 = vunpack.c.l.b16 %v3506
    %v3607 = vunpack.c.l.b16 %v3507
    %v3608 = vunpack.c.l.b16 %v3508
    %v3609 = vunpack.c.l.b16 %v3509
    %v3610 = vunpack.c.l.b16 %v3510
    %v3611 = vunpack.c.l.b16 %v3511
    %v3612 = vpack.c.b16 %v3565, %v3564
    %v3613 = vpack.c.b16 %v3567, %v3566
    %v3614 = vpack.c.b16 %v3569, %v3568
    %v3615 = vpack.c.b16 %v3571, %v3570
    %v3616 = vpack.c.b16 %v3573, %v3572
    %v3617 = vpack.c.b16 %v3575, %v3574
    %v3618 = vpack.c.b16 %v3577, %v3576
    %v3619 = vpack.c.b16 %v3579, %v3578
    %v3620 = vpack.c.b16 %v3581, %v3580
    %v3621 = vpack.c.b16 %v3583, %v3582
    %v3622 = vpack.c.b16 %v3585, %v3584
    %v3623 = vpack.c.b16 %v3587, %v3586
    %v3624 = vpack.c.b16 %v3589, %v3588
    %v3625 = vpack.c.b16 %v3591, %v3590
    %v3626 = vpack.c.b16 %v3593, %v3592
    %v3627 = vpack.c.b16 %v3595, %v3594
    %v3628 = vpack.c.b16 %v3597, %v3596
    %v3629 = vpack.c.b16 %v3599, %v3598
    %v3630 = vpack.c.b16 %v3601, %v3600
    %v3631 = vpack.c.b16 %v3603, %v3602
    %v3632 = vpack.c.b16 %v3605, %v3604
    %v3633 = vpack.c.b16 %v3607, %v3606
    %v3634 = vpack.c.b16 %v3609, %v3608
    %v3635 = vpack.c.b16 %v3611, %v3610
    %3660 = vmatpush.bf16.msra.mxu0 %v3619
    %3661 = vmatpush.bf16.msra.mxu0 %v3618
    %3662 = vmatpush.bf16.msra.mxu0 %v3617
    %3663 = vmatpush.bf16.msra.mxu0 %v3616
    %3664 = vmatpush.bf16.msra.mxu0 %v3615
    %3665 = vmatpush.bf16.msra.mxu0 %v3614
    %3666 = vmatpush.bf16.msra.mxu0 %v3613
    %3667 = vmatpush.bf16.msra.mxu0 %v3612
    %3668 = vmatmul.bf16.gmra.mxu0 %v3440
    %v3669 = vpop.f32.mrf.mxu0
    %v3670 = vadd.f32 %v3514, %v3669
    %v3671 = vpop.f32.mrf.mxu0
    %v3672 = vadd.f32 %v3514, %v3671
    %3673 = vmatmul.bf16.gmra.mxu0 %v3443
    %v3674 = vpop.f32.mrf.mxu0
    %v3675 = vadd.f32 %v3514, %v3674
    %v3676 = vpop.f32.mrf.mxu0
    %v3677 = vadd.f32 %v3514, %v3676
    %3678 = vmatmul.bf16.gmra.mxu0 %v3446
    %v3679 = vpop.f32.mrf.mxu0
    %v3680 = vadd.f32 %v3514, %v3679
    %v3681 = vpop.f32.mrf.mxu0
    %v3682 = vadd.f32 %v3514, %v3681
    %3683 = vmatmul.bf16.gmra.mxu0 %v3449
    %v3684 = vpop.f32.mrf.mxu0
    %v3685 = vadd.f32 %v3514, %v3684
    %v3686 = vpop.f32.mrf.mxu0
    %v3687 = vadd.f32 %v3514, %v3686
    %3688 = vmatmul.bf16.gmra.mxu0 %v3452
    %v3689 = vpop.f32.mrf.mxu0
    %v3690 = vadd.f32 %v3514, %v3689
    %v3691 = vpop.f32.mrf.mxu0
    %v3692 = vadd.f32 %v3514, %v3691
    %3693 = vmatmul.bf16.gmra.mxu0 %v3455
    %v3694 = vpop.f32.mrf.mxu0
    %v3695 = vadd.f32 %v3514, %v3694
    %v3696 = vpop.f32.mrf.mxu0
    %v3697 = vadd.f32 %v3514, %v3696
    %3698 = vmatmul.bf16.gmra.mxu0 %v3458
    %v3699 = vpop.f32.mrf.mxu0
    %v3700 = vadd.f32 %v3514, %v3699
    %v3701 = vpop.f32.mrf.mxu0
    %v3702 = vadd.f32 %v3514, %v3701
    %3703 = vmatmul.bf16.gmra.mxu0 %v3461
    %v3704 = vpop.f32.mrf.mxu0
    %v3705 = vadd.f32 %v3514, %v3704
    %v3706 = vpop.f32.mrf.mxu0
    %v3707 = vadd.f32 %v3514, %v3706
    %3708 = vdwg.mxu0
    %3709 = vmatpush.bf16.msra.mxu0 %v3627
    %3710 = vmatpush.bf16.msra.mxu0 %v3626
    %3711 = vmatpush.bf16.msra.mxu0 %v3625
    %3712 = vmatpush.bf16.msra.mxu0 %v3624
    %3713 = vmatpush.bf16.msra.mxu0 %v3623
    %3714 = vmatpush.bf16.msra.mxu0 %v3622
    %3715 = vmatpush.bf16.msra.mxu0 %v3621
    %3716 = vmatpush.bf16.msra.mxu0 %v3620
    %3717 = vmatmul.bf16.gmra.mxu0 %v3441
    %v3718 = vpop.f32.mrf.mxu0
    %v3719 = vadd.f32 %v3670, %v3718
    %v3720 = vpop.f32.mrf.mxu0
    %v3721 = vadd.f32 %v3672, %v3720
    %3722 = vmatmul.bf16.gmra.mxu0 %v3444
    %v3723 = vpop.f32.mrf.mxu0
    %v3724 = vadd.f32 %v3675, %v3723
    %v3725 = vpop.f32.mrf.mxu0
    %v3726 = vadd.f32 %v3677, %v3725
    %3727 = vmatmul.bf16.gmra.mxu0 %v3447
    %v3728 = vpop.f32.mrf.mxu0
    %v3729 = vadd.f32 %v3680, %v3728
    %v3730 = vpop.f32.mrf.mxu0
    %v3731 = vadd.f32 %v3682, %v3730
    %3732 = vmatmul.bf16.gmra.mxu0 %v3450
    %v3733 = vpop.f32.mrf.mxu0
    %v3734 = vadd.f32 %v3685, %v3733
    %v3735 = vpop.f32.mrf.mxu0
    %v3736 = vadd.f32 %v3687, %v3735
    %3737 = vmatmul.bf16.gmra.mxu0 %v3453
    %v3738 = vpop.f32.mrf.mxu0
    %v3739 = vadd.f32 %v3690, %v3738
    %v3740 = vpop.f32.mrf.mxu0
    %v3741 = vadd.f32 %v3692, %v3740
    %3742 = vmatmul.bf16.gmra.mxu0 %v3456
    %v3743 = vpop.f32.mrf.mxu0
    %v3744 = vadd.f32 %v3695, %v3743
    %v3745 = vpop.f32.mrf.mxu0
    %v3746 = vadd.f32 %v3697, %v3745
    %3747 = vmatmul.bf16.gmra.mxu0 %v3459
    %v3748 = vpop.f32.mrf.mxu0
    %v3749 = vadd.f32 %v3700, %v3748
    %v3750 = vpop.f32.mrf.mxu0
    %v3751 = vadd.f32 %v3702, %v3750
    %3752 = vmatmul.bf16.gmra.mxu0 %v3462
    %v3753 = vpop.f32.mrf.mxu0
    %v3754 = vadd.f32 %v3705, %v3753
    %v3755 = vpop.f32.mrf.mxu0
    %v3756 = vadd.f32 %v3707, %v3755
    %3757 = vdwg.mxu0
    %3758 = vmatpush.bf16.msra.mxu0 %v3635
    %3759 = vmatpush.bf16.msra.mxu0 %v3634
    %3760 = vmatpush.bf16.msra.mxu0 %v3633
    %3761 = vmatpush.bf16.msra.mxu0 %v3632
    %3762 = vmatpush.bf16.msra.mxu0 %v3631
    %3763 = vmatpush.bf16.msra.mxu0 %v3630
    %3764 = vmatpush.bf16.msra.mxu0 %v3629
    %3765 = vmatpush.bf16.msra.mxu0 %v3628
    %3766 = vmatmul.bf16.gmra.mxu0 %v3442
    %v3767 = vpop.f32.mrf.mxu0
    %v3768 = vadd.f32 %v3719, %v3767
    %v3769 = vpop.f32.mrf.mxu0
    %v3770 = vadd.f32 %v3721, %v3769
    %3771 = vmatmul.bf16.gmra.mxu0 %v3445
    %v3772 = vpop.f32.mrf.mxu0
    %v3773 = vadd.f32 %v3724, %v3772
    %v3774 = vpop.f32.mrf.mxu0
    %v3775 = vadd.f32 %v3726, %v3774
    %3776 = vmatmul.bf16.gmra.mxu0 %v3448
    %v3777 = vpop.f32.mrf.mxu0
    %v3778 = vadd.f32 %v3729, %v3777
    %v3779 = vpop.f32.mrf.mxu0
    %v3780 = vadd.f32 %v3731, %v3779
    %3781 = vmatmul.bf16.gmra.mxu0 %v3451
    %v3782 = vpop.f32.mrf.mxu0
    %v3783 = vadd.f32 %v3734, %v3782
    %v3784 = vpop.f32.mrf.mxu0
    %v3785 = vadd.f32 %v3736, %v3784
    %3786 = vmatmul.bf16.gmra.mxu0 %v3454
    %v3787 = vpop.f32.mrf.mxu0
    %v3788 = vadd.f32 %v3739, %v3787
    %v3789 = vpop.f32.mrf.mxu0
    %v3790 = vadd.f32 %v3741, %v3789
    %3791 = vmatmul.bf16.gmra.mxu0 %v3457
    %v3792 = vpop.f32.mrf.mxu0
    %v3793 = vadd.f32 %v3744, %v3792
    %v3794 = vpop.f32.mrf.mxu0
    %v3795 = vadd.f32 %v3746, %v3794
    %3796 = vmatmul.bf16.gmra.mxu0 %v3460
    %v3797 = vpop.f32.mrf.mxu0
    %v3798 = vadd.f32 %v3749, %v3797
    %v3799 = vpop.f32.mrf.mxu0
    %v3800 = vadd.f32 %v3751, %v3799
    %3801 = vmatmul.bf16.gmra.mxu0 %v3463
    %v3802 = vpop.f32.mrf.mxu0
    %v3803 = vadd.f32 %v3754, %v3802
    %v3804 = vpop.f32.mrf.mxu0
    %v3805 = vadd.f32 %v3756, %v3804
    %3806 = vdwg.mxu0
    %v3807 = vmax.f32 %v3768, 0.0
    %v3808 = vmax.f32 %v3770, 0.0
    %v3809 = vmax.f32 %v3773, 0.0
    %v3810 = vmax.f32 %v3775, 0.0
    %v3811 = vmax.f32 %v3778, 0.0
    %v3812 = vmax.f32 %v3780, 0.0
    %v3813 = vmax.f32 %v3783, 0.0
    %v3814 = vmax.f32 %v3785, 0.0
    %v3815 = vmax.f32 %v3788, 0.0
    %v3816 = vmax.f32 %v3790, 0.0
    %v3817 = vmax.f32 %v3793, 0.0
    %v3818 = vmax.f32 %v3795, 0.0
    %v3819 = vmax.f32 %v3798, 0.0
    %v3820 = vmax.f32 %v3800, 0.0
    %v3821 = vmax.f32 %v3803, 0.0
    %v3822 = vmax.f32 %v3805, 0.0
    %v3823 = vadd.f32 %v3807, %v3321
    %v3824 = vadd.f32 %v3808, %v3323
    %v3825 = vadd.f32 %v3809, %v3326
    %v3826 = vadd.f32 %v3810, %v3328
    %v3827 = vadd.f32 %v3811, %v3331
    %v3828 = vadd.f32 %v3812, %v3333
    %v3829 = vadd.f32 %v3813, %v3336
    %v3830 = vadd.f32 %v3814, %v3338
    %v3831 = vadd.f32 %v3815, %v3341
    %v3832 = vadd.f32 %v3816, %v3343
    %v3833 = vadd.f32 %v3817, %v3346
    %v3834 = vadd.f32 %v3818, %v3348
    %v3835 = vadd.f32 %v3819, %v3351
    %v3836 = vadd.f32 %v3820, %v3353
    %v3837 = vadd.f32 %v3821, %v3356
    %v3838 = vadd.f32 %v3822, %v3358
    %v3839 = vmax.f32 %v3823, 0.0
    %v3840 = vmax.f32 %v3824, 0.0
    %v3841 = vmax.f32 %v3825, 0.0
    %v3842 = vmax.f32 %v3826, 0.0
    %v3843 = vmax.f32 %v3827, 0.0
    %v3844 = vmax.f32 %v3828, 0.0
    %v3845 = vmax.f32 %v3829, 0.0
    %v3846 = vmax.f32 %v3830, 0.0
    %v3847 = vmax.f32 %v3831, 0.0
    %v3848 = vmax.f32 %v3832, 0.0
    %v3849 = vmax.f32 %v3833, 0.0
    %v3850 = vmax.f32 %v3834, 0.0
    %v3851 = vmax.f32 %v3835, 0.0
    %v3852 = vmax.f32 %v3836, 0.0
    %v3853 = vmax.f32 %v3837, 0.0
    %v3854 = vmax.f32 %v3838, 0.0
    %v3855 = vsel %vm264, 1, 0
    %v3856 = vsel %vm265, 1, 0
    %v3857 = vsel %vm266, 1, 0
    %v3858 = vsel %vm267, 1, 0
    %v3859 = vsel %vm268, 1, 0
    %v3860 = vsel %vm269, 1, 0
    %v3861 = vsel %vm270, 1, 0
    %v3862 = vsel %vm271, 1, 0
    %3863 = vset.pattern.permute.xlu0 0
    %3864 = vperm.xlu0 %3863, %v3855
    %v3865 = vpop.permute.xlu0 %3864
    %3866 = vset.pattern.permute.xlu0 0
    %3867 = vperm.xlu0 %3866, %v3856
    %v3868 = vpop.permute.xlu0 %3867
    %3869 = vset.pattern.permute.xlu0 0
    %3870 = vperm.xlu0 %3869, %v3857
    %v3871 = vpop.permute.xlu0 %3870
    %3872 = vset.pattern.permute.xlu0 0
    %3873 = vperm.xlu0 %3872, %v3858
    %v3874 = vpop.permute.xlu0 %3873
    %3875 = vset.pattern.permute.xlu0 0
    %3876 = vperm.xlu0 %3875, %v3859
    %v3877 = vpop.permute.xlu0 %3876
    %3878 = vset.pattern.permute.xlu0 0
    %3879 = vperm.xlu0 %3878, %v3860
    %v3880 = vpop.permute.xlu0 %3879
    %3881 = vset.pattern.permute.xlu0 0
    %3882 = vperm.xlu0 %3881, %v3861
    %v3883 = vpop.permute.xlu0 %3882
    %3884 = vset.pattern.permute.xlu0 0
    %3885 = vperm.xlu0 %3884, %v3862
    %v3886 = vpop.permute.xlu0 %3885
    %vm3887 = vcmp.eq.s32.totalorder %v3865, 1
    %vm3888 = vcmp.eq.s32.totalorder %v3868, 1
    %vm3889 = vcmp.eq.s32.totalorder %v3871, 1
    %vm3890 = vcmp.eq.s32.totalorder %v3874, 1
    %vm3891 = vcmp.eq.s32.totalorder %v3877, 1
    %vm3892 = vcmp.eq.s32.totalorder %v3880, 1
    %vm3893 = vcmp.eq.s32.totalorder %v3883, 1
    %vm3894 = vcmp.eq.s32.totalorder %v3886, 1
    %v3895 = vsel %vm3887, %v3853, 0.0
    %v3896 = vsel %vm3888, %v3854, 0.0
    %v3897 = vsel %vm3889, %v3839, 0.0
    %v3898 = vsel %vm3890, %v3840, 0.0
    %v3899 = vsel %vm3891, %v3841, 0.0
    %v3900 = vsel %vm3892, %v3842, 0.0
    %v3901 = vsel %vm3893, %v3843, 0.0
    %v3902 = vsel %vm3894, %v3844, 0.0
    %v3903 = vsel %vm3887, %v3845, 0.0
    %v3904 = vsel %vm3888, %v3846, 0.0
    %v3905 = vsel %vm3889, %v3847, 0.0
    %v3906 = vsel %vm3890, %v3848, 0.0
    %v3907 = vsel %vm3891, %v3849, 0.0
    %v3908 = vsel %vm3892, %v3850, 0.0
    %v3909 = vsel %vm3893, %v3851, 0.0
    %v3910 = vsel %vm3894, %v3852, 0.0
    %v3911 = vsel %vm2676, %v3854, 0.0
    %v3912 = vsel %vm2677, %v3839, 0.0
    %v3913 = vsel %vm2678, %v3840, 0.0
    %v3914 = vsel %vm2679, %v3841, 0.0
    %v3915 = vsel %vm2680, %v3842, 0.0
    %v3916 = vsel %vm2681, %v3843, 0.0
    %v3917 = vsel %vm2682, %v3844, 0.0
    %v3918 = vsel %vm2683, %v3845, 0.0
    %v3919 = vsel %vm2676, %v3846, 0.0
    %v3920 = vsel %vm2677, %v3847, 0.0
    %v3921 = vsel %vm2678, %v3848, 0.0
    %v3922 = vsel %vm2679, %v3849, 0.0
    %v3923 = vsel %vm2680, %v3850, 0.0
    %v3924 = vsel %vm2681, %v3851, 0.0
    %v3925 = vsel %vm2682, %v3852, 0.0
    %v3926 = vsel %vm2683, %v3853, 0.0
    %v3927 = vpack.c.bf16 %v3896, %v3895
    %v3928 = vpack.c.bf16 %v3912, %v3911
    %v3929 = vpack.c.bf16 %v3840, %v3839
    %v3930 = vpack.c.bf16 %v3898, %v3897
    %v3931 = vpack.c.bf16 %v3914, %v3913
    %v3932 = vpack.c.bf16 %v3842, %v3841
    %v3933 = vpack.c.bf16 %v3900, %v3899
    %v3934 = vpack.c.bf16 %v3916, %v3915
    %v3935 = vpack.c.bf16 %v3844, %v3843
    %v3936 = vpack.c.bf16 %v3902, %v3901
    %v3937 = vpack.c.bf16 %v3918, %v3917
    %v3938 = vpack.c.bf16 %v3846, %v3845
    %v3939 = vpack.c.bf16 %v3904, %v3903
    %v3940 = vpack.c.bf16 %v3920, %v3919
    %v3941 = vpack.c.bf16 %v3848, %v3847
    %v3942 = vpack.c.bf16 %v3906, %v3905
    %v3943 = vpack.c.bf16 %v3922, %v3921
    %v3944 = vpack.c.bf16 %v3850, %v3849
    %v3945 = vpack.c.bf16 %v3908, %v3907
    %v3946 = vpack.c.bf16 %v3924, %v3923
    %v3947 = vpack.c.bf16 %v3852, %v3851
    %v3948 = vpack.c.bf16 %v3910, %v3909
    %v3949 = vpack.c.bf16 %v3926, %v3925
    %v3950 = vpack.c.bf16 %v3854, %v3853
    %v3951 = vld [vmem:[#allocation7] sm:$0xf]
    %v3952 = vld [vmem:[#allocation7 + $0x4] sm:$0xf]
    %v3953 = vld [vmem:[#allocation7 + $0x8] sm:$0xf]
    %v3954 = vld [vmem:[#allocation7 + $0xc] sm:$0xf]
    %v3955 = vld [vmem:[#allocation7 + $0x10] sm:$0xf]
    %v3956 = vld [vmem:[#allocation7 + $0x14] sm:$0xf]
    %v3957 = vld [vmem:[#allocation7 + $0x18] sm:$0xf]
    %v3958 = vld [vmem:[#allocation7 + $0x1c] sm:$0xf]
    %v3959 = vld [vmem:[#allocation7 + $0x20] sm:$0xf]
    %v3960 = vld [vmem:[#allocation7 + $0x24] sm:$0xf]
    %v3961 = vld [vmem:[#allocation7 + $0x28] sm:$0xf]
    %v3962 = vld [vmem:[#allocation7 + $0x2c] sm:$0xf]
    %v3963 = vld [vmem:[#allocation7 + $0x30] sm:$0xf]
    %v3964 = vld [vmem:[#allocation7 + $0x34] sm:$0xf]
    %v3965 = vld [vmem:[#allocation7 + $0x38] sm:$0xf]
    %v3966 = vld [vmem:[#allocation7 + $0x3c] sm:$0xf]
    %v3967 = vld [vmem:[#allocation7 + $0x40] sm:$0xf]
    %v3968 = vld [vmem:[#allocation7 + $0x44] sm:$0xf]
    %v3969 = vld [vmem:[#allocation7 + $0x48] sm:$0xf]
    %v3970 = vld [vmem:[#allocation7 + $0x4c] sm:$0xf]
    %v3971 = vld [vmem:[#allocation7 + $0x50] sm:$0xf]
    %v3972 = vld [vmem:[#allocation7 + $0x54] sm:$0xf]
    %v3973 = vld [vmem:[#allocation7 + $0x58] sm:$0xf]
    %v3974 = vld [vmem:[#allocation7 + $0x5c] sm:$0xf]
    %v3975 = vld [vmem:[#allocation7 + $0x60] sm:$0xf]
    %v3976 = vld [vmem:[#allocation7 + $0x64] sm:$0xf]
    %v3977 = vld [vmem:[#allocation7 + $0x68] sm:$0xf]
    %v3978 = vld [vmem:[#allocation7 + $0x6c] sm:$0xf]
    %v3979 = vld [vmem:[#allocation7 + $0x70] sm:$0xf]
    %v3980 = vld [vmem:[#allocation7 + $0x74] sm:$0xf]
    %v3981 = vld [vmem:[#allocation7 + $0x78] sm:$0xf]
    %v3982 = vld [vmem:[#allocation7 + $0x7c] sm:$0xf]
    %v3983 = vld [vmem:[#allocation7 + $0x80] sm:$0xf]
    %v3984 = vld [vmem:[#allocation7 + $0x84] sm:$0xf]
    %v3985 = vld [vmem:[#allocation7 + $0x88] sm:$0xf]
    %v3986 = vld [vmem:[#allocation7 + $0x8c] sm:$0xf]
    %v3987 = vld [vmem:[#allocation7 + $0x90] sm:$0xf]
    %v3988 = vld [vmem:[#allocation7 + $0x94] sm:$0xf]
    %v3989 = vld [vmem:[#allocation7 + $0x98] sm:$0xf]
    %v3990 = vld [vmem:[#allocation7 + $0x9c] sm:$0xf]
    %v3991 = vld [vmem:[#allocation7 + $0xa0] sm:$0xf]
    %v3992 = vld [vmem:[#allocation7 + $0xa4] sm:$0xf]
    %v3993 = vld [vmem:[#allocation7 + $0xa8] sm:$0xf]
    %v3994 = vld [vmem:[#allocation7 + $0xac] sm:$0xf]
    %v3995 = vld [vmem:[#allocation7 + $0xb0] sm:$0xf]
    %v3996 = vld [vmem:[#allocation7 + $0xb4] sm:$0xf]
    %v3997 = vld [vmem:[#allocation7 + $0xb8] sm:$0xf]
    %v3998 = vld [vmem:[#allocation7 + $0xbc] sm:$0xf]
    %v3999 = vld [vmem:[%s15] sm:$0x1]
    %v4001 = vperm.slane %v3999, 0
    %v4051 = vunpack.c.l.b16 %v3951
    %v4052 = vunpack.c.l.b16 %v3952
    %v4053 = vunpack.c.l.b16 %v3953
    %v4054 = vunpack.c.l.b16 %v3954
    %v4055 = vunpack.c.l.b16 %v3955
    %v4056 = vunpack.c.l.b16 %v3956
    %v4057 = vunpack.c.l.b16 %v3957
    %v4058 = vunpack.c.l.b16 %v3958
    %v4059 = vunpack.c.l.b16 %v3959
    %v4060 = vunpack.c.l.b16 %v3960
    %v4061 = vunpack.c.l.b16 %v3961
    %v4062 = vunpack.c.l.b16 %v3962
    %v4063 = vunpack.c.l.b16 %v3963
    %v4064 = vunpack.c.l.b16 %v3964
    %v4065 = vunpack.c.l.b16 %v3965
    %v4066 = vunpack.c.l.b16 %v3966
    %v4067 = vunpack.c.l.b16 %v3967
    %v4068 = vunpack.c.l.b16 %v3968
    %v4069 = vunpack.c.l.b16 %v3969
    %v4070 = vunpack.c.l.b16 %v3970
    %v4071 = vunpack.c.l.b16 %v3971
    %v4072 = vunpack.c.l.b16 %v3972
    %v4073 = vunpack.c.l.b16 %v3973
    %v4074 = vunpack.c.l.b16 %v3974
    %v4075 = vunpack.c.l.b16 %v3975
    %v4076 = vunpack.c.l.b16 %v3976
    %v4077 = vunpack.c.l.b16 %v3977
    %v4078 = vunpack.c.l.b16 %v3978
    %v4079 = vunpack.c.l.b16 %v3979
    %v4080 = vunpack.c.l.b16 %v3980
    %v4081 = vunpack.c.l.b16 %v3981
    %v4082 = vunpack.c.l.b16 %v3982
    %v4083 = vunpack.c.l.b16 %v3983
    %v4084 = vunpack.c.l.b16 %v3984
    %v4085 = vunpack.c.l.b16 %v3985
    %v4086 = vunpack.c.l.b16 %v3986
    %v4087 = vunpack.c.l.b16 %v3987
    %v4088 = vunpack.c.l.b16 %v3988
    %v4089 = vunpack.c.l.b16 %v3989
    %v4090 = vunpack.c.l.b16 %v3990
    %v4091 = vunpack.c.l.b16 %v3991
    %v4092 = vunpack.c.l.b16 %v3992
    %v4093 = vunpack.c.l.b16 %v3993
    %v4094 = vunpack.c.l.b16 %v3994
    %v4095 = vunpack.c.l.b16 %v3995
    %v4096 = vunpack.c.l.b16 %v3996
    %v4097 = vunpack.c.l.b16 %v3997
    %v4098 = vunpack.c.l.b16 %v3998
    %v4099 = vpack.c.b16 %v4052, %v4051
    %v4100 = vpack.c.b16 %v4054, %v4053
    %v4101 = vpack.c.b16 %v4056, %v4055
    %v4102 = vpack.c.b16 %v4058, %v4057
    %v4103 = vpack.c.b16 %v4060, %v4059
    %v4104 = vpack.c.b16 %v4062, %v4061
    %v4105 = vpack.c.b16 %v4064, %v4063
    %v4106 = vpack.c.b16 %v4066, %v4065
    %v4107 = vpack.c.b16 %v4068, %v4067
    %v4108 = vpack.c.b16 %v4070, %v4069
    %v4109 = vpack.c.b16 %v4072, %v4071
    %v4110 = vpack.c.b16 %v4074, %v4073
    %v4111 = vpack.c.b16 %v4076, %v4075
    %v4112 = vpack.c.b16 %v4078, %v4077
    %v4113 = vpack.c.b16 %v4080, %v4079
    %v4114 = vpack.c.b16 %v4082, %v4081
    %v4115 = vpack.c.b16 %v4084, %v4083
    %v4116 = vpack.c.b16 %v4086, %v4085
    %v4117 = vpack.c.b16 %v4088, %v4087
    %v4118 = vpack.c.b16 %v4090, %v4089
    %v4119 = vpack.c.b16 %v4092, %v4091
    %v4120 = vpack.c.b16 %v4094, %v4093
    %v4121 = vpack.c.b16 %v4096, %v4095
    %v4122 = vpack.c.b16 %v4098, %v4097
    %4147 = vmatpush.bf16.msra.mxu0 %v4106
    %4148 = vmatpush.bf16.msra.mxu0 %v4105
    %4149 = vmatpush.bf16.msra.mxu0 %v4104
    %4150 = vmatpush.bf16.msra.mxu0 %v4103
    %4151 = vmatpush.bf16.msra.mxu0 %v4102
    %4152 = vmatpush.bf16.msra.mxu0 %v4101
    %4153 = vmatpush.bf16.msra.mxu0 %v4100
    %4154 = vmatpush.bf16.msra.mxu0 %v4099
    %4155 = vmatmul.bf16.gmra.mxu0 %v3927
    %v4156 = vpop.f32.mrf.mxu0
    %v4157 = vadd.f32 %v4001, %v4156
    %v4158 = vpop.f32.mrf.mxu0
    %v4159 = vadd.f32 %v4001, %v4158
    %4160 = vmatmul.bf16.gmra.mxu0 %v3930
    %v4161 = vpop.f32.mrf.mxu0
    %v4162 = vadd.f32 %v4001, %v4161
    %v4163 = vpop.f32.mrf.mxu0
    %v4164 = vadd.f32 %v4001, %v4163
    %4165 = vmatmul.bf16.gmra.mxu0 %v3933
    %v4166 = vpop.f32.mrf.mxu0
    %v4167 = vadd.f32 %v4001, %v4166
    %v4168 = vpop.f32.mrf.mxu0
    %v4169 = vadd.f32 %v4001, %v4168
    %4170 = vmatmul.bf16.gmra.mxu0 %v3936
    %v4171 = vpop.f32.mrf.mxu0
    %v4172 = vadd.f32 %v4001, %v4171
    %v4173 = vpop.f32.mrf.mxu0
    %v4174 = vadd.f32 %v4001, %v4173
    %4175 = vmatmul.bf16.gmra.mxu0 %v3939
    %v4176 = vpop.f32.mrf.mxu0
    %v4177 = vadd.f32 %v4001, %v4176
    %v4178 = vpop.f32.mrf.mxu0
    %v4179 = vadd.f32 %v4001, %v4178
    %4180 = vmatmul.bf16.gmra.mxu0 %v3942
    %v4181 = vpop.f32.mrf.mxu0
    %v4182 = vadd.f32 %v4001, %v4181
    %v4183 = vpop.f32.mrf.mxu0
    %v4184 = vadd.f32 %v4001, %v4183
    %4185 = vmatmul.bf16.gmra.mxu0 %v3945
    %v4186 = vpop.f32.mrf.mxu0
    %v4187 = vadd.f32 %v4001, %v4186
    %v4188 = vpop.f32.mrf.mxu0
    %v4189 = vadd.f32 %v4001, %v4188
    %4190 = vmatmul.bf16.gmra.mxu0 %v3948
    %v4191 = vpop.f32.mrf.mxu0
    %v4192 = vadd.f32 %v4001, %v4191
    %v4193 = vpop.f32.mrf.mxu0
    %v4194 = vadd.f32 %v4001, %v4193
    %4195 = vdwg.mxu0
    %4196 = vmatpush.bf16.msra.mxu0 %v4114
    %4197 = vmatpush.bf16.msra.mxu0 %v4113
    %4198 = vmatpush.bf16.msra.mxu0 %v4112
    %4199 = vmatpush.bf16.msra.mxu0 %v4111
    %4200 = vmatpush.bf16.msra.mxu0 %v4110
    %4201 = vmatpush.bf16.msra.mxu0 %v4109
    %4202 = vmatpush.bf16.msra.mxu0 %v4108
    %4203 = vmatpush.bf16.msra.mxu0 %v4107
    %4204 = vmatmul.bf16.gmra.mxu0 %v3928
    %v4205 = vpop.f32.mrf.mxu0
    %v4206 = vadd.f32 %v4157, %v4205
    %v4207 = vpop.f32.mrf.mxu0
    %v4208 = vadd.f32 %v4159, %v4207
    %4209 = vmatmul.bf16.gmra.mxu0 %v3931
    %v4210 = vpop.f32.mrf.mxu0
    %v4211 = vadd.f32 %v4162, %v4210
    %v4212 = vpop.f32.mrf.mxu0
    %v4213 = vadd.f32 %v4164, %v4212
    %4214 = vmatmul.bf16.gmra.mxu0 %v3934
    %v4215 = vpop.f32.mrf.mxu0
    %v4216 = vadd.f32 %v4167, %v4215
    %v4217 = vpop.f32.mrf.mxu0
    %v4218 = vadd.f32 %v4169, %v4217
    %4219 = vmatmul.bf16.gmra.mxu0 %v3937
    %v4220 = vpop.f32.mrf.mxu0
    %v4221 = vadd.f32 %v4172, %v4220
    %v4222 = vpop.f32.mrf.mxu0
    %v4223 = vadd.f32 %v4174, %v4222
    %4224 = vmatmul.bf16.gmra.mxu0 %v3940
    %v4225 = vpop.f32.mrf.mxu0
    %v4226 = vadd.f32 %v4177, %v4225
    %v4227 = vpop.f32.mrf.mxu0
    %v4228 = vadd.f32 %v4179, %v4227
    %4229 = vmatmul.bf16.gmra.mxu0 %v3943
    %v4230 = vpop.f32.mrf.mxu0
    %v4231 = vadd.f32 %v4182, %v4230
    %v4232 = vpop.f32.mrf.mxu0
    %v4233 = vadd.f32 %v4184, %v4232
    %4234 = vmatmul.bf16.gmra.mxu0 %v3946
    %v4235 = vpop.f32.mrf.mxu0
    %v4236 = vadd.f32 %v4187, %v4235
    %v4237 = vpop.f32.mrf.mxu0
    %v4238 = vadd.f32 %v4189, %v4237
    %4239 = vmatmul.bf16.gmra.mxu0 %v3949
    %v4240 = vpop.f32.mrf.mxu0
    %v4241 = vadd.f32 %v4192, %v4240
    %v4242 = vpop.f32.mrf.mxu0
    %v4243 = vadd.f32 %v4194, %v4242
    %4244 = vdwg.mxu0
    %4245 = vmatpush.bf16.msra.mxu0 %v4122
    %4246 = vmatpush.bf16.msra.mxu0 %v4121
    %4247 = vmatpush.bf16.msra.mxu0 %v4120
    %4248 = vmatpush.bf16.msra.mxu0 %v4119
    %4249 = vmatpush.bf16.msra.mxu0 %v4118
    %4250 = vmatpush.bf16.msra.mxu0 %v4117
    %4251 = vmatpush.bf16.msra.mxu0 %v4116
    %4252 = vmatpush.bf16.msra.mxu0 %v4115
    %4253 = vmatmul.bf16.gmra.mxu0 %v3929
    %v4254 = vpop.f32.mrf.mxu0
    %v4255 = vadd.f32 %v4206, %v4254
    %v4256 = vpop.f32.mrf.mxu0
    %v4257 = vadd.f32 %v4208, %v4256
    %4258 = vmatmul.bf16.gmra.mxu0 %v3932
    %v4259 = vpop.f32.mrf.mxu0
    %v4260 = vadd.f32 %v4211, %v4259
    %v4261 = vpop.f32.mrf.mxu0
    %v4262 = vadd.f32 %v4213, %v4261
    %4263 = vmatmul.bf16.gmra.mxu0 %v3935
    %v4264 = vpop.f32.mrf.mxu0
    %v4265 = vadd.f32 %v4216, %v4264
    %v4266 = vpop.f32.mrf.mxu0
    %v4267 = vadd.f32 %v4218, %v4266
    %4268 = vmatmul.bf16.gmra.mxu0 %v3938
    %v4269 = vpop.f32.mrf.mxu0
    %v4270 = vadd.f32 %v4221, %v4269
    %v4271 = vpop.f32.mrf.mxu0
    %v4272 = vadd.f32 %v4223, %v4271
    %4273 = vmatmul.bf16.gmra.mxu0 %v3941
    %v4274 = vpop.f32.mrf.mxu0
    %v4275 = vadd.f32 %v4226, %v4274
    %v4276 = vpop.f32.mrf.mxu0
    %v4277 = vadd.f32 %v4228, %v4276
    %4278 = vmatmul.bf16.gmra.mxu0 %v3944
    %v4279 = vpop.f32.mrf.mxu0
    %v4280 = vadd.f32 %v4231, %v4279
    %v4281 = vpop.f32.mrf.mxu0
    %v4282 = vadd.f32 %v4233, %v4281
    %4283 = vmatmul.bf16.gmra.mxu0 %v3947
    %v4284 = vpop.f32.mrf.mxu0
    %v4285 = vadd.f32 %v4236, %v4284
    %v4286 = vpop.f32.mrf.mxu0
    %v4287 = vadd.f32 %v4238, %v4286
    %4288 = vmatmul.bf16.gmra.mxu0 %v3950
    %v4289 = vpop.f32.mrf.mxu0
    %v4290 = vadd.f32 %v4241, %v4289
    %v4291 = vpop.f32.mrf.mxu0
    %v4292 = vadd.f32 %v4243, %v4291
    %4293 = vdwg.mxu0
    %v4294 = vmax.f32 %v4255, 0.0
    %v4295 = vmax.f32 %v4257, 0.0
    %v4296 = vmax.f32 %v4260, 0.0
    %v4297 = vmax.f32 %v4262, 0.0
    %v4298 = vmax.f32 %v4265, 0.0
    %v4299 = vmax.f32 %v4267, 0.0
    %v4300 = vmax.f32 %v4270, 0.0
    %v4301 = vmax.f32 %v4272, 0.0
    %v4302 = vmax.f32 %v4275, 0.0
    %v4303 = vmax.f32 %v4277, 0.0
    %v4304 = vmax.f32 %v4280, 0.0
    %v4305 = vmax.f32 %v4282, 0.0
    %v4306 = vmax.f32 %v4285, 0.0
    %v4307 = vmax.f32 %v4287, 0.0
    %v4308 = vmax.f32 %v4290, 0.0
    %v4309 = vmax.f32 %v4292, 0.0
    %v4310 = vsel %vm3887, %v4308, 0.0
    %v4311 = vsel %vm3888, %v4309, 0.0
    %v4312 = vsel %vm3889, %v4294, 0.0
    %v4313 = vsel %vm3890, %v4295, 0.0
    %v4314 = vsel %vm3891, %v4296, 0.0
    %v4315 = vsel %vm3892, %v4297, 0.0
    %v4316 = vsel %vm3893, %v4298, 0.0
    %v4317 = vsel %vm3894, %v4299, 0.0
    %v4318 = vsel %vm3887, %v4300, 0.0
    %v4319 = vsel %vm3888, %v4301, 0.0
    %v4320 = vsel %vm3889, %v4302, 0.0
    %v4321 = vsel %vm3890, %v4303, 0.0
    %v4322 = vsel %vm3891, %v4304, 0.0
    %v4323 = vsel %vm3892, %v4305, 0.0
    %v4324 = vsel %vm3893, %v4306, 0.0
    %v4325 = vsel %vm3894, %v4307, 0.0
    %v4326 = vsel %vm2676, %v4309, 0.0
    %v4327 = vsel %vm2677, %v4294, 0.0
    %v4328 = vsel %vm2678, %v4295, 0.0
    %v4329 = vsel %vm2679, %v4296, 0.0
    %v4330 = vsel %vm2680, %v4297, 0.0
    %v4331 = vsel %vm2681, %v4298, 0.0
    %v4332 = vsel %vm2682, %v4299, 0.0
    %v4333 = vsel %vm2683, %v4300, 0.0
    %v4334 = vsel %vm2676, %v4301, 0.0
    %v4335 = vsel %vm2677, %v4302, 0.0
    %v4336 = vsel %vm2678, %v4303, 0.0
    %v4337 = vsel %vm2679, %v4304, 0.0
    %v4338 = vsel %vm2680, %v4305, 0.0
    %v4339 = vsel %vm2681, %v4306, 0.0
    %v4340 = vsel %vm2682, %v4307, 0.0
    %v4341 = vsel %vm2683, %v4308, 0.0
    %v4342 = vpack.c.bf16 %v4311, %v4310
    %v4343 = vpack.c.bf16 %v4327, %v4326
    %v4344 = vpack.c.bf16 %v4295, %v4294
    %v4345 = vpack.c.bf16 %v4313, %v4312
    %v4346 = vpack.c.bf16 %v4329, %v4328
    %v4347 = vpack.c.bf16 %v4297, %v4296
    %v4348 = vpack.c.bf16 %v4315, %v4314
    %v4349 = vpack.c.bf16 %v4331, %v4330
    %v4350 = vpack.c.bf16 %v4299, %v4298
    %v4351 = vpack.c.bf16 %v4317, %v4316
    %v4352 = vpack.c.bf16 %v4333, %v4332
    %v4353 = vpack.c.bf16 %v4301, %v4300
    %v4354 = vpack.c.bf16 %v4319, %v4318
    %v4355 = vpack.c.bf16 %v4335, %v4334
    %v4356 = vpack.c.bf16 %v4303, %v4302
    %v4357 = vpack.c.bf16 %v4321, %v4320
    %v4358 = vpack.c.bf16 %v4337, %v4336
    %v4359 = vpack.c.bf16 %v4305, %v4304
    %v4360 = vpack.c.bf16 %v4323, %v4322
    %v4361 = vpack.c.bf16 %v4339, %v4338
    %v4362 = vpack.c.bf16 %v4307, %v4306
    %v4363 = vpack.c.bf16 %v4325, %v4324
    %v4364 = vpack.c.bf16 %v4341, %v4340
    %v4365 = vpack.c.bf16 %v4309, %v4308
    %v4366 = vld [vmem:[#allocation9] sm:$0xf]
    %v4367 = vld [vmem:[#allocation9 + $0x4] sm:$0xf]
    %v4368 = vld [vmem:[#allocation9 + $0x8] sm:$0xf]
    %v4369 = vld [vmem:[#allocation9 + $0xc] sm:$0xf]
    %v4370 = vld [vmem:[#allocation9 + $0x10] sm:$0xf]
    %v4371 = vld [vmem:[#allocation9 + $0x14] sm:$0xf]
    %v4372 = vld [vmem:[#allocation9 + $0x18] sm:$0xf]
    %v4373 = vld [vmem:[#allocation9 + $0x1c] sm:$0xf]
    %v4374 = vld [vmem:[#allocation9 + $0x20] sm:$0xf]
    %v4375 = vld [vmem:[#allocation9 + $0x24] sm:$0xf]
    %v4376 = vld [vmem:[#allocation9 + $0x28] sm:$0xf]
    %v4377 = vld [vmem:[#allocation9 + $0x2c] sm:$0xf]
    %v4378 = vld [vmem:[#allocation9 + $0x30] sm:$0xf]
    %v4379 = vld [vmem:[#allocation9 + $0x34] sm:$0xf]
    %v4380 = vld [vmem:[#allocation9 + $0x38] sm:$0xf]
    %v4381 = vld [vmem:[#allocation9 + $0x3c] sm:$0xf]
    %v4382 = vld [vmem:[#allocation9 + $0x40] sm:$0xf]
    %v4383 = vld [vmem:[#allocation9 + $0x44] sm:$0xf]
    %v4384 = vld [vmem:[#allocation9 + $0x48] sm:$0xf]
    %v4385 = vld [vmem:[#allocation9 + $0x4c] sm:$0xf]
    %v4386 = vld [vmem:[#allocation9 + $0x50] sm:$0xf]
    %v4387 = vld [vmem:[#allocation9 + $0x54] sm:$0xf]
    %v4388 = vld [vmem:[#allocation9 + $0x58] sm:$0xf]
    %v4389 = vld [vmem:[#allocation9 + $0x5c] sm:$0xf]
    %v4390 = vld [vmem:[#allocation9 + $0x60] sm:$0xf]
    %v4391 = vld [vmem:[#allocation9 + $0x64] sm:$0xf]
    %v4392 = vld [vmem:[#allocation9 + $0x68] sm:$0xf]
    %v4393 = vld [vmem:[#allocation9 + $0x6c] sm:$0xf]
    %v4394 = vld [vmem:[#allocation9 + $0x70] sm:$0xf]
    %v4395 = vld [vmem:[#allocation9 + $0x74] sm:$0xf]
    %v4396 = vld [vmem:[#allocation9 + $0x78] sm:$0xf]
    %v4397 = vld [vmem:[#allocation9 + $0x7c] sm:$0xf]
    %v4398 = vld [vmem:[#allocation9 + $0x80] sm:$0xf]
    %v4399 = vld [vmem:[#allocation9 + $0x84] sm:$0xf]
    %v4400 = vld [vmem:[#allocation9 + $0x88] sm:$0xf]
    %v4401 = vld [vmem:[#allocation9 + $0x8c] sm:$0xf]
    %v4402 = vld [vmem:[#allocation9 + $0x90] sm:$0xf]
    %v4403 = vld [vmem:[#allocation9 + $0x94] sm:$0xf]
    %v4404 = vld [vmem:[#allocation9 + $0x98] sm:$0xf]
    %v4405 = vld [vmem:[#allocation9 + $0x9c] sm:$0xf]
    %v4406 = vld [vmem:[#allocation9 + $0xa0] sm:$0xf]
    %v4407 = vld [vmem:[#allocation9 + $0xa4] sm:$0xf]
    %v4408 = vld [vmem:[#allocation9 + $0xa8] sm:$0xf]
    %v4409 = vld [vmem:[#allocation9 + $0xac] sm:$0xf]
    %v4410 = vld [vmem:[#allocation9 + $0xb0] sm:$0xf]
    %v4411 = vld [vmem:[#allocation9 + $0xb4] sm:$0xf]
    %v4412 = vld [vmem:[#allocation9 + $0xb8] sm:$0xf]
    %v4413 = vld [vmem:[#allocation9 + $0xbc] sm:$0xf]
    %v4414 = vld [vmem:[%s17] sm:$0x1]
    %v4416 = vperm.slane %v4414, 0
    %v4466 = vunpack.c.l.b16 %v4366
    %v4467 = vunpack.c.l.b16 %v4367
    %v4468 = vunpack.c.l.b16 %v4368
    %v4469 = vunpack.c.l.b16 %v4369
    %v4470 = vunpack.c.l.b16 %v4370
    %v4471 = vunpack.c.l.b16 %v4371
    %v4472 = vunpack.c.l.b16 %v4372
    %v4473 = vunpack.c.l.b16 %v4373
    %v4474 = vunpack.c.l.b16 %v4374
    %v4475 = vunpack.c.l.b16 %v4375
    %v4476 = vunpack.c.l.b16 %v4376
    %v4477 = vunpack.c.l.b16 %v4377
    %v4478 = vunpack.c.l.b16 %v4378
    %v4479 = vunpack.c.l.b16 %v4379
    %v4480 = vunpack.c.l.b16 %v4380
    %v4481 = vunpack.c.l.b16 %v4381
    %v4482 = vunpack.c.l.b16 %v4382
    %v4483 = vunpack.c.l.b16 %v4383
    %v4484 = vunpack.c.l.b16 %v4384
    %v4485 = vunpack.c.l.b16 %v4385
    %v4486 = vunpack.c.l.b16 %v4386
    %v4487 = vunpack.c.l.b16 %v4387
    %v4488 = vunpack.c.l.b16 %v4388
    %v4489 = vunpack.c.l.b16 %v4389
    %v4490 = vunpack.c.l.b16 %v4390
    %v4491 = vunpack.c.l.b16 %v4391
    %v4492 = vunpack.c.l.b16 %v4392
    %v4493 = vunpack.c.l.b16 %v4393
    %v4494 = vunpack.c.l.b16 %v4394
    %v4495 = vunpack.c.l.b16 %v4395
    %v4496 = vunpack.c.l.b16 %v4396
    %v4497 = vunpack.c.l.b16 %v4397
    %v4498 = vunpack.c.l.b16 %v4398
    %v4499 = vunpack.c.l.b16 %v4399
    %v4500 = vunpack.c.l.b16 %v4400
    %v4501 = vunpack.c.l.b16 %v4401
    %v4502 = vunpack.c.l.b16 %v4402
    %v4503 = vunpack.c.l.b16 %v4403
    %v4504 = vunpack.c.l.b16 %v4404
    %v4505 = vunpack.c.l.b16 %v4405
    %v4506 = vunpack.c.l.b16 %v4406
    %v4507 = vunpack.c.l.b16 %v4407
    %v4508 = vunpack.c.l.b16 %v4408
    %v4509 = vunpack.c.l.b16 %v4409
    %v4510 = vunpack.c.l.b16 %v4410
    %v4511 = vunpack.c.l.b16 %v4411
    %v4512 = vunpack.c.l.b16 %v4412
    %v4513 = vunpack.c.l.b16 %v4413
    %v4514 = vpack.c.b16 %v4467, %v4466
    %v4515 = vpack.c.b16 %v4469, %v4468
    %v4516 = vpack.c.b16 %v4471, %v4470
    %v4517 = vpack.c.b16 %v4473, %v4472
    %v4518 = vpack.c.b16 %v4475, %v4474
    %v4519 = vpack.c.b16 %v4477, %v4476
    %v4520 = vpack.c.b16 %v4479, %v4478
    %v4521 = vpack.c.b16 %v4481, %v4480
    %v4522 = vpack.c.b16 %v4483, %v4482
    %v4523 = vpack.c.b16 %v4485, %v4484
    %v4524 = vpack.c.b16 %v4487, %v4486
    %v4525 = vpack.c.b16 %v4489, %v4488
    %v4526 = vpack.c.b16 %v4491, %v4490
    %v4527 = vpack.c.b16 %v4493, %v4492
    %v4528 = vpack.c.b16 %v4495, %v4494
    %v4529 = vpack.c.b16 %v4497, %v4496
    %v4530 = vpack.c.b16 %v4499, %v4498
    %v4531 = vpack.c.b16 %v4501, %v4500
    %v4532 = vpack.c.b16 %v4503, %v4502
    %v4533 = vpack.c.b16 %v4505, %v4504
    %v4534 = vpack.c.b16 %v4507, %v4506
    %v4535 = vpack.c.b16 %v4509, %v4508
    %v4536 = vpack.c.b16 %v4511, %v4510
    %v4537 = vpack.c.b16 %v4513, %v4512
    %4562 = vmatpush.bf16.msra.mxu0 %v4521
    %4563 = vmatpush.bf16.msra.mxu0 %v4520
    %4564 = vmatpush.bf16.msra.mxu0 %v4519
    %4565 = vmatpush.bf16.msra.mxu0 %v4518
    %4566 = vmatpush.bf16.msra.mxu0 %v4517
    %4567 = vmatpush.bf16.msra.mxu0 %v4516
    %4568 = vmatpush.bf16.msra.mxu0 %v4515
    %4569 = vmatpush.bf16.msra.mxu0 %v4514
    %4570 = vmatmul.bf16.gmra.mxu0 %v4342
    %v4571 = vpop.f32.mrf.mxu0
    %v4572 = vadd.f32 %v4416, %v4571
    %v4573 = vpop.f32.mrf.mxu0
    %v4574 = vadd.f32 %v4416, %v4573
    %4575 = vmatmul.bf16.gmra.mxu0 %v4345
    %v4576 = vpop.f32.mrf.mxu0
    %v4577 = vadd.f32 %v4416, %v4576
    %v4578 = vpop.f32.mrf.mxu0
    %v4579 = vadd.f32 %v4416, %v4578
    %4580 = vmatmul.bf16.gmra.mxu0 %v4348
    %v4581 = vpop.f32.mrf.mxu0
    %v4582 = vadd.f32 %v4416, %v4581
    %v4583 = vpop.f32.mrf.mxu0
    %v4584 = vadd.f32 %v4416, %v4583
    %4585 = vmatmul.bf16.gmra.mxu0 %v4351
    %v4586 = vpop.f32.mrf.mxu0
    %v4587 = vadd.f32 %v4416, %v4586
    %v4588 = vpop.f32.mrf.mxu0
    %v4589 = vadd.f32 %v4416, %v4588
    %4590 = vmatmul.bf16.gmra.mxu0 %v4354
    %v4591 = vpop.f32.mrf.mxu0
    %v4592 = vadd.f32 %v4416, %v4591
    %v4593 = vpop.f32.mrf.mxu0
    %v4594 = vadd.f32 %v4416, %v4593
    %4595 = vmatmul.bf16.gmra.mxu0 %v4357
    %v4596 = vpop.f32.mrf.mxu0
    %v4597 = vadd.f32 %v4416, %v4596
    %v4598 = vpop.f32.mrf.mxu0
    %v4599 = vadd.f32 %v4416, %v4598
    %4600 = vmatmul.bf16.gmra.mxu0 %v4360
    %v4601 = vpop.f32.mrf.mxu0
    %v4602 = vadd.f32 %v4416, %v4601
    %v4603 = vpop.f32.mrf.mxu0
    %v4604 = vadd.f32 %v4416, %v4603
    %4605 = vmatmul.bf16.gmra.mxu0 %v4363
    %v4606 = vpop.f32.mrf.mxu0
    %v4607 = vadd.f32 %v4416, %v4606
    %v4608 = vpop.f32.mrf.mxu0
    %v4609 = vadd.f32 %v4416, %v4608
    %4610 = vdwg.mxu0
    %4611 = vmatpush.bf16.msra.mxu0 %v4529
    %4612 = vmatpush.bf16.msra.mxu0 %v4528
    %4613 = vmatpush.bf16.msra.mxu0 %v4527
    %4614 = vmatpush.bf16.msra.mxu0 %v4526
    %4615 = vmatpush.bf16.msra.mxu0 %v4525
    %4616 = vmatpush.bf16.msra.mxu0 %v4524
    %4617 = vmatpush.bf16.msra.mxu0 %v4523
    %4618 = vmatpush.bf16.msra.mxu0 %v4522
    %4619 = vmatmul.bf16.gmra.mxu0 %v4343
    %v4620 = vpop.f32.mrf.mxu0
    %v4621 = vadd.f32 %v4572, %v4620
    %v4622 = vpop.f32.mrf.mxu0
    %v4623 = vadd.f32 %v4574, %v4622
    %4624 = vmatmul.bf16.gmra.mxu0 %v4346
    %v4625 = vpop.f32.mrf.mxu0
    %v4626 = vadd.f32 %v4577, %v4625
    %v4627 = vpop.f32.mrf.mxu0
    %v4628 = vadd.f32 %v4579, %v4627
    %4629 = vmatmul.bf16.gmra.mxu0 %v4349
    %v4630 = vpop.f32.mrf.mxu0
    %v4631 = vadd.f32 %v4582, %v4630
    %v4632 = vpop.f32.mrf.mxu0
    %v4633 = vadd.f32 %v4584, %v4632
    %4634 = vmatmul.bf16.gmra.mxu0 %v4352
    %v4635 = vpop.f32.mrf.mxu0
    %v4636 = vadd.f32 %v4587, %v4635
    %v4637 = vpop.f32.mrf.mxu0
    %v4638 = vadd.f32 %v4589, %v4637
    %4639 = vmatmul.bf16.gmra.mxu0 %v4355
    %v4640 = vpop.f32.mrf.mxu0
    %v4641 = vadd.f32 %v4592, %v4640
    %v4642 = vpop.f32.mrf.mxu0
    %v4643 = vadd.f32 %v4594, %v4642
    %4644 = vmatmul.bf16.gmra.mxu0 %v4358
    %v4645 = vpop.f32.mrf.mxu0
    %v4646 = vadd.f32 %v4597, %v4645
    %v4647 = vpop.f32.mrf.mxu0
    %v4648 = vadd.f32 %v4599, %v4647
    %4649 = vmatmul.bf16.gmra.mxu0 %v4361
    %v4650 = vpop.f32.mrf.mxu0
    %v4651 = vadd.f32 %v4602, %v4650
    %v4652 = vpop.f32.mrf.mxu0
    %v4653 = vadd.f32 %v4604, %v4652
    %4654 = vmatmul.bf16.gmra.mxu0 %v4364
    %v4655 = vpop.f32.mrf.mxu0
    %v4656 = vadd.f32 %v4607, %v4655
    %v4657 = vpop.f32.mrf.mxu0
    %v4658 = vadd.f32 %v4609, %v4657
    %4659 = vdwg.mxu0
    %4660 = vmatpush.bf16.msra.mxu0 %v4537
    %4661 = vmatpush.bf16.msra.mxu0 %v4536
    %4662 = vmatpush.bf16.msra.mxu0 %v4535
    %4663 = vmatpush.bf16.msra.mxu0 %v4534
    %4664 = vmatpush.bf16.msra.mxu0 %v4533
    %4665 = vmatpush.bf16.msra.mxu0 %v4532
    %4666 = vmatpush.bf16.msra.mxu0 %v4531
    %4667 = vmatpush.bf16.msra.mxu0 %v4530
    %4668 = vmatmul.bf16.gmra.mxu0 %v4344
    %v4669 = vpop.f32.mrf.mxu0
    %v4670 = vadd.f32 %v4621, %v4669
    %v4671 = vpop.f32.mrf.mxu0
    %v4672 = vadd.f32 %v4623, %v4671
    %4673 = vmatmul.bf16.gmra.mxu0 %v4347
    %v4674 = vpop.f32.mrf.mxu0
    %v4675 = vadd.f32 %v4626, %v4674
    %v4676 = vpop.f32.mrf.mxu0
    %v4677 = vadd.f32 %v4628, %v4676
    %4678 = vmatmul.bf16.gmra.mxu0 %v4350
    %v4679 = vpop.f32.mrf.mxu0
    %v4680 = vadd.f32 %v4631, %v4679
    %v4681 = vpop.f32.mrf.mxu0
    %v4682 = vadd.f32 %v4633, %v4681
    %4683 = vmatmul.bf16.gmra.mxu0 %v4353
    %v4684 = vpop.f32.mrf.mxu0
    %v4685 = vadd.f32 %v4636, %v4684
    %v4686 = vpop.f32.mrf.mxu0
    %v4687 = vadd.f32 %v4638, %v4686
    %4688 = vmatmul.bf16.gmra.mxu0 %v4356
    %v4689 = vpop.f32.mrf.mxu0
    %v4690 = vadd.f32 %v4641, %v4689
    %v4691 = vpop.f32.mrf.mxu0
    %v4692 = vadd.f32 %v4643, %v4691
    %4693 = vmatmul.bf16.gmra.mxu0 %v4359
    %v4694 = vpop.f32.mrf.mxu0
    %v4695 = vadd.f32 %v4646, %v4694
    %v4696 = vpop.f32.mrf.mxu0
    %v4697 = vadd.f32 %v4648, %v4696
    %4698 = vmatmul.bf16.gmra.mxu0 %v4362
    %v4699 = vpop.f32.mrf.mxu0
    %v4700 = vadd.f32 %v4651, %v4699
    %v4701 = vpop.f32.mrf.mxu0
    %v4702 = vadd.f32 %v4653, %v4701
    %4703 = vmatmul.bf16.gmra.mxu0 %v4365
    %v4704 = vpop.f32.mrf.mxu0
    %v4705 = vadd.f32 %v4656, %v4704
    %v4706 = vpop.f32.mrf.mxu0
    %v4707 = vadd.f32 %v4658, %v4706
    %4708 = vdwg.mxu0
    %v4709 = vmax.f32 %v4670, 0.0
    %v4710 = vmax.f32 %v4672, 0.0
    %v4711 = vmax.f32 %v4675, 0.0
    %v4712 = vmax.f32 %v4677, 0.0
    %v4713 = vmax.f32 %v4680, 0.0
    %v4714 = vmax.f32 %v4682, 0.0
    %v4715 = vmax.f32 %v4685, 0.0
    %v4716 = vmax.f32 %v4687, 0.0
    %v4717 = vmax.f32 %v4690, 0.0
    %v4718 = vmax.f32 %v4692, 0.0
    %v4719 = vmax.f32 %v4695, 0.0
    %v4720 = vmax.f32 %v4697, 0.0
    %v4721 = vmax.f32 %v4700, 0.0
    %v4722 = vmax.f32 %v4702, 0.0
    %v4723 = vmax.f32 %v4705, 0.0
    %v4724 = vmax.f32 %v4707, 0.0
    %v4725 = vadd.f32 %v4709, %v3839
    %v4726 = vadd.f32 %v4710, %v3840
    %v4727 = vadd.f32 %v4711, %v3841
    %v4728 = vadd.f32 %v4712, %v3842
    %v4729 = vadd.f32 %v4713, %v3843
    %v4730 = vadd.f32 %v4714, %v3844
    %v4731 = vadd.f32 %v4715, %v3845
    %v4732 = vadd.f32 %v4716, %v3846
    %v4733 = vadd.f32 %v4717, %v3847
    %v4734 = vadd.f32 %v4718, %v3848
    %v4735 = vadd.f32 %v4719, %v3849
    %v4736 = vadd.f32 %v4720, %v3850
    %v4737 = vadd.f32 %v4721, %v3851
    %v4738 = vadd.f32 %v4722, %v3852
    %v4739 = vadd.f32 %v4723, %v3853
    %v4740 = vadd.f32 %v4724, %v3854
    %v4741 = vmax.f32 %v4725, 0.0
    %v4742 = vmax.f32 %v4726, 0.0
    %v4743 = vmax.f32 %v4727, 0.0
    %v4744 = vmax.f32 %v4728, 0.0
    %v4745 = vmax.f32 %v4729, 0.0
    %v4746 = vmax.f32 %v4730, 0.0
    %v4747 = vmax.f32 %v4731, 0.0
    %v4748 = vmax.f32 %v4732, 0.0
    %v4749 = vmax.f32 %v4733, 0.0
    %v4750 = vmax.f32 %v4734, 0.0
    %v4751 = vmax.f32 %v4735, 0.0
    %v4752 = vmax.f32 %v4736, 0.0
    %v4753 = vmax.f32 %v4737, 0.0
    %v4754 = vmax.f32 %v4738, 0.0
    %v4755 = vmax.f32 %v4739, 0.0
    %v4756 = vmax.f32 %v4740, 0.0
    %v4757 = vsel %vm272, 1, 0
    %v4758 = vsel %vm273, 1, 0
    %v4759 = vsel %vm274, 1, 0
    %v4760 = vsel %vm275, 1, 0
    %v4761 = vsel %vm276, 1, 0
    %v4762 = vsel %vm277, 1, 0
    %v4763 = vsel %vm278, 1, 0
    %v4764 = vsel %vm279, 1, 0
    %4765 = vset.pattern.permute.xlu0 0
    %4766 = vperm.xlu0 %4765, %v4757
    %v4767 = vpop.permute.xlu0 %4766
    %4768 = vset.pattern.permute.xlu0 0
    %4769 = vperm.xlu0 %4768, %v4758
    %v4770 = vpop.permute.xlu0 %4769
    %4771 = vset.pattern.permute.xlu0 0
    %4772 = vperm.xlu0 %4771, %v4759
    %v4773 = vpop.permute.xlu0 %4772
    %4774 = vset.pattern.permute.xlu0 0
    %4775 = vperm.xlu0 %4774, %v4760
    %v4776 = vpop.permute.xlu0 %4775
    %4777 = vset.pattern.permute.xlu0 0
    %4778 = vperm.xlu0 %4777, %v4761
    %v4779 = vpop.permute.xlu0 %4778
    %4780 = vset.pattern.permute.xlu0 0
    %4781 = vperm.xlu0 %4780, %v4762
    %v4782 = vpop.permute.xlu0 %4781
    %4783 = vset.pattern.permute.xlu0 0
    %4784 = vperm.xlu0 %4783, %v4763
    %v4785 = vpop.permute.xlu0 %4784
    %4786 = vset.pattern.permute.xlu0 0
    %4787 = vperm.xlu0 %4786, %v4764
    %v4788 = vpop.permute.xlu0 %4787
    %vm4789 = vcmp.eq.s32.totalorder %v4767, 1
    %vm4790 = vcmp.eq.s32.totalorder %v4770, 1
    %vm4791 = vcmp.eq.s32.totalorder %v4773, 1
    %vm4792 = vcmp.eq.s32.totalorder %v4776, 1
    %vm4793 = vcmp.eq.s32.totalorder %v4779, 1
    %vm4794 = vcmp.eq.s32.totalorder %v4782, 1
    %vm4795 = vcmp.eq.s32.totalorder %v4785, 1
    %vm4796 = vcmp.eq.s32.totalorder %v4788, 1
    %v4797 = vsel %vm4789, %v4753, 0.0
    %v4798 = vsel %vm4790, %v4754, 0.0
    %v4799 = vsel %vm4791, %v4755, 0.0
    %v4800 = vsel %vm4792, %v4756, 0.0
    %v4801 = vsel %vm4793, %v4741, 0.0
    %v4802 = vsel %vm4794, %v4742, 0.0
    %v4803 = vsel %vm4795, %v4743, 0.0
    %v4804 = vsel %vm4796, %v4744, 0.0
    %v4805 = vsel %vm4789, %v4745, 0.0
    %v4806 = vsel %vm4790, %v4746, 0.0
    %v4807 = vsel %vm4791, %v4747, 0.0
    %v4808 = vsel %vm4792, %v4748, 0.0
    %v4809 = vsel %vm4793, %v4749, 0.0
    %v4810 = vsel %vm4794, %v4750, 0.0
    %v4811 = vsel %vm4795, %v4751, 0.0
    %v4812 = vsel %vm4796, %v4752, 0.0
    %v4813 = vsel %vm3887, %v4755, 0.0
    %v4814 = vsel %vm3888, %v4756, 0.0
    %v4815 = vsel %vm3889, %v4741, 0.0
    %v4816 = vsel %vm3890, %v4742, 0.0
    %v4817 = vsel %vm3891, %v4743, 0.0
    %v4818 = vsel %vm3892, %v4744, 0.0
    %v4819 = vsel %vm3893, %v4745, 0.0
    %v4820 = vsel %vm3894, %v4746, 0.0
    %v4821 = vsel %vm3887, %v4747, 0.0
    %v4822 = vsel %vm3888, %v4748, 0.0
    %v4823 = vsel %vm3889, %v4749, 0.0
    %v4824 = vsel %vm3890, %v4750, 0.0
    %v4825 = vsel %vm3891, %v4751, 0.0
    %v4826 = vsel %vm3892, %v4752, 0.0
    %v4827 = vsel %vm3893, %v4753, 0.0
    %v4828 = vsel %vm3894, %v4754, 0.0
    %v4829 = vpack.c.bf16 %v4798, %v4797
    %v4830 = vpack.c.bf16 %v4814, %v4813
    %v4831 = vpack.c.bf16 %v4742, %v4741
    %v4832 = vpack.c.bf16 %v4800, %v4799
    %v4833 = vpack.c.bf16 %v4816, %v4815
    %v4834 = vpack.c.bf16 %v4744, %v4743
    %v4835 = vpack.c.bf16 %v4802, %v4801
    %v4836 = vpack.c.bf16 %v4818, %v4817
    %v4837 = vpack.c.bf16 %v4746, %v4745
    %v4838 = vpack.c.bf16 %v4804, %v4803
    %v4839 = vpack.c.bf16 %v4820, %v4819
    %v4840 = vpack.c.bf16 %v4748, %v4747
    %v4841 = vpack.c.bf16 %v4806, %v4805
    %v4842 = vpack.c.bf16 %v4822, %v4821
    %v4843 = vpack.c.bf16 %v4750, %v4749
    %v4844 = vpack.c.bf16 %v4808, %v4807
    %v4845 = vpack.c.bf16 %v4824, %v4823
    %v4846 = vpack.c.bf16 %v4752, %v4751
    %v4847 = vpack.c.bf16 %v4810, %v4809
    %v4848 = vpack.c.bf16 %v4826, %v4825
    %v4849 = vpack.c.bf16 %v4754, %v4753
    %v4850 = vpack.c.bf16 %v4812, %v4811
    %v4851 = vpack.c.bf16 %v4828, %v4827
    %v4852 = vpack.c.bf16 %v4756, %v4755
    %v4853 = vld [vmem:[#allocation10] sm:$0xff]
    %v4854 = vld [vmem:[#allocation10 + $0x8] sm:$0xff]
    %v4855 = vld [vmem:[#allocation10 + $0x10] sm:$0xff]
    %v4856 = vld [vmem:[#allocation10 + $0x18] sm:$0xff]
    %v4857 = vld [vmem:[#allocation10 + $0x20] sm:$0xff]
    %v4858 = vld [vmem:[#allocation10 + $0x28] sm:$0xff]
    %v4859 = vld [vmem:[#allocation10 + $0x30] sm:$0xff]
    %v4860 = vld [vmem:[#allocation10 + $0x38] sm:$0xff]
    %v4861 = vld [vmem:[#allocation10 + $0x40] sm:$0xff]
    %v4862 = vld [vmem:[#allocation10 + $0x48] sm:$0xff]
    %v4863 = vld [vmem:[#allocation10 + $0x50] sm:$0xff]
    %v4864 = vld [vmem:[#allocation10 + $0x58] sm:$0xff]
    %v4865 = vld [vmem:[#allocation10 + $0x60] sm:$0xff]
    %v4866 = vld [vmem:[#allocation10 + $0x68] sm:$0xff]
    %v4867 = vld [vmem:[#allocation10 + $0x70] sm:$0xff]
    %v4868 = vld [vmem:[#allocation10 + $0x78] sm:$0xff]
    %v4869 = vld [vmem:[#allocation10 + $0x80] sm:$0xff]
    %v4870 = vld [vmem:[#allocation10 + $0x88] sm:$0xff]
    %v4871 = vld [vmem:[#allocation10 + $0x90] sm:$0xff]
    %v4872 = vld [vmem:[#allocation10 + $0x98] sm:$0xff]
    %v4873 = vld [vmem:[#allocation10 + $0xa0] sm:$0xff]
    %v4874 = vld [vmem:[#allocation10 + $0xa8] sm:$0xff]
    %v4875 = vld [vmem:[#allocation10 + $0xb0] sm:$0xff]
    %v4876 = vld [vmem:[#allocation10 + $0xb8] sm:$0xff]
    %v4877 = vld [vmem:[#allocation10 + $0xc0] sm:$0xff]
    %v4878 = vld [vmem:[#allocation10 + $0xc8] sm:$0xff]
    %v4879 = vld [vmem:[#allocation10 + $0xd0] sm:$0xff]
    %v4880 = vld [vmem:[#allocation10 + $0xd8] sm:$0xff]
    %v4881 = vld [vmem:[#allocation10 + $0xe0] sm:$0xff]
    %v4882 = vld [vmem:[#allocation10 + $0xe8] sm:$0xff]
    %v4883 = vld [vmem:[#allocation10 + $0xf0] sm:$0xff]
    %v4884 = vld [vmem:[#allocation10 + $0xf8] sm:$0xff]
    %v4885 = vld [vmem:[#allocation10 + $0x100] sm:$0xff]
    %v4886 = vld [vmem:[#allocation10 + $0x108] sm:$0xff]
    %v4887 = vld [vmem:[#allocation10 + $0x110] sm:$0xff]
    %v4888 = vld [vmem:[#allocation10 + $0x118] sm:$0xff]
    %v4889 = vld [vmem:[#allocation10 + $0x120] sm:$0xff]
    %v4890 = vld [vmem:[#allocation10 + $0x128] sm:$0xff]
    %v4891 = vld [vmem:[#allocation10 + $0x130] sm:$0xff]
    %v4892 = vld [vmem:[#allocation10 + $0x138] sm:$0xff]
    %v4893 = vld [vmem:[#allocation10 + $0x140] sm:$0xff]
    %v4894 = vld [vmem:[#allocation10 + $0x148] sm:$0xff]
    %v4895 = vld [vmem:[#allocation10 + $0x150] sm:$0xff]
    %v4896 = vld [vmem:[#allocation10 + $0x158] sm:$0xff]
    %v4897 = vld [vmem:[#allocation10 + $0x160] sm:$0xff]
    %v4898 = vld [vmem:[#allocation10 + $0x168] sm:$0xff]
    %v4899 = vld [vmem:[#allocation10 + $0x170] sm:$0xff]
    %v4900 = vld [vmem:[#allocation10 + $0x178] sm:$0xff]
    %v4901 = vld [vmem:[%s19] sm:$0x3]
    %v4903 = vperm.slane %v4901, 0
    %v4904 = vperm.slane %v4901, 1
    %v4955 = vunpack.c.l.b16 %v4853
    %v4956 = vunpack.c.h.b16 %v4853
    %v4957 = vunpack.c.l.b16 %v4854
    %v4958 = vunpack.c.h.b16 %v4854
    %v4959 = vunpack.c.l.b16 %v4855
    %v4960 = vunpack.c.h.b16 %v4855
    %v4961 = vunpack.c.l.b16 %v4856
    %v4962 = vunpack.c.h.b16 %v4856
    %v4963 = vunpack.c.l.b16 %v4857
    %v4964 = vunpack.c.h.b16 %v4857
    %v4965 = vunpack.c.l.b16 %v4858
    %v4966 = vunpack.c.h.b16 %v4858
    %v4967 = vunpack.c.l.b16 %v4859
    %v4968 = vunpack.c.h.b16 %v4859
    %v4969 = vunpack.c.l.b16 %v4860
    %v4970 = vunpack.c.h.b16 %v4860
    %v4971 = vunpack.c.l.b16 %v4861
    %v4972 = vunpack.c.h.b16 %v4861
    %v4973 = vunpack.c.l.b16 %v4862
    %v4974 = vunpack.c.h.b16 %v4862
    %v4975 = vunpack.c.l.b16 %v4863
    %v4976 = vunpack.c.h.b16 %v4863
    %v4977 = vunpack.c.l.b16 %v4864
    %v4978 = vunpack.c.h.b16 %v4864
    %v4979 = vunpack.c.l.b16 %v4865
    %v4980 = vunpack.c.h.b16 %v4865
    %v4981 = vunpack.c.l.b16 %v4866
    %v4982 = vunpack.c.h.b16 %v4866
    %v4983 = vunpack.c.l.b16 %v4867
    %v4984 = vunpack.c.h.b16 %v4867
    %v4985 = vunpack.c.l.b16 %v4868
    %v4986 = vunpack.c.h.b16 %v4868
    %v4987 = vunpack.c.l.b16 %v4869
    %v4988 = vunpack.c.h.b16 %v4869
    %v4989 = vunpack.c.l.b16 %v4870
    %v4990 = vunpack.c.h.b16 %v4870
    %v4991 = vunpack.c.l.b16 %v4871
    %v4992 = vunpack.c.h.b16 %v4871
    %v4993 = vunpack.c.l.b16 %v4872
    %v4994 = vunpack.c.h.b16 %v4872
    %v4995 = vunpack.c.l.b16 %v4873
    %v4996 = vunpack.c.h.b16 %v4873
    %v4997 = vunpack.c.l.b16 %v4874
    %v4998 = vunpack.c.h.b16 %v4874
    %v4999 = vunpack.c.l.b16 %v4875
    %v5000 = vunpack.c.h.b16 %v4875
    %v5001 = vunpack.c.l.b16 %v4876
    %v5002 = vunpack.c.h.b16 %v4876
    %v5003 = vunpack.c.l.b16 %v4877
    %v5004 = vunpack.c.h.b16 %v4877
    %v5005 = vunpack.c.l.b16 %v4878
    %v5006 = vunpack.c.h.b16 %v4878
    %v5007 = vunpack.c.l.b16 %v4879
    %v5008 = vunpack.c.h.b16 %v4879
    %v5009 = vunpack.c.l.b16 %v4880
    %v5010 = vunpack.c.h.b16 %v4880
    %v5011 = vunpack.c.l.b16 %v4881
    %v5012 = vunpack.c.h.b16 %v4881
    %v5013 = vunpack.c.l.b16 %v4882
    %v5014 = vunpack.c.h.b16 %v4882
    %v5015 = vunpack.c.l.b16 %v4883
    %v5016 = vunpack.c.h.b16 %v4883
    %v5017 = vunpack.c.l.b16 %v4884
    %v5018 = vunpack.c.h.b16 %v4884
    %v5019 = vunpack.c.l.b16 %v4885
    %v5020 = vunpack.c.h.b16 %v4885
    %v5021 = vunpack.c.l.b16 %v4886
    %v5022 = vunpack.c.h.b16 %v4886
    %v5023 = vunpack.c.l.b16 %v4887
    %v5024 = vunpack.c.h.b16 %v4887
    %v5025 = vunpack.c.l.b16 %v4888
    %v5026 = vunpack.c.h.b16 %v4888
    %v5027 = vunpack.c.l.b16 %v4889
    %v5028 = vunpack.c.h.b16 %v4889
    %v5029 = vunpack.c.l.b16 %v4890
    %v5030 = vunpack.c.h.b16 %v4890
    %v5031 = vunpack.c.l.b16 %v4891
    %v5032 = vunpack.c.h.b16 %v4891
    %v5033 = vunpack.c.l.b16 %v4892
    %v5034 = vunpack.c.h.b16 %v4892
    %v5035 = vunpack.c.l.b16 %v4893
    %v5036 = vunpack.c.h.b16 %v4893
    %v5037 = vunpack.c.l.b16 %v4894
    %v5038 = vunpack.c.h.b16 %v4894
    %v5039 = vunpack.c.l.b16 %v4895
    %v5040 = vunpack.c.h.b16 %v4895
    %v5041 = vunpack.c.l.b16 %v4896
    %v5042 = vunpack.c.h.b16 %v4896
    %v5043 = vunpack.c.l.b16 %v4897
    %v5044 = vunpack.c.h.b16 %v4897
    %v5045 = vunpack.c.l.b16 %v4898
    %v5046 = vunpack.c.h.b16 %v4898
    %v5047 = vunpack.c.l.b16 %v4899
    %v5048 = vunpack.c.h.b16 %v4899
    %v5049 = vunpack.c.l.b16 %v4900
    %v5050 = vunpack.c.h.b16 %v4900
    %v5051 = vpack.c.b16 %v4957, %v4955
    %v5052 = vpack.c.b16 %v4958, %v4956
    %v5053 = vpack.c.b16 %v4961, %v4959
    %v5054 = vpack.c.b16 %v4962, %v4960
    %v5055 = vpack.c.b16 %v4965, %v4963
    %v5056 = vpack.c.b16 %v4966, %v4964
    %v5057 = vpack.c.b16 %v4969, %v4967
    %v5058 = vpack.c.b16 %v4970, %v4968
    %v5059 = vpack.c.b16 %v4973, %v4971
    %v5060 = vpack.c.b16 %v4974, %v4972
    %v5061 = vpack.c.b16 %v4977, %v4975
    %v5062 = vpack.c.b16 %v4978, %v4976
    %v5063 = vpack.c.b16 %v4981, %v4979
    %v5064 = vpack.c.b16 %v4982, %v4980
    %v5065 = vpack.c.b16 %v4985, %v4983
    %v5066 = vpack.c.b16 %v4986, %v4984
    %v5067 = vpack.c.b16 %v4989, %v4987
    %v5068 = vpack.c.b16 %v4990, %v4988
    %v5069 = vpack.c.b16 %v4993, %v4991
    %v5070 = vpack.c.b16 %v4994, %v4992
    %v5071 = vpack.c.b16 %v4997, %v4995
    %v5072 = vpack.c.b16 %v4998, %v4996
    %v5073 = vpack.c.b16 %v5001, %v4999
    %v5074 = vpack.c.b16 %v5002, %v5000
    %v5075 = vpack.c.b16 %v5005, %v5003
    %v5076 = vpack.c.b16 %v5006, %v5004
    %v5077 = vpack.c.b16 %v5009, %v5007
    %v5078 = vpack.c.b16 %v5010, %v5008
    %v5079 = vpack.c.b16 %v5013, %v5011
    %v5080 = vpack.c.b16 %v5014, %v5012
    %v5081 = vpack.c.b16 %v5017, %v5015
    %v5082 = vpack.c.b16 %v5018, %v5016
    %v5083 = vpack.c.b16 %v5021, %v5019
    %v5084 = vpack.c.b16 %v5022, %v5020
    %v5085 = vpack.c.b16 %v5025, %v5023
    %v5086 = vpack.c.b16 %v5026, %v5024
    %v5087 = vpack.c.b16 %v5029, %v5027
    %v5088 = vpack.c.b16 %v5030, %v5028
    %v5089 = vpack.c.b16 %v5033, %v5031
    %v5090 = vpack.c.b16 %v5034, %v5032
    %v5091 = vpack.c.b16 %v5037, %v5035
    %v5092 = vpack.c.b16 %v5038, %v5036
    %v5093 = vpack.c.b16 %v5041, %v5039
    %v5094 = vpack.c.b16 %v5042, %v5040
    %v5095 = vpack.c.b16 %v5045, %v5043
    %v5096 = vpack.c.b16 %v5046, %v5044
    %v5097 = vpack.c.b16 %v5049, %v5047
    %v5098 = vpack.c.b16 %v5050, %v5048
    %5147 = vmatpush.bf16.msra.mxu0 %v5065
    %5148 = vmatpush.bf16.msra.mxu0 %v5063
    %5149 = vmatpush.bf16.msra.mxu0 %v5061
    %5150 = vmatpush.bf16.msra.mxu0 %v5059
    %5151 = vmatpush.bf16.msra.mxu0 %v5057
    %5152 = vmatpush.bf16.msra.mxu0 %v5055
    %5153 = vmatpush.bf16.msra.mxu0 %v5053
    %5154 = vmatpush.bf16.msra.mxu0 %v5051
    %5155 = vmatmul.bf16.gmra.mxu0 %v4829
    %v5156 = vpop.f32.mrf.mxu0
    %v5157 = vadd.f32 %v4903, %v5156
    %v5158 = vpop.f32.mrf.mxu0
    %v5159 = vadd.f32 %v4903, %v5158
    %5160 = vmatmul.bf16.gmra.mxu0 %v4832
    %v5161 = vpop.f32.mrf.mxu0
    %v5162 = vadd.f32 %v4903, %v5161
    %v5163 = vpop.f32.mrf.mxu0
    %v5164 = vadd.f32 %v4903, %v5163
    %5165 = vmatmul.bf16.gmra.mxu0 %v4835
    %v5166 = vpop.f32.mrf.mxu0
    %v5167 = vadd.f32 %v4903, %v5166
    %v5168 = vpop.f32.mrf.mxu0
    %v5169 = vadd.f32 %v4903, %v5168
    %5170 = vmatmul.bf16.gmra.mxu0 %v4838
    %v5171 = vpop.f32.mrf.mxu0
    %v5172 = vadd.f32 %v4903, %v5171
    %v5173 = vpop.f32.mrf.mxu0
    %v5174 = vadd.f32 %v4903, %v5173
    %5175 = vmatmul.bf16.gmra.mxu0 %v4841
    %v5176 = vpop.f32.mrf.mxu0
    %v5177 = vadd.f32 %v4903, %v5176
    %v5178 = vpop.f32.mrf.mxu0
    %v5179 = vadd.f32 %v4903, %v5178
    %5180 = vmatmul.bf16.gmra.mxu0 %v4844
    %v5181 = vpop.f32.mrf.mxu0
    %v5182 = vadd.f32 %v4903, %v5181
    %v5183 = vpop.f32.mrf.mxu0
    %v5184 = vadd.f32 %v4903, %v5183
    %5185 = vmatmul.bf16.gmra.mxu0 %v4847
    %v5186 = vpop.f32.mrf.mxu0
    %v5187 = vadd.f32 %v4903, %v5186
    %v5188 = vpop.f32.mrf.mxu0
    %v5189 = vadd.f32 %v4903, %v5188
    %5190 = vmatmul.bf16.gmra.mxu0 %v4850
    %v5191 = vpop.f32.mrf.mxu0
    %v5192 = vadd.f32 %v4903, %v5191
    %v5193 = vpop.f32.mrf.mxu0
    %v5194 = vadd.f32 %v4903, %v5193
    %5195 = vdwg.mxu0
    %5196 = vmatpush.bf16.msra.mxu0 %v5081
    %5197 = vmatpush.bf16.msra.mxu0 %v5079
    %5198 = vmatpush.bf16.msra.mxu0 %v5077
    %5199 = vmatpush.bf16.msra.mxu0 %v5075
    %5200 = vmatpush.bf16.msra.mxu0 %v5073
    %5201 = vmatpush.bf16.msra.mxu0 %v5071
    %5202 = vmatpush.bf16.msra.mxu0 %v5069
    %5203 = vmatpush.bf16.msra.mxu0 %v5067
    %5204 = vmatmul.bf16.gmra.mxu0 %v4830
    %v5205 = vpop.f32.mrf.mxu0
    %v5206 = vadd.f32 %v5157, %v5205
    %v5207 = vpop.f32.mrf.mxu0
    %v5208 = vadd.f32 %v5159, %v5207
    %5209 = vmatmul.bf16.gmra.mxu0 %v4833
    %v5210 = vpop.f32.mrf.mxu0
    %v5211 = vadd.f32 %v5162, %v5210
    %v5212 = vpop.f32.mrf.mxu0
    %v5213 = vadd.f32 %v5164, %v5212
    %5214 = vmatmul.bf16.gmra.mxu0 %v4836
    %v5215 = vpop.f32.mrf.mxu0
    %v5216 = vadd.f32 %v5167, %v5215
    %v5217 = vpop.f32.mrf.mxu0
    %v5218 = vadd.f32 %v5169, %v5217
    %5219 = vmatmul.bf16.gmra.mxu0 %v4839
    %v5220 = vpop.f32.mrf.mxu0
    %v5221 = vadd.f32 %v5172, %v5220
    %v5222 = vpop.f32.mrf.mxu0
    %v5223 = vadd.f32 %v5174, %v5222
    %5224 = vmatmul.bf16.gmra.mxu0 %v4842
    %v5225 = vpop.f32.mrf.mxu0
    %v5226 = vadd.f32 %v5177, %v5225
    %v5227 = vpop.f32.mrf.mxu0
    %v5228 = vadd.f32 %v5179, %v5227
    %5229 = vmatmul.bf16.gmra.mxu0 %v4845
    %v5230 = vpop.f32.mrf.mxu0
    %v5231 = vadd.f32 %v5182, %v5230
    %v5232 = vpop.f32.mrf.mxu0
    %v5233 = vadd.f32 %v5184, %v5232
    %5234 = vmatmul.bf16.gmra.mxu0 %v4848
    %v5235 = vpop.f32.mrf.mxu0
    %v5236 = vadd.f32 %v5187, %v5235
    %v5237 = vpop.f32.mrf.mxu0
    %v5238 = vadd.f32 %v5189, %v5237
    %5239 = vmatmul.bf16.gmra.mxu0 %v4851
    %v5240 = vpop.f32.mrf.mxu0
    %v5241 = vadd.f32 %v5192, %v5240
    %v5242 = vpop.f32.mrf.mxu0
    %v5243 = vadd.f32 %v5194, %v5242
    %5244 = vdwg.mxu0
    %5245 = vmatpush.bf16.msra.mxu0 %v5097
    %5246 = vmatpush.bf16.msra.mxu0 %v5095
    %5247 = vmatpush.bf16.msra.mxu0 %v5093
    %5248 = vmatpush.bf16.msra.mxu0 %v5091
    %5249 = vmatpush.bf16.msra.mxu0 %v5089
    %5250 = vmatpush.bf16.msra.mxu0 %v5087
    %5251 = vmatpush.bf16.msra.mxu0 %v5085
    %5252 = vmatpush.bf16.msra.mxu0 %v5083
    %5253 = vmatmul.bf16.gmra.mxu0 %v4831
    %v5254 = vpop.f32.mrf.mxu0
    %v5255 = vadd.f32 %v5206, %v5254
    %v5256 = vpop.f32.mrf.mxu0
    %v5257 = vadd.f32 %v5208, %v5256
    %5258 = vmatmul.bf16.gmra.mxu0 %v4834
    %v5259 = vpop.f32.mrf.mxu0
    %v5260 = vadd.f32 %v5211, %v5259
    %v5261 = vpop.f32.mrf.mxu0
    %v5262 = vadd.f32 %v5213, %v5261
    %5263 = vmatmul.bf16.gmra.mxu0 %v4837
    %v5264 = vpop.f32.mrf.mxu0
    %v5265 = vadd.f32 %v5216, %v5264
    %v5266 = vpop.f32.mrf.mxu0
    %v5267 = vadd.f32 %v5218, %v5266
    %5268 = vmatmul.bf16.gmra.mxu0 %v4840
    %v5269 = vpop.f32.mrf.mxu0
    %v5270 = vadd.f32 %v5221, %v5269
    %v5271 = vpop.f32.mrf.mxu0
    %v5272 = vadd.f32 %v5223, %v5271
    %5273 = vmatmul.bf16.gmra.mxu0 %v4843
    %v5274 = vpop.f32.mrf.mxu0
    %v5275 = vadd.f32 %v5226, %v5274
    %v5276 = vpop.f32.mrf.mxu0
    %v5277 = vadd.f32 %v5228, %v5276
    %5278 = vmatmul.bf16.gmra.mxu0 %v4846
    %v5279 = vpop.f32.mrf.mxu0
    %v5280 = vadd.f32 %v5231, %v5279
    %v5281 = vpop.f32.mrf.mxu0
    %v5282 = vadd.f32 %v5233, %v5281
    %5283 = vmatmul.bf16.gmra.mxu0 %v4849
    %v5284 = vpop.f32.mrf.mxu0
    %v5285 = vadd.f32 %v5236, %v5284
    %v5286 = vpop.f32.mrf.mxu0
    %v5287 = vadd.f32 %v5238, %v5286
    %5288 = vmatmul.bf16.gmra.mxu0 %v4852
    %v5289 = vpop.f32.mrf.mxu0
    %v5290 = vadd.f32 %v5241, %v5289
    %v5291 = vpop.f32.mrf.mxu0
    %v5292 = vadd.f32 %v5243, %v5291
    %5293 = vdwg.mxu0
    %5294 = vmatpush.bf16.msra.mxu0 %v5066
    %5295 = vmatpush.bf16.msra.mxu0 %v5064
    %5296 = vmatpush.bf16.msra.mxu0 %v5062
    %5297 = vmatpush.bf16.msra.mxu0 %v5060
    %5298 = vmatpush.bf16.msra.mxu0 %v5058
    %5299 = vmatpush.bf16.msra.mxu0 %v5056
    %5300 = vmatpush.bf16.msra.mxu0 %v5054
    %5301 = vmatpush.bf16.msra.mxu0 %v5052
    %5302 = vmatmul.bf16.gmra.mxu0 %v4829
    %v5303 = vpop.f32.mrf.mxu0
    %v5304 = vadd.f32 %v4904, %v5303
    %v5305 = vpop.f32.mrf.mxu0
    %v5306 = vadd.f32 %v4904, %v5305
    %5307 = vmatmul.bf16.gmra.mxu0 %v4832
    %v5308 = vpop.f32.mrf.mxu0
    %v5309 = vadd.f32 %v4904, %v5308
    %v5310 = vpop.f32.mrf.mxu0
    %v5311 = vadd.f32 %v4904, %v5310
    %5312 = vmatmul.bf16.gmra.mxu0 %v4835
    %v5313 = vpop.f32.mrf.mxu0
    %v5314 = vadd.f32 %v4904, %v5313
    %v5315 = vpop.f32.mrf.mxu0
    %v5316 = vadd.f32 %v4904, %v5315
    %5317 = vmatmul.bf16.gmra.mxu0 %v4838
    %v5318 = vpop.f32.mrf.mxu0
    %v5319 = vadd.f32 %v4904, %v5318
    %v5320 = vpop.f32.mrf.mxu0
    %v5321 = vadd.f32 %v4904, %v5320
    %5322 = vmatmul.bf16.gmra.mxu0 %v4841
    %v5323 = vpop.f32.mrf.mxu0
    %v5324 = vadd.f32 %v4904, %v5323
    %v5325 = vpop.f32.mrf.mxu0
    %v5326 = vadd.f32 %v4904, %v5325
    %5327 = vmatmul.bf16.gmra.mxu0 %v4844
    %v5328 = vpop.f32.mrf.mxu0
    %v5329 = vadd.f32 %v4904, %v5328
    %v5330 = vpop.f32.mrf.mxu0
    %v5331 = vadd.f32 %v4904, %v5330
    %5332 = vmatmul.bf16.gmra.mxu0 %v4847
    %v5333 = vpop.f32.mrf.mxu0
    %v5334 = vadd.f32 %v4904, %v5333
    %v5335 = vpop.f32.mrf.mxu0
    %v5336 = vadd.f32 %v4904, %v5335
    %5337 = vmatmul.bf16.gmra.mxu0 %v4850
    %v5338 = vpop.f32.mrf.mxu0
    %v5339 = vadd.f32 %v4904, %v5338
    %v5340 = vpop.f32.mrf.mxu0
    %v5341 = vadd.f32 %v4904, %v5340
    %5342 = vdwg.mxu0
    %5343 = vmatpush.bf16.msra.mxu0 %v5082
    %5344 = vmatpush.bf16.msra.mxu0 %v5080
    %5345 = vmatpush.bf16.msra.mxu0 %v5078
    %5346 = vmatpush.bf16.msra.mxu0 %v5076
    %5347 = vmatpush.bf16.msra.mxu0 %v5074
    %5348 = vmatpush.bf16.msra.mxu0 %v5072
    %5349 = vmatpush.bf16.msra.mxu0 %v5070
    %5350 = vmatpush.bf16.msra.mxu0 %v5068
    %5351 = vmatmul.bf16.gmra.mxu0 %v4830
    %v5352 = vpop.f32.mrf.mxu0
    %v5353 = vadd.f32 %v5304, %v5352
    %v5354 = vpop.f32.mrf.mxu0
    %v5355 = vadd.f32 %v5306, %v5354
    %5356 = vmatmul.bf16.gmra.mxu0 %v4833
    %v5357 = vpop.f32.mrf.mxu0
    %v5358 = vadd.f32 %v5309, %v5357
    %v5359 = vpop.f32.mrf.mxu0
    %v5360 = vadd.f32 %v5311, %v5359
    %5361 = vmatmul.bf16.gmra.mxu0 %v4836
    %v5362 = vpop.f32.mrf.mxu0
    %v5363 = vadd.f32 %v5314, %v5362
    %v5364 = vpop.f32.mrf.mxu0
    %v5365 = vadd.f32 %v5316, %v5364
    %5366 = vmatmul.bf16.gmra.mxu0 %v4839
    %v5367 = vpop.f32.mrf.mxu0
    %v5368 = vadd.f32 %v5319, %v5367
    %v5369 = vpop.f32.mrf.mxu0
    %v5370 = vadd.f32 %v5321, %v5369
    %5371 = vmatmul.bf16.gmra.mxu0 %v4842
    %v5372 = vpop.f32.mrf.mxu0
    %v5373 = vadd.f32 %v5324, %v5372
    %v5374 = vpop.f32.mrf.mxu0
    %v5375 = vadd.f32 %v5326, %v5374
    %5376 = vmatmul.bf16.gmra.mxu0 %v4845
    %v5377 = vpop.f32.mrf.mxu0
    %v5378 = vadd.f32 %v5329, %v5377
    %v5379 = vpop.f32.mrf.mxu0
    %v5380 = vadd.f32 %v5331, %v5379
    %5381 = vmatmul.bf16.gmra.mxu0 %v4848
    %v5382 = vpop.f32.mrf.mxu0
    %v5383 = vadd.f32 %v5334, %v5382
    %v5384 = vpop.f32.mrf.mxu0
    %v5385 = vadd.f32 %v5336, %v5384
    %5386 = vmatmul.bf16.gmra.mxu0 %v4851
    %v5387 = vpop.f32.mrf.mxu0
    %v5388 = vadd.f32 %v5339, %v5387
    %v5389 = vpop.f32.mrf.mxu0
    %v5390 = vadd.f32 %v5341, %v5389
    %5391 = vdwg.mxu0
    %5392 = vmatpush.bf16.msra.mxu0 %v5098
    %5393 = vmatpush.bf16.msra.mxu0 %v5096
    %5394 = vmatpush.bf16.msra.mxu0 %v5094
    %5395 = vmatpush.bf16.msra.mxu0 %v5092
    %5396 = vmatpush.bf16.msra.mxu0 %v5090
    %5397 = vmatpush.bf16.msra.mxu0 %v5088
    %5398 = vmatpush.bf16.msra.mxu0 %v5086
    %5399 = vmatpush.bf16.msra.mxu0 %v5084
    %5400 = vmatmul.bf16.gmra.mxu0 %v4831
    %v5401 = vpop.f32.mrf.mxu0
    %v5402 = vadd.f32 %v5353, %v5401
    %v5403 = vpop.f32.mrf.mxu0
    %v5404 = vadd.f32 %v5355, %v5403
    %5405 = vmatmul.bf16.gmra.mxu0 %v4834
    %v5406 = vpop.f32.mrf.mxu0
    %v5407 = vadd.f32 %v5358, %v5406
    %v5408 = vpop.f32.mrf.mxu0
    %v5409 = vadd.f32 %v5360, %v5408
    %5410 = vmatmul.bf16.gmra.mxu0 %v4837
    %v5411 = vpop.f32.mrf.mxu0
    %v5412 = vadd.f32 %v5363, %v5411
    %v5413 = vpop.f32.mrf.mxu0
    %v5414 = vadd.f32 %v5365, %v5413
    %5415 = vmatmul.bf16.gmra.mxu0 %v4840
    %v5416 = vpop.f32.mrf.mxu0
    %v5417 = vadd.f32 %v5368, %v5416
    %v5418 = vpop.f32.mrf.mxu0
    %v5419 = vadd.f32 %v5370, %v5418
    %5420 = vmatmul.bf16.gmra.mxu0 %v4843
    %v5421 = vpop.f32.mrf.mxu0
    %v5422 = vadd.f32 %v5373, %v5421
    %v5423 = vpop.f32.mrf.mxu0
    %v5424 = vadd.f32 %v5375, %v5423
    %5425 = vmatmul.bf16.gmra.mxu0 %v4846
    %v5426 = vpop.f32.mrf.mxu0
    %v5427 = vadd.f32 %v5378, %v5426
    %v5428 = vpop.f32.mrf.mxu0
    %v5429 = vadd.f32 %v5380, %v5428
    %5430 = vmatmul.bf16.gmra.mxu0 %v4849
    %v5431 = vpop.f32.mrf.mxu0
    %v5432 = vadd.f32 %v5383, %v5431
    %v5433 = vpop.f32.mrf.mxu0
    %v5434 = vadd.f32 %v5385, %v5433
    %5435 = vmatmul.bf16.gmra.mxu0 %v4852
    %v5436 = vpop.f32.mrf.mxu0
    %v5437 = vadd.f32 %v5388, %v5436
    %v5438 = vpop.f32.mrf.mxu0
    %v5439 = vadd.f32 %v5390, %v5438
    %5440 = vdwg.mxu0
    %v5441 = vmax.f32 %v5255, 0.0
    %v5442 = vmax.f32 %v5257, 0.0
    %v5443 = vmax.f32 %v5260, 0.0
    %v5444 = vmax.f32 %v5262, 0.0
    %v5445 = vmax.f32 %v5265, 0.0
    %v5446 = vmax.f32 %v5267, 0.0
    %v5447 = vmax.f32 %v5270, 0.0
    %v5448 = vmax.f32 %v5272, 0.0
    %v5449 = vmax.f32 %v5275, 0.0
    %v5450 = vmax.f32 %v5277, 0.0
    %v5451 = vmax.f32 %v5280, 0.0
    %v5452 = vmax.f32 %v5282, 0.0
    %v5453 = vmax.f32 %v5285, 0.0
    %v5454 = vmax.f32 %v5287, 0.0
    %v5455 = vmax.f32 %v5290, 0.0
    %v5456 = vmax.f32 %v5292, 0.0
    %v5457 = vsel %vm4789, %v5453, 0.0
    %v5458 = vsel %vm4790, %v5454, 0.0
    %v5459 = vsel %vm4791, %v5455, 0.0
    %v5460 = vsel %vm4792, %v5456, 0.0
    %v5461 = vsel %vm4793, %v5441, 0.0
    %v5462 = vsel %vm4794, %v5442, 0.0
    %v5463 = vsel %vm4795, %v5443, 0.0
    %v5464 = vsel %vm4796, %v5444, 0.0
    %v5465 = vsel %vm4789, %v5445, 0.0
    %v5466 = vsel %vm4790, %v5446, 0.0
    %v5467 = vsel %vm4791, %v5447, 0.0
    %v5468 = vsel %vm4792, %v5448, 0.0
    %v5469 = vsel %vm4793, %v5449, 0.0
    %v5470 = vsel %vm4794, %v5450, 0.0
    %v5471 = vsel %vm4795, %v5451, 0.0
    %v5472 = vsel %vm4796, %v5452, 0.0
    %v5473 = vsel %vm3887, %v5455, 0.0
    %v5474 = vsel %vm3888, %v5456, 0.0
    %v5475 = vsel %vm3889, %v5441, 0.0
    %v5476 = vsel %vm3890, %v5442, 0.0
    %v5477 = vsel %vm3891, %v5443, 0.0
    %v5478 = vsel %vm3892, %v5444, 0.0
    %v5479 = vsel %vm3893, %v5445, 0.0
    %v5480 = vsel %vm3894, %v5446, 0.0
    %v5481 = vsel %vm3887, %v5447, 0.0
    %v5482 = vsel %vm3888, %v5448, 0.0
    %v5483 = vsel %vm3889, %v5449, 0.0
    %v5484 = vsel %vm3890, %v5450, 0.0
    %v5485 = vsel %vm3891, %v5451, 0.0
    %v5486 = vsel %vm3892, %v5452, 0.0
    %v5487 = vsel %vm3893, %v5453, 0.0
    %v5488 = vsel %vm3894, %v5454, 0.0
    %v5489 = vpack.c.bf16 %v5458, %v5457
    %v5490 = vpack.c.bf16 %v5474, %v5473
    %v5491 = vpack.c.bf16 %v5442, %v5441
    %v5492 = vpack.c.bf16 %v5460, %v5459
    %v5493 = vpack.c.bf16 %v5476, %v5475
    %v5494 = vpack.c.bf16 %v5444, %v5443
    %v5495 = vpack.c.bf16 %v5462, %v5461
    %v5496 = vpack.c.bf16 %v5478, %v5477
    %v5497 = vpack.c.bf16 %v5446, %v5445
    %v5498 = vpack.c.bf16 %v5464, %v5463
    %v5499 = vpack.c.bf16 %v5480, %v5479
    %v5500 = vpack.c.bf16 %v5448, %v5447
    %v5501 = vpack.c.bf16 %v5466, %v5465
    %v5502 = vpack.c.bf16 %v5482, %v5481
    %v5503 = vpack.c.bf16 %v5450, %v5449
    %v5504 = vpack.c.bf16 %v5468, %v5467
    %v5505 = vpack.c.bf16 %v5484, %v5483
    %v5506 = vpack.c.bf16 %v5452, %v5451
    %v5507 = vpack.c.bf16 %v5470, %v5469
    %v5508 = vpack.c.bf16 %v5486, %v5485
    %v5509 = vpack.c.bf16 %v5454, %v5453
    %v5510 = vpack.c.bf16 %v5472, %v5471
    %v5511 = vpack.c.bf16 %v5488, %v5487
    %v5512 = vpack.c.bf16 %v5456, %v5455
    %v5513 = vld [vmem:[#allocation12] sm:$0xf]
    %v5514 = vld [vmem:[#allocation12 + $0x4] sm:$0xf]
    %v5515 = vld [vmem:[#allocation12 + $0x8] sm:$0xf]
    %v5516 = vld [vmem:[#allocation12 + $0xc] sm:$0xf]
    %v5517 = vld [vmem:[#allocation12 + $0x10] sm:$0xf]
    %v5518 = vld [vmem:[#allocation12 + $0x14] sm:$0xf]
    %v5519 = vld [vmem:[#allocation12 + $0x18] sm:$0xf]
    %v5520 = vld [vmem:[#allocation12 + $0x1c] sm:$0xf]
    %v5521 = vld [vmem:[#allocation12 + $0x20] sm:$0xf]
    %v5522 = vld [vmem:[#allocation12 + $0x24] sm:$0xf]
    %v5523 = vld [vmem:[#allocation12 + $0x28] sm:$0xf]
    %v5524 = vld [vmem:[#allocation12 + $0x2c] sm:$0xf]
    %v5525 = vld [vmem:[#allocation12 + $0x30] sm:$0xf]
    %v5526 = vld [vmem:[#allocation12 + $0x34] sm:$0xf]
    %v5527 = vld [vmem:[#allocation12 + $0x38] sm:$0xf]
    %v5528 = vld [vmem:[#allocation12 + $0x3c] sm:$0xf]
    %v5529 = vld [vmem:[#allocation12 + $0x40] sm:$0xf]
    %v5530 = vld [vmem:[#allocation12 + $0x44] sm:$0xf]
    %v5531 = vld [vmem:[#allocation12 + $0x48] sm:$0xf]
    %v5532 = vld [vmem:[#allocation12 + $0x4c] sm:$0xf]
    %v5533 = vld [vmem:[#allocation12 + $0x50] sm:$0xf]
    %v5534 = vld [vmem:[#allocation12 + $0x54] sm:$0xf]
    %v5535 = vld [vmem:[#allocation12 + $0x58] sm:$0xf]
    %v5536 = vld [vmem:[#allocation12 + $0x5c] sm:$0xf]
    %v5537 = vld [vmem:[#allocation12 + $0x60] sm:$0xf]
    %v5538 = vld [vmem:[#allocation12 + $0x64] sm:$0xf]
    %v5539 = vld [vmem:[#allocation12 + $0x68] sm:$0xf]
    %v5540 = vld [vmem:[#allocation12 + $0x6c] sm:$0xf]
    %v5541 = vld [vmem:[#allocation12 + $0x70] sm:$0xf]
    %v5542 = vld [vmem:[#allocation12 + $0x74] sm:$0xf]
    %v5543 = vld [vmem:[#allocation12 + $0x78] sm:$0xf]
    %v5544 = vld [vmem:[#allocation12 + $0x7c] sm:$0xf]
    %v5545 = vld [vmem:[#allocation12 + $0x80] sm:$0xf]
    %v5546 = vld [vmem:[#allocation12 + $0x84] sm:$0xf]
    %v5547 = vld [vmem:[#allocation12 + $0x88] sm:$0xf]
    %v5548 = vld [vmem:[#allocation12 + $0x8c] sm:$0xf]
    %v5549 = vld [vmem:[#allocation12 + $0x90] sm:$0xf]
    %v5550 = vld [vmem:[#allocation12 + $0x94] sm:$0xf]
    %v5551 = vld [vmem:[#allocation12 + $0x98] sm:$0xf]
    %v5552 = vld [vmem:[#allocation12 + $0x9c] sm:$0xf]
    %v5553 = vld [vmem:[#allocation12 + $0xa0] sm:$0xf]
    %v5554 = vld [vmem:[#allocation12 + $0xa4] sm:$0xf]
    %v5555 = vld [vmem:[#allocation12 + $0xa8] sm:$0xf]
    %v5556 = vld [vmem:[#allocation12 + $0xac] sm:$0xf]
    %v5557 = vld [vmem:[#allocation12 + $0xb0] sm:$0xf]
    %v5558 = vld [vmem:[#allocation12 + $0xb4] sm:$0xf]
    %v5559 = vld [vmem:[#allocation12 + $0xb8] sm:$0xf]
    %v5560 = vld [vmem:[#allocation12 + $0xbc] sm:$0xf]
    %v5561 = vld [vmem:[%s21] sm:$0x1]
    %v5563 = vperm.slane %v5561, 0
    %v5613 = vunpack.c.l.b16 %v5513
    %v5614 = vunpack.c.l.b16 %v5514
    %v5615 = vunpack.c.l.b16 %v5515
    %v5616 = vunpack.c.l.b16 %v5516
    %v5617 = vunpack.c.l.b16 %v5517
    %v5618 = vunpack.c.l.b16 %v5518
    %v5619 = vunpack.c.l.b16 %v5519
    %v5620 = vunpack.c.l.b16 %v5520
    %v5621 = vunpack.c.l.b16 %v5521
    %v5622 = vunpack.c.l.b16 %v5522
    %v5623 = vunpack.c.l.b16 %v5523
    %v5624 = vunpack.c.l.b16 %v5524
    %v5625 = vunpack.c.l.b16 %v5525
    %v5626 = vunpack.c.l.b16 %v5526
    %v5627 = vunpack.c.l.b16 %v5527
    %v5628 = vunpack.c.l.b16 %v5528
    %v5629 = vunpack.c.l.b16 %v5529
    %v5630 = vunpack.c.l.b16 %v5530
    %v5631 = vunpack.c.l.b16 %v5531
    %v5632 = vunpack.c.l.b16 %v5532
    %v5633 = vunpack.c.l.b16 %v5533
    %v5634 = vunpack.c.l.b16 %v5534
    %v5635 = vunpack.c.l.b16 %v5535
    %v5636 = vunpack.c.l.b16 %v5536
    %v5637 = vunpack.c.l.b16 %v5537
    %v5638 = vunpack.c.l.b16 %v5538
    %v5639 = vunpack.c.l.b16 %v5539
    %v5640 = vunpack.c.l.b16 %v5540
    %v5641 = vunpack.c.l.b16 %v5541
    %v5642 = vunpack.c.l.b16 %v5542
    %v5643 = vunpack.c.l.b16 %v5543
    %v5644 = vunpack.c.l.b16 %v5544
    %v5645 = vunpack.c.l.b16 %v5545
    %v5646 = vunpack.c.l.b16 %v5546
    %v5647 = vunpack.c.l.b16 %v5547
    %v5648 = vunpack.c.l.b16 %v5548
    %v5649 = vunpack.c.l.b16 %v5549
    %v5650 = vunpack.c.l.b16 %v5550
    %v5651 = vunpack.c.l.b16 %v5551
    %v5652 = vunpack.c.l.b16 %v5552
    %v5653 = vunpack.c.l.b16 %v5553
    %v5654 = vunpack.c.l.b16 %v5554
    %v5655 = vunpack.c.l.b16 %v5555
    %v5656 = vunpack.c.l.b16 %v5556
    %v5657 = vunpack.c.l.b16 %v5557
    %v5658 = vunpack.c.l.b16 %v5558
    %v5659 = vunpack.c.l.b16 %v5559
    %v5660 = vunpack.c.l.b16 %v5560
    %v5661 = vpack.c.b16 %v5614, %v5613
    %v5662 = vpack.c.b16 %v5616, %v5615
    %v5663 = vpack.c.b16 %v5618, %v5617
    %v5664 = vpack.c.b16 %v5620, %v5619
    %v5665 = vpack.c.b16 %v5622, %v5621
    %v5666 = vpack.c.b16 %v5624, %v5623
    %v5667 = vpack.c.b16 %v5626, %v5625
    %v5668 = vpack.c.b16 %v5628, %v5627
    %v5669 = vpack.c.b16 %v5630, %v5629
    %v5670 = vpack.c.b16 %v5632, %v5631
    %v5671 = vpack.c.b16 %v5634, %v5633
    %v5672 = vpack.c.b16 %v5636, %v5635
    %v5673 = vpack.c.b16 %v5638, %v5637
    %v5674 = vpack.c.b16 %v5640, %v5639
    %v5675 = vpack.c.b16 %v5642, %v5641
    %v5676 = vpack.c.b16 %v5644, %v5643
    %v5677 = vpack.c.b16 %v5646, %v5645
    %v5678 = vpack.c.b16 %v5648, %v5647
    %v5679 = vpack.c.b16 %v5650, %v5649
    %v5680 = vpack.c.b16 %v5652, %v5651
    %v5681 = vpack.c.b16 %v5654, %v5653
    %v5682 = vpack.c.b16 %v5656, %v5655
    %v5683 = vpack.c.b16 %v5658, %v5657
    %v5684 = vpack.c.b16 %v5660, %v5659
    %5709 = vmatpush.bf16.msra.mxu0 %v5668
    %5710 = vmatpush.bf16.msra.mxu0 %v5667
    %5711 = vmatpush.bf16.msra.mxu0 %v5666
    %5712 = vmatpush.bf16.msra.mxu0 %v5665
    %5713 = vmatpush.bf16.msra.mxu0 %v5664
    %5714 = vmatpush.bf16.msra.mxu0 %v5663
    %5715 = vmatpush.bf16.msra.mxu0 %v5662
    %5716 = vmatpush.bf16.msra.mxu0 %v5661
    %5717 = vmatmul.bf16.gmra.mxu0 %v5489
    %v5718 = vpop.f32.mrf.mxu0
    %v5719 = vadd.f32 %v5563, %v5718
    %v5720 = vpop.f32.mrf.mxu0
    %v5721 = vadd.f32 %v5563, %v5720
    %5722 = vmatmul.bf16.gmra.mxu0 %v5492
    %v5723 = vpop.f32.mrf.mxu0
    %v5724 = vadd.f32 %v5563, %v5723
    %v5725 = vpop.f32.mrf.mxu0
    %v5726 = vadd.f32 %v5563, %v5725
    %5727 = vmatmul.bf16.gmra.mxu0 %v5495
    %v5728 = vpop.f32.mrf.mxu0
    %v5729 = vadd.f32 %v5563, %v5728
    %v5730 = vpop.f32.mrf.mxu0
    %v5731 = vadd.f32 %v5563, %v5730
    %5732 = vmatmul.bf16.gmra.mxu0 %v5498
    %v5733 = vpop.f32.mrf.mxu0
    %v5734 = vadd.f32 %v5563, %v5733
    %v5735 = vpop.f32.mrf.mxu0
    %v5736 = vadd.f32 %v5563, %v5735
    %5737 = vmatmul.bf16.gmra.mxu0 %v5501
    %v5738 = vpop.f32.mrf.mxu0
    %v5739 = vadd.f32 %v5563, %v5738
    %v5740 = vpop.f32.mrf.mxu0
    %v5741 = vadd.f32 %v5563, %v5740
    %5742 = vmatmul.bf16.gmra.mxu0 %v5504
    %v5743 = vpop.f32.mrf.mxu0
    %v5744 = vadd.f32 %v5563, %v5743
    %v5745 = vpop.f32.mrf.mxu0
    %v5746 = vadd.f32 %v5563, %v5745
    %5747 = vmatmul.bf16.gmra.mxu0 %v5507
    %v5748 = vpop.f32.mrf.mxu0
    %v5749 = vadd.f32 %v5563, %v5748
    %v5750 = vpop.f32.mrf.mxu0
    %v5751 = vadd.f32 %v5563, %v5750
    %5752 = vmatmul.bf16.gmra.mxu0 %v5510
    %v5753 = vpop.f32.mrf.mxu0
    %v5754 = vadd.f32 %v5563, %v5753
    %v5755 = vpop.f32.mrf.mxu0
    %v5756 = vadd.f32 %v5563, %v5755
    %5757 = vdwg.mxu0
    %5758 = vmatpush.bf16.msra.mxu0 %v5676
    %5759 = vmatpush.bf16.msra.mxu0 %v5675
    %5760 = vmatpush.bf16.msra.mxu0 %v5674
    %5761 = vmatpush.bf16.msra.mxu0 %v5673
    %5762 = vmatpush.bf16.msra.mxu0 %v5672
    %5763 = vmatpush.bf16.msra.mxu0 %v5671
    %5764 = vmatpush.bf16.msra.mxu0 %v5670
    %5765 = vmatpush.bf16.msra.mxu0 %v5669
    %5766 = vmatmul.bf16.gmra.mxu0 %v5490
    %v5767 = vpop.f32.mrf.mxu0
    %v5768 = vadd.f32 %v5719, %v5767
    %v5769 = vpop.f32.mrf.mxu0
    %v5770 = vadd.f32 %v5721, %v5769
    %5771 = vmatmul.bf16.gmra.mxu0 %v5493
    %v5772 = vpop.f32.mrf.mxu0
    %v5773 = vadd.f32 %v5724, %v5772
    %v5774 = vpop.f32.mrf.mxu0
    %v5775 = vadd.f32 %v5726, %v5774
    %5776 = vmatmul.bf16.gmra.mxu0 %v5496
    %v5777 = vpop.f32.mrf.mxu0
    %v5778 = vadd.f32 %v5729, %v5777
    %v5779 = vpop.f32.mrf.mxu0
    %v5780 = vadd.f32 %v5731, %v5779
    %5781 = vmatmul.bf16.gmra.mxu0 %v5499
    %v5782 = vpop.f32.mrf.mxu0
    %v5783 = vadd.f32 %v5734, %v5782
    %v5784 = vpop.f32.mrf.mxu0
    %v5785 = vadd.f32 %v5736, %v5784
    %5786 = vmatmul.bf16.gmra.mxu0 %v5502
    %v5787 = vpop.f32.mrf.mxu0
    %v5788 = vadd.f32 %v5739, %v5787
    %v5789 = vpop.f32.mrf.mxu0
    %v5790 = vadd.f32 %v5741, %v5789
    %5791 = vmatmul.bf16.gmra.mxu0 %v5505
    %v5792 = vpop.f32.mrf.mxu0
    %v5793 = vadd.f32 %v5744, %v5792
    %v5794 = vpop.f32.mrf.mxu0
    %v5795 = vadd.f32 %v5746, %v5794
    %5796 = vmatmul.bf16.gmra.mxu0 %v5508
    %v5797 = vpop.f32.mrf.mxu0
    %v5798 = vadd.f32 %v5749, %v5797
    %v5799 = vpop.f32.mrf.mxu0
    %v5800 = vadd.f32 %v5751, %v5799
    %5801 = vmatmul.bf16.gmra.mxu0 %v5511
    %v5802 = vpop.f32.mrf.mxu0
    %v5803 = vadd.f32 %v5754, %v5802
    %v5804 = vpop.f32.mrf.mxu0
    %v5805 = vadd.f32 %v5756, %v5804
    %5806 = vdwg.mxu0
    %5807 = vmatpush.bf16.msra.mxu0 %v5684
    %5808 = vmatpush.bf16.msra.mxu0 %v5683
    %5809 = vmatpush.bf16.msra.mxu0 %v5682
    %5810 = vmatpush.bf16.msra.mxu0 %v5681
    %5811 = vmatpush.bf16.msra.mxu0 %v5680
    %5812 = vmatpush.bf16.msra.mxu0 %v5679
    %5813 = vmatpush.bf16.msra.mxu0 %v5678
    %5814 = vmatpush.bf16.msra.mxu0 %v5677
    %5815 = vmatmul.bf16.gmra.mxu0 %v5491
    %v5816 = vpop.f32.mrf.mxu0
    %v5817 = vadd.f32 %v5768, %v5816
    %v5818 = vpop.f32.mrf.mxu0
    %v5819 = vadd.f32 %v5770, %v5818
    %5820 = vmatmul.bf16.gmra.mxu0 %v5494
    %v5821 = vpop.f32.mrf.mxu0
    %v5822 = vadd.f32 %v5773, %v5821
    %v5823 = vpop.f32.mrf.mxu0
    %v5824 = vadd.f32 %v5775, %v5823
    %5825 = vmatmul.bf16.gmra.mxu0 %v5497
    %v5826 = vpop.f32.mrf.mxu0
    %v5827 = vadd.f32 %v5778, %v5826
    %v5828 = vpop.f32.mrf.mxu0
    %v5829 = vadd.f32 %v5780, %v5828
    %5830 = vmatmul.bf16.gmra.mxu0 %v5500
    %v5831 = vpop.f32.mrf.mxu0
    %v5832 = vadd.f32 %v5783, %v5831
    %v5833 = vpop.f32.mrf.mxu0
    %v5834 = vadd.f32 %v5785, %v5833
    %5835 = vmatmul.bf16.gmra.mxu0 %v5503
    %v5836 = vpop.f32.mrf.mxu0
    %v5837 = vadd.f32 %v5788, %v5836
    %v5838 = vpop.f32.mrf.mxu0
    %v5839 = vadd.f32 %v5790, %v5838
    %5840 = vmatmul.bf16.gmra.mxu0 %v5506
    %v5841 = vpop.f32.mrf.mxu0
    %v5842 = vadd.f32 %v5793, %v5841
    %v5843 = vpop.f32.mrf.mxu0
    %v5844 = vadd.f32 %v5795, %v5843
    %5845 = vmatmul.bf16.gmra.mxu0 %v5509
    %v5846 = vpop.f32.mrf.mxu0
    %v5847 = vadd.f32 %v5798, %v5846
    %v5848 = vpop.f32.mrf.mxu0
    %v5849 = vadd.f32 %v5800, %v5848
    %5850 = vmatmul.bf16.gmra.mxu0 %v5512
    %v5851 = vpop.f32.mrf.mxu0
    %v5852 = vadd.f32 %v5803, %v5851
    %v5853 = vpop.f32.mrf.mxu0
    %v5854 = vadd.f32 %v5805, %v5853
    %5855 = vdwg.mxu0
    %v5856 = vmax.f32 %v5817, 0.0
    %v5857 = vmax.f32 %v5819, 0.0
    %v5858 = vmax.f32 %v5822, 0.0
    %v5859 = vmax.f32 %v5824, 0.0
    %v5860 = vmax.f32 %v5827, 0.0
    %v5861 = vmax.f32 %v5829, 0.0
    %v5862 = vmax.f32 %v5832, 0.0
    %v5863 = vmax.f32 %v5834, 0.0
    %v5864 = vmax.f32 %v5837, 0.0
    %v5865 = vmax.f32 %v5839, 0.0
    %v5866 = vmax.f32 %v5842, 0.0
    %v5867 = vmax.f32 %v5844, 0.0
    %v5868 = vmax.f32 %v5847, 0.0
    %v5869 = vmax.f32 %v5849, 0.0
    %v5870 = vmax.f32 %v5852, 0.0
    %v5871 = vmax.f32 %v5854, 0.0
    %v5872 = vadd.f32 %v5856, %v5402
    %v5873 = vadd.f32 %v5857, %v5404
    %v5874 = vadd.f32 %v5858, %v5407
    %v5875 = vadd.f32 %v5859, %v5409
    %v5876 = vadd.f32 %v5860, %v5412
    %v5877 = vadd.f32 %v5861, %v5414
    %v5878 = vadd.f32 %v5862, %v5417
    %v5879 = vadd.f32 %v5863, %v5419
    %v5880 = vadd.f32 %v5864, %v5422
    %v5881 = vadd.f32 %v5865, %v5424
    %v5882 = vadd.f32 %v5866, %v5427
    %v5883 = vadd.f32 %v5867, %v5429
    %v5884 = vadd.f32 %v5868, %v5432
    %v5885 = vadd.f32 %v5869, %v5434
    %v5886 = vadd.f32 %v5870, %v5437
    %v5887 = vadd.f32 %v5871, %v5439
    %v5888 = vmax.f32 %v5872, 0.0
    %v5889 = vmax.f32 %v5873, 0.0
    %v5890 = vmax.f32 %v5874, 0.0
    %v5891 = vmax.f32 %v5875, 0.0
    %v5892 = vmax.f32 %v5876, 0.0
    %v5893 = vmax.f32 %v5877, 0.0
    %v5894 = vmax.f32 %v5878, 0.0
    %v5895 = vmax.f32 %v5879, 0.0
    %v5896 = vmax.f32 %v5880, 0.0
    %v5897 = vmax.f32 %v5881, 0.0
    %v5898 = vmax.f32 %v5882, 0.0
    %v5899 = vmax.f32 %v5883, 0.0
    %v5900 = vmax.f32 %v5884, 0.0
    %v5901 = vmax.f32 %v5885, 0.0
    %v5902 = vmax.f32 %v5886, 0.0
    %v5903 = vmax.f32 %v5887, 0.0
    %v5904 = vpack.c.bf16 %v5889, %v5888
    %v5905 = vpack.c.bf16 %v5891, %v5890
    %v5906 = vpack.c.bf16 %v5893, %v5892
    %v5907 = vpack.c.bf16 %v5895, %v5894
    %v5908 = vpack.c.bf16 %v5897, %v5896
    %v5909 = vpack.c.bf16 %v5899, %v5898
    %v5910 = vpack.c.bf16 %v5901, %v5900
    %v5911 = vpack.c.bf16 %v5903, %v5902
    %v5912 = vld [vmem:[#allocation13] sm:$0xf]
    %v5913 = vld [vmem:[#allocation13 + $0x4] sm:$0xf]
    %v5914 = vld [vmem:[#allocation13 + $0x8] sm:$0xf]
    %v5915 = vld [vmem:[#allocation13 + $0xc] sm:$0xf]
    %v5916 = vld [vmem:[#allocation13 + $0x10] sm:$0xf]
    %v5917 = vld [vmem:[#allocation13 + $0x14] sm:$0xf]
    %v5918 = vld [vmem:[#allocation13 + $0x18] sm:$0xf]
    %v5919 = vld [vmem:[#allocation13 + $0x1c] sm:$0xf]
    %v5920 = vld [vmem:[#allocation13 + $0x20] sm:$0xf]
    %v5921 = vld [vmem:[#allocation13 + $0x24] sm:$0xf]
    %v5922 = vld [vmem:[#allocation13 + $0x28] sm:$0xf]
    %v5923 = vld [vmem:[#allocation13 + $0x2c] sm:$0xf]
    %v5924 = vld [vmem:[#allocation13 + $0x30] sm:$0xf]
    %v5925 = vld [vmem:[#allocation13 + $0x34] sm:$0xf]
    %v5926 = vld [vmem:[#allocation13 + $0x38] sm:$0xf]
    %v5927 = vld [vmem:[#allocation13 + $0x3c] sm:$0xf]
    %v5928 = vld [vmem:[%s23] sm:$0x1]
    %v5930 = vperm.slane %v5928, 0
    %v5948 = vunpack.c.l.b16 %v5912
    %v5949 = vunpack.c.l.b16 %v5913
    %v5950 = vunpack.c.l.b16 %v5914
    %v5951 = vunpack.c.l.b16 %v5915
    %v5952 = vunpack.c.l.b16 %v5916
    %v5953 = vunpack.c.l.b16 %v5917
    %v5954 = vunpack.c.l.b16 %v5918
    %v5955 = vunpack.c.l.b16 %v5919
    %v5956 = vunpack.c.l.b16 %v5920
    %v5957 = vunpack.c.l.b16 %v5921
    %v5958 = vunpack.c.l.b16 %v5922
    %v5959 = vunpack.c.l.b16 %v5923
    %v5960 = vunpack.c.l.b16 %v5924
    %v5961 = vunpack.c.l.b16 %v5925
    %v5962 = vunpack.c.l.b16 %v5926
    %v5963 = vunpack.c.l.b16 %v5927
    %v5964 = vpack.c.b16 %v5949, %v5948
    %v5965 = vpack.c.b16 %v5951, %v5950
    %v5966 = vpack.c.b16 %v5953, %v5952
    %v5967 = vpack.c.b16 %v5955, %v5954
    %v5968 = vpack.c.b16 %v5957, %v5956
    %v5969 = vpack.c.b16 %v5959, %v5958
    %v5970 = vpack.c.b16 %v5961, %v5960
    %v5971 = vpack.c.b16 %v5963, %v5962
    %5980 = vmatpush.bf16.msra.mxu0 %v5971
    %5981 = vmatpush.bf16.msra.mxu0 %v5970
    %5982 = vmatpush.bf16.msra.mxu0 %v5969
    %5983 = vmatpush.bf16.msra.mxu0 %v5968
    %5984 = vmatpush.bf16.msra.mxu0 %v5967
    %5985 = vmatpush.bf16.msra.mxu0 %v5966
    %5986 = vmatpush.bf16.msra.mxu0 %v5965
    %5987 = vmatpush.bf16.msra.mxu0 %v5964
    %5988 = vmatmul.bf16.gmra.mxu0 %v5904
    %v5989 = vpop.f32.mrf.mxu0
    %v5990 = vadd.f32 %v5930, %v5989
    %v5991 = vpop.f32.mrf.mxu0
    %v5992 = vadd.f32 %v5930, %v5991
    %5993 = vmatmul.bf16.gmra.mxu0 %v5905
    %v5994 = vpop.f32.mrf.mxu0
    %v5995 = vadd.f32 %v5930, %v5994
    %v5996 = vpop.f32.mrf.mxu0
    %v5997 = vadd.f32 %v5930, %v5996
    %5998 = vmatmul.bf16.gmra.mxu0 %v5906
    %v5999 = vpop.f32.mrf.mxu0
    %v6000 = vadd.f32 %v5930, %v5999
    %v6001 = vpop.f32.mrf.mxu0
    %v6002 = vadd.f32 %v5930, %v6001
    %6003 = vmatmul.bf16.gmra.mxu0 %v5907
    %v6004 = vpop.f32.mrf.mxu0
    %v6005 = vadd.f32 %v5930, %v6004
    %v6006 = vpop.f32.mrf.mxu0
    %v6007 = vadd.f32 %v5930, %v6006
    %6008 = vmatmul.bf16.gmra.mxu0 %v5908
    %v6009 = vpop.f32.mrf.mxu0
    %v6010 = vadd.f32 %v5930, %v6009
    %v6011 = vpop.f32.mrf.mxu0
    %v6012 = vadd.f32 %v5930, %v6011
    %6013 = vmatmul.bf16.gmra.mxu0 %v5909
    %v6014 = vpop.f32.mrf.mxu0
    %v6015 = vadd.f32 %v5930, %v6014
    %v6016 = vpop.f32.mrf.mxu0
    %v6017 = vadd.f32 %v5930, %v6016
    %6018 = vmatmul.bf16.gmra.mxu0 %v5910
    %v6019 = vpop.f32.mrf.mxu0
    %v6020 = vadd.f32 %v5930, %v6019
    %v6021 = vpop.f32.mrf.mxu0
    %v6022 = vadd.f32 %v5930, %v6021
    %6023 = vmatmul.bf16.gmra.mxu0 %v5911
    %v6024 = vpop.f32.mrf.mxu0
    %v6025 = vadd.f32 %v5930, %v6024
    %v6026 = vpop.f32.mrf.mxu0
    %v6027 = vadd.f32 %v5930, %v6026
    %6028 = vdwg.mxu0
    %v6029 = vmax.f32 %v5990, 0.0
    %v6030 = vmax.f32 %v5992, 0.0
    %v6031 = vmax.f32 %v5995, 0.0
    %v6032 = vmax.f32 %v5997, 0.0
    %v6033 = vmax.f32 %v6000, 0.0
    %v6034 = vmax.f32 %v6002, 0.0
    %v6035 = vmax.f32 %v6005, 0.0
    %v6036 = vmax.f32 %v6007, 0.0
    %v6037 = vmax.f32 %v6010, 0.0
    %v6038 = vmax.f32 %v6012, 0.0
    %v6039 = vmax.f32 %v6015, 0.0
    %v6040 = vmax.f32 %v6017, 0.0
    %v6041 = vmax.f32 %v6020, 0.0
    %v6042 = vmax.f32 %v6022, 0.0
    %v6043 = vmax.f32 %v6025, 0.0
    %v6044 = vmax.f32 %v6027, 0.0
    %v6045 = vpack.c.bf16 %v6030, %v6029
    %v6046 = vpack.c.bf16 %v6032, %v6031
    %v6047 = vpack.c.bf16 %v6034, %v6033
    %v6048 = vpack.c.bf16 %v6036, %v6035
    %v6049 = vpack.c.bf16 %v6038, %v6037
    %v6050 = vpack.c.bf16 %v6040, %v6039
    %v6051 = vpack.c.bf16 %v6042, %v6041
    %v6052 = vpack.c.bf16 %v6044, %v6043
    %v6053 = vld [vmem:[#allocation15] sm:$0xf]
    %v6054 = vld [vmem:[#allocation15 + $0x4] sm:$0xf]
    %v6055 = vld [vmem:[#allocation15 + $0x8] sm:$0xf]
    %v6056 = vld [vmem:[#allocation15 + $0xc] sm:$0xf]
    %v6057 = vld [vmem:[#allocation15 + $0x10] sm:$0xf]
    %v6058 = vld [vmem:[#allocation15 + $0x14] sm:$0xf]
    %v6059 = vld [vmem:[#allocation15 + $0x18] sm:$0xf]
    %v6060 = vld [vmem:[#allocation15 + $0x1c] sm:$0xf]
    %v6061 = vld [vmem:[#allocation15 + $0x20] sm:$0xf]
    %v6062 = vld [vmem:[#allocation15 + $0x24] sm:$0xf]
    %v6063 = vld [vmem:[#allocation15 + $0x28] sm:$0xf]
    %v6064 = vld [vmem:[#allocation15 + $0x2c] sm:$0xf]
    %v6065 = vld [vmem:[#allocation15 + $0x30] sm:$0xf]
    %v6066 = vld [vmem:[#allocation15 + $0x34] sm:$0xf]
    %v6067 = vld [vmem:[#allocation15 + $0x38] sm:$0xf]
    %v6068 = vld [vmem:[#allocation15 + $0x3c] sm:$0xf]
    %v6069 = vld [vmem:[%s25] sm:$0x1]
    %v6071 = vperm.slane %v6069, 0
    %v6089 = vunpack.c.l.b16 %v6053
    %v6090 = vunpack.c.l.b16 %v6054
    %v6091 = vunpack.c.l.b16 %v6055
    %v6092 = vunpack.c.l.b16 %v6056
    %v6093 = vunpack.c.l.b16 %v6057
    %v6094 = vunpack.c.l.b16 %v6058
    %v6095 = vunpack.c.l.b16 %v6059
    %v6096 = vunpack.c.l.b16 %v6060
    %v6097 = vunpack.c.l.b16 %v6061
    %v6098 = vunpack.c.l.b16 %v6062
    %v6099 = vunpack.c.l.b16 %v6063
    %v6100 = vunpack.c.l.b16 %v6064
    %v6101 = vunpack.c.l.b16 %v6065
    %v6102 = vunpack.c.l.b16 %v6066
    %v6103 = vunpack.c.l.b16 %v6067
    %v6104 = vunpack.c.l.b16 %v6068
    %v6105 = vpack.c.b16 %v6090, %v6089
    %v6106 = vpack.c.b16 %v6092, %v6091
    %v6107 = vpack.c.b16 %v6094, %v6093
    %v6108 = vpack.c.b16 %v6096, %v6095
    %v6109 = vpack.c.b16 %v6098, %v6097
    %v6110 = vpack.c.b16 %v6100, %v6099
    %v6111 = vpack.c.b16 %v6102, %v6101
    %v6112 = vpack.c.b16 %v6104, %v6103
    %6121 = vmatpush.bf16.msra.mxu0 %v6112
    %6122 = vmatpush.bf16.msra.mxu0 %v6111
    %6123 = vmatpush.bf16.msra.mxu0 %v6110
    %6124 = vmatpush.bf16.msra.mxu0 %v6109
    %6125 = vmatpush.bf16.msra.mxu0 %v6108
    %6126 = vmatpush.bf16.msra.mxu0 %v6107
    %6127 = vmatpush.bf16.msra.mxu0 %v6106
    %6128 = vmatpush.bf16.msra.mxu0 %v6105
    %6129 = vmatmul.bf16.gmra.mxu0 %v6045
    %v6130 = vpop.f32.mrf.mxu0
    %v6131 = vadd.f32 %v6071, %v6130
    %v6132 = vpop.f32.mrf.mxu0
    %v6133 = vadd.f32 %v6071, %v6132
    %6134 = vmatmul.bf16.gmra.mxu0 %v6046
    %v6135 = vpop.f32.mrf.mxu0
    %v6136 = vadd.f32 %v6071, %v6135
    %v6137 = vpop.f32.mrf.mxu0
    %v6138 = vadd.f32 %v6071, %v6137
    %6139 = vmatmul.bf16.gmra.mxu0 %v6047
    %v6140 = vpop.f32.mrf.mxu0
    %v6141 = vadd.f32 %v6071, %v6140
    %v6142 = vpop.f32.mrf.mxu0
    %v6143 = vadd.f32 %v6071, %v6142
    %6144 = vmatmul.bf16.gmra.mxu0 %v6048
    %v6145 = vpop.f32.mrf.mxu0
    %v6146 = vadd.f32 %v6071, %v6145
    %v6147 = vpop.f32.mrf.mxu0
    %v6148 = vadd.f32 %v6071, %v6147
    %6149 = vmatmul.bf16.gmra.mxu0 %v6049
    %v6150 = vpop.f32.mrf.mxu0
    %v6151 = vadd.f32 %v6071, %v6150
    %v6152 = vpop.f32.mrf.mxu0
    %v6153 = vadd.f32 %v6071, %v6152
    %6154 = vmatmul.bf16.gmra.mxu0 %v6050
    %v6155 = vpop.f32.mrf.mxu0
    %v6156 = vadd.f32 %v6071, %v6155
    %v6157 = vpop.f32.mrf.mxu0
    %v6158 = vadd.f32 %v6071, %v6157
    %6159 = vmatmul.bf16.gmra.mxu0 %v6051
    %v6160 = vpop.f32.mrf.mxu0
    %v6161 = vadd.f32 %v6071, %v6160
    %v6162 = vpop.f32.mrf.mxu0
    %v6163 = vadd.f32 %v6071, %v6162
    %6164 = vmatmul.bf16.gmra.mxu0 %v6052
    %v6165 = vpop.f32.mrf.mxu0
    %v6166 = vadd.f32 %v6071, %v6165
    %v6167 = vpop.f32.mrf.mxu0
    %v6168 = vadd.f32 %v6071, %v6167
    %6169 = vdwg.mxu0
    %6170 = vrot.lane.b32.xlu0 %v6131, 64
    %v6171 = vpop.permute.xlu0 %6170
    %6172 = vrot.lane.b32.xlu0 %v6133, 64
    %v6173 = vpop.permute.xlu0 %6172
    %6174 = vrot.lane.b32.xlu0 %v6136, 64
    %v6175 = vpop.permute.xlu0 %6174
    %6176 = vrot.lane.b32.xlu0 %v6138, 64
    %v6177 = vpop.permute.xlu0 %6176
    %6178 = vrot.lane.b32.xlu0 %v6141, 64
    %v6179 = vpop.permute.xlu0 %6178
    %6180 = vrot.lane.b32.xlu0 %v6143, 64
    %v6181 = vpop.permute.xlu0 %6180
    %6182 = vrot.lane.b32.xlu0 %v6146, 64
    %v6183 = vpop.permute.xlu0 %6182
    %6184 = vrot.lane.b32.xlu0 %v6148, 64
    %v6185 = vpop.permute.xlu0 %6184
    %6186 = vrot.lane.b32.xlu0 %v6151, 64
    %v6187 = vpop.permute.xlu0 %6186
    %6188 = vrot.lane.b32.xlu0 %v6153, 64
    %v6189 = vpop.permute.xlu0 %6188
    %6190 = vrot.lane.b32.xlu0 %v6156, 64
    %v6191 = vpop.permute.xlu0 %6190
    %6192 = vrot.lane.b32.xlu0 %v6158, 64
    %v6193 = vpop.permute.xlu0 %6192
    %6194 = vrot.lane.b32.xlu0 %v6161, 64
    %v6195 = vpop.permute.xlu0 %6194
    %6196 = vrot.lane.b32.xlu0 %v6163, 64
    %v6197 = vpop.permute.xlu0 %6196
    %6198 = vrot.lane.b32.xlu0 %v6166, 64
    %v6199 = vpop.permute.xlu0 %6198
    %6200 = vrot.lane.b32.xlu0 %v6168, 64
    %v6201 = vpop.permute.xlu0 %6200
    %v6202 = vmul.f32 %v6171, 0.5
    %v6203 = vmul.f32 %v6173, 0.5
    %v6204 = vmul.f32 %v6175, 0.5
    %v6205 = vmul.f32 %v6177, 0.5
    %v6206 = vmul.f32 %v6179, 0.5
    %v6207 = vmul.f32 %v6181, 0.5
    %v6208 = vmul.f32 %v6183, 0.5
    %v6209 = vmul.f32 %v6185, 0.5
    %v6210 = vmul.f32 %v6187, 0.5
    %v6211 = vmul.f32 %v6189, 0.5
    %v6212 = vmul.f32 %v6191, 0.5
    %v6213 = vmul.f32 %v6193, 0.5
    %v6214 = vmul.f32 %v6195, 0.5
    %v6215 = vmul.f32 %v6197, 0.5
    %v6216 = vmul.f32 %v6199, 0.5
    %v6217 = vmul.f32 %v6201, 0.5
    %v6218 = vmul.f32 %v6202, 1.442695
    %v6219 = vpow.pop %v6218
    %v6220 = vmul.f32 %v6203, 1.442695
    %v6221 = vpow.pop %v6220
    %v6222 = vmul.f32 %v6204, 1.442695
    %v6223 = vpow.pop %v6222
    %v6224 = vmul.f32 %v6205, 1.442695
    %v6225 = vpow.pop %v6224
    %v6226 = vmul.f32 %v6206, 1.442695
    %v6227 = vpow.pop %v6226
    %v6228 = vmul.f32 %v6207, 1.442695
    %v6229 = vpow.pop %v6228
    %v6230 = vmul.f32 %v6208, 1.442695
    %v6231 = vpow.pop %v6230
    %v6232 = vmul.f32 %v6209, 1.442695
    %v6233 = vpow.pop %v6232
    %v6234 = vmul.f32 %v6210, 1.442695
    %v6235 = vpow.pop %v6234
    %v6236 = vmul.f32 %v6211, 1.442695
    %v6237 = vpow.pop %v6236
    %v6238 = vmul.f32 %v6212, 1.442695
    %v6239 = vpow.pop %v6238
    %v6240 = vmul.f32 %v6213, 1.442695
    %v6241 = vpow.pop %v6240
    %v6242 = vmul.f32 %v6214, 1.442695
    %v6243 = vpow.pop %v6242
    %v6244 = vmul.f32 %v6215, 1.442695
    %v6245 = vpow.pop %v6244
    %v6246 = vmul.f32 %v6216, 1.442695
    %v6247 = vpow.pop %v6246
    %v6248 = vmul.f32 %v6217, 1.442695
    %v6249 = vpow.pop %v6248
    %v6250 = vld [vmem:[%s1] sm:$0xff]
    %v6251 = vld [vmem:[%s1 + $0x8] sm:$0xff]
    %v6252 = vld [vmem:[%s1 + $0x10] sm:$0xff]
    %v6253 = vld [vmem:[%s1 + $0x18] sm:$0xff]
    %v6254 = vld [vmem:[%s1 + $0x20] sm:$0xff]
    %v6255 = vld [vmem:[%s1 + $0x28] sm:$0xff]
    %v6256 = vld [vmem:[%s1 + $0x30] sm:$0xff]
    %v6257 = vld [vmem:[%s1 + $0x38] sm:$0xff]
    %v6258 = vld [vmem:[%s1 + $0x40] sm:$0xff]
    %v6259 = vld [vmem:[%s1 + $0x48] sm:$0xff]
    %v6260 = vld [vmem:[%s1 + $0x50] sm:$0xff]
    %v6261 = vld [vmem:[%s1 + $0x58] sm:$0xff]
    %v6262 = vld [vmem:[%s1 + $0x60] sm:$0xff]
    %v6263 = vld [vmem:[%s1 + $0x68] sm:$0xff]
    %v6264 = vld [vmem:[%s1 + $0x70] sm:$0xff]
    %v6265 = vld [vmem:[%s1 + $0x78] sm:$0xff]
    %v6266 = vmul.f32 %v6250, %v6219
    %v6267 = vmul.f32 %v6251, %v6221
    %v6268 = vmul.f32 %v6252, %v6223
    %v6269 = vmul.f32 %v6253, %v6225
    %v6270 = vmul.f32 %v6254, %v6227
    %v6271 = vmul.f32 %v6255, %v6229
    %v6272 = vmul.f32 %v6256, %v6231
    %v6273 = vmul.f32 %v6257, %v6233
    %v6274 = vmul.f32 %v6258, %v6235
    %v6275 = vmul.f32 %v6259, %v6237
    %v6276 = vmul.f32 %v6260, %v6239
    %v6277 = vmul.f32 %v6261, %v6241
    %v6278 = vmul.f32 %v6262, %v6243
    %v6279 = vmul.f32 %v6263, %v6245
    %v6280 = vmul.f32 %v6264, %v6247
    %v6281 = vmul.f32 %v6265, %v6249
    %v6282 = vadd.f32 %v6131, %v6266
    %v6283 = vadd.f32 %v6133, %v6267
    %v6284 = vadd.f32 %v6136, %v6268
    %v6285 = vadd.f32 %v6138, %v6269
    %v6286 = vadd.f32 %v6141, %v6270
    %v6287 = vadd.f32 %v6143, %v6271
    %v6288 = vadd.f32 %v6146, %v6272
    %v6289 = vadd.f32 %v6148, %v6273
    %v6290 = vadd.f32 %v6151, %v6274
    %v6291 = vadd.f32 %v6153, %v6275
    %v6292 = vadd.f32 %v6156, %v6276
    %v6293 = vadd.f32 %v6158, %v6277
    %v6294 = vadd.f32 %v6161, %v6278
    %v6295 = vadd.f32 %v6163, %v6279
    %v6296 = vadd.f32 %v6166, %v6280
    %v6297 = vadd.f32 %v6168, %v6281
    %v6298 = vlaneseq
    %v6299 = vand.u32 %v6298, 127
    %vm6300 = vcmp.lt.s32.totalorder %v6299, 32
    %v6301 = vsel %vm6300, %v6282, 0.0
    %v6302 = vsel %vm6300, %v6283, 0.0
    %v6303 = vsel %vm6300, %v6284, 0.0
    %v6304 = vsel %vm6300, %v6285, 0.0
    %v6305 = vsel %vm6300, %v6286, 0.0
    %v6306 = vsel %vm6300, %v6287, 0.0
    %v6307 = vsel %vm6300, %v6288, 0.0
    %v6308 = vsel %vm6300, %v6289, 0.0
    %v6309 = vsel %vm6300, %v6290, 0.0
    %v6310 = vsel %vm6300, %v6291, 0.0
    %v6311 = vsel %vm6300, %v6292, 0.0
    %v6312 = vsel %vm6300, %v6293, 0.0
    %v6313 = vsel %vm6300, %v6294, 0.0
    %v6314 = vsel %vm6300, %v6295, 0.0
    %v6315 = vsel %vm6300, %v6296, 0.0
    %v6316 = vsel %vm6300, %v6297, 0.0
    %6317 = vst [vmem:[%s26] sm:$0xff] %v6301
    %6318 = vst [vmem:[%s26 + $0x8] sm:$0xff] %v6302
    %6319 = vst [vmem:[%s26 + $0x10] sm:$0xff] %v6303
    %6320 = vst [vmem:[%s26 + $0x18] sm:$0xff] %v6304
    %6321 = vst [vmem:[%s26 + $0x20] sm:$0xff] %v6305
    %6322 = vst [vmem:[%s26 + $0x28] sm:$0xff] %v6306
    %6323 = vst [vmem:[%s26 + $0x30] sm:$0xff] %v6307
    %6324 = vst [vmem:[%s26 + $0x38] sm:$0xff] %v6308
    %6325 = vst [vmem:[%s26 + $0x40] sm:$0xff] %v6309
    %6326 = vst [vmem:[%s26 + $0x48] sm:$0xff] %v6310
    %6327 = vst [vmem:[%s26 + $0x50] sm:$0xff] %v6311
    %6328 = vst [vmem:[%s26 + $0x58] sm:$0xff] %v6312
    %6329 = vst [vmem:[%s26 + $0x60] sm:$0xff] %v6313
    %6330 = vst [vmem:[%s26 + $0x68] sm:$0xff] %v6314
    %6331 = vst [vmem:[%s26 + $0x70] sm:$0xff] %v6315
    %6332 = vst [vmem:[%s26 + $0x78] sm:$0xff] %v6316
    // Predicated region
    $region142: #{audio_enc_forward.1} parent=1 // pred_check
      _
    $region143: #{audio_enc_forward.1} parent=1 // pred_check_branch
      %6334 = sbr.rel (0) target = $region145
    $region144: #{audio_enc_forward.1} parent=1 // pred_region
      _
    $region145: #{audio_enc_forward.1} parent=1 // pred_fallthru
      _
    // Predicated region
    $region146: #{audio_enc_forward.1} parent=1 // pred_check
      _
    $region147: #{audio_enc_forward.1} parent=1 // pred_check_branch
      %6336 = sbr.rel (0) target = $region149
    $region148: #{audio_enc_forward.1} parent=1 // pred_region
      _
    $region149: #{audio_enc_forward.1} parent=1 // pred_fallthru
      _
    %6337 = vsyncpa [#allocation3], 1
    %6338 = vsyncpa [#allocation5], 1
    %6339 = vsyncpa [#allocation8], 1
    %6340 = vsyncpa [#allocation11], 1
    %6341 = vsyncpa [#allocation14], 1

</llo_original>
